<compile_context>
chip_gen: v7x
topology: tpu7x:2x2x1
jax: 0.10.0
libtpu: 0.0.40
codegen_flags: <defaults>
</compile_context>

<pallas_src>
import functools

import jax
import jax.numpy as jnp
from jax.experimental import pallas as pl
from jax.experimental.pallas import tpu as pltpu

EPS = 1e-15


def _update_kernel(s_ref, v_ref, wuv_ref, w1s_ref, w1n_ref, b1_ref,
                   w2a_ref, w2b_ref, w2c_ref, b2a_ref, b2b_ref, b2c_ref,
                   ds_ref, dv_ref):
    # s_ref : (TN, F) bf16             v_ref : (3, TN, F) bf16
    # wuv   : (F, 2F) = [W_u | W_v]    (stored as W^T, so y = x @ w)
    # w1s/w1n : (F, F)                 b1 : (1, F) f32
    # w2a/b/c : (F, F)                 b2a/b/c : (1, F) f32
    tn, feat = s_ref.shape

    # ---- fused first matmul: [u_v | v_v] in one lane-dense MXU pass --------
    v2 = v_ref[...].reshape(3 * tn, feat)                       # (3*TN, F) bf16
    uvvv = jnp.dot(v2, wuv_ref[...],
                   preferred_element_type=jnp.float32)          # (3*TN, 2F) f32
    uvvv = uvvv.reshape(3, tn, 2 * feat)
    u_v = uvvv[:, :, :feat]                                     # (3, TN, F) f32
    v_v = uvvv[:, :, feat:]                                     # (3, TN, F) f32

    # ---- consume the big f32 intermediates *before* the MLP ----------------
    # norm over the spatial axis; EPS added per component (matches PyTorch).
    v_v_norm = jnp.sqrt(jnp.sum(v_v * v_v + EPS, axis=0))       # (TN, F) f32
    inner = jnp.sum(u_v * v_v, axis=0)                          # (TN, F) f32
    # v_v is dead here; keep only a bf16 copy of u_v live across the MLP.
    u_v_bf = u_v.astype(dv_ref.dtype)                           # (3, TN, F) bf16

    # ---- Dense(2F -> F, swish) with pre-split weights (no lane concat) -----
    # (If a larger-F variant ever becomes compute-bound on v6e/v7x, fuse this
    # back into one K=2F matmul and dense-2 into one N=3F matmul; neutral here
    # while HBM-bound and on v5e's 128x128 MXU.)
    h = (jnp.dot(s_ref[...], w1s_ref[...], preferred_element_type=jnp.float32)
         + jnp.dot(v_v_norm.astype(w1n_ref.dtype), w1n_ref[...],
                   preferred_element_type=jnp.float32)
         + b1_ref[...])
    h = h * jax.nn.sigmoid(h)                                   # swish (f32 EUP)
    h = h.astype(w2a_ref.dtype)                                 # bf16 for MXU

    # ---- Dense(F -> 3F) as three lane-aligned (F x F) matmuls --------------
    a_vv = jnp.dot(h, w2a_ref[...], preferred_element_type=jnp.float32) + b2a_ref[...]
    a_sv = jnp.dot(h, w2b_ref[...], preferred_element_type=jnp.float32) + b2b_ref[...]
    a_ss = jnp.dot(h, w2c_ref[...], preferred_element_type=jnp.float32) + b2c_ref[...]

    ds_ref[...] = (inner * a_sv + a_ss).astype(ds_ref.dtype)
    dv_ref[...] = (u_v_bf.astype(jnp.float32)
                   * a_vv[None, :, :]).astype(dv_ref.dtype)


@functools.partial(jax.jit, static_argnames=("tile_n", "vmem_limit_mb"))
def update_block(s_i, v_i, wu, wv, w1, b1, w2, b2, *,
                 tile_n=1024, vmem_limit_mb=32):
    """PaiNN UpdateBlock forward.

    s_i : (N, F)       scalar features (bf16 recommended)
    v_i : (3, N, F)    vector features in spatial-major layout; keep this
                       layout across the whole model so no per-layer
                       (N,F,3) <-> (3,N,F) transposes are needed.
    wu, wv : (F, F)    w1 : (2F, F)  b1 : (1, F)  w2 : (F, 3F)  b2 : (1, 3F)

    tile_n / vmem_limit_mb per chip (kernel is HBM-bound everywhere):
      v7x : tile_n 1024-2048, vmem_limit_mb <= ~48, keep N/tile_n even >= 2
      v6e : tile_n 1024 @ 32 MiB, or 2048 with vmem_limit_mb ~64-96
      v5e : tile_n 1024-2048 with a similarly raised limit
    Returns (delta_s (N, F), delta_v (3, N, F)) in the feature input dtypes.
    """
    three, n, feat = v_i.shape
    assert three == 3
    tile_n = min(tile_n, n)
    # bf16 packs 16 sublanes per vreg -> require %16 tiles (or the full array).
    assert n % tile_n == 0 and (tile_n % 16 == 0 or tile_n == n)

    cdt = jnp.bfloat16  # weight / MXU dtype; accumulation stays f32 in-kernel
    wuv = jnp.concatenate([wu, wv], axis=1).astype(cdt)         # (F, 2F)
    w1s = w1[:feat, :].astype(cdt)                              # (F, F)
    w1n = w1[feat:, :].astype(cdt)                              # (F, F)
    w2a = w2[:, :feat].astype(cdt)                              # (F, F)
    w2b = w2[:, feat:2 * feat].astype(cdt)
    w2c = w2[:, 2 * feat:].astype(cdt)
    b1f = b1.astype(jnp.float32)
    b2a = b2[:, :feat].astype(jnp.float32)
    b2b = b2[:, feat:2 * feat].astype(jnp.float32)
    b2c = b2[:, 2 * feat:].astype(jnp.float32)

    # Grid-invariant blocks (constant index_map) -> DMA'd once, not per step.
    wmat = pl.BlockSpec((feat, feat), lambda i: (0, 0))
    bvec = pl.BlockSpec((1, feat), lambda i: (0, 0))

    grid = (n // tile_n,)
    ds, dv = pl.pallas_call(
        _update_kernel,
        out_shape=(
            jax.ShapeDtypeStruct((n, feat), s_i.dtype),
            jax.ShapeDtypeStruct((3, n, feat), v_i.dtype),
        ),
        grid_spec=pltpu.PrefetchScalarGridSpec(
            num_scalar_prefetch=0,
            grid=grid,
            in_specs=[
                pl.BlockSpec((tile_n, feat), lambda i: (i, 0)),        # s_i
                pl.BlockSpec((3, tile_n, feat), lambda i: (0, i, 0)),  # v_i
                pl.BlockSpec((feat, 2 * feat), lambda i: (0, 0)),      # wuv
                wmat, wmat, bvec,                                      # w1s w1n b1
                wmat, wmat, wmat, bvec, bvec, bvec,                    # w2*, b2*
            ],
            out_specs=[
                pl.BlockSpec((tile_n, feat), lambda i: (i, 0)),        # delta_s
                pl.BlockSpec((3, tile_n, feat), lambda i: (0, i, 0)),  # delta_v
            ],
        ),
        compiler_params=pltpu.CompilerParams(
            dimension_semantics=("parallel",),
            vmem_limit_bytes=int(vmem_limit_mb) * 1024 * 1024,
        ),
    )(s_i, v_i, wuv, w1s, w1n, b1f, w2a, w2b, w2c, b2a, b2b, b2c)
    return ds, dv


def ref_update_block(s_i, v_i_nf3, wu, wv, w1, b1, w2, b2):
    """Pure-JAX f32 reference mirroring the PyTorch forward exactly."""
    n, feat, _ = v_i_nf3.shape
    hi = jax.lax.Precision.HIGHEST
    v_t = jnp.swapaxes(v_i_nf3, 1, 2).reshape(-1, feat)                 # (N*3, F)
    u_v = jnp.dot(v_t, wu, precision=hi).reshape(n, 3, feat).transpose(0, 2, 1)
    v_v = jnp.dot(v_t, wv, precision=hi).reshape(n, 3, feat).transpose(0, 2, 1)
    v_v_norm = jnp.sqrt(jnp.sum(v_v ** 2 + EPS, axis=-1))
    s_stack = jnp.concatenate([s_i, v_v_norm], axis=-1)
    h = jnp.dot(s_stack, w1, precision=hi) + b1[0]
    h = h * jax.nn.sigmoid(h)
    out = jnp.dot(h, w2, precision=hi) + b2[0]
    split = out.reshape(n, 3, feat)
    a_vv = split[:, 0, :][..., None]
    delta_v = u_v * a_vv
    a_sv = split[:, 1, :]
    a_ss = split[:, 2, :]
    inner = jnp.sum(u_v * v_v, axis=-1)
    delta_s = inner * a_sv + a_ss
    return delta_s, delta_v


if __name__ == "__main__":
    feat_dim = 128    # F: multiple of 128 so every output store is lane-dense
    n_atoms = 512     # small demo; tile_n=256 -> grid length 2 (even, v7x-safe)

    key = jax.random.PRNGKey(0)
    ks = jax.random.split(key, 8)

    s_f32 = jax.random.normal(ks[0], (n_atoms, feat_dim), jnp.float32)
    v_f32 = jax.random.normal(ks[1], (n_atoms, feat_dim, 3), jnp.float32)

    def init_w(k, fan_in, fan_out):
        return (jax.random.normal(k, (fan_in, fan_out), jnp.float32)
                / jnp.sqrt(jnp.float32(fan_in)))

    wu = init_w(ks[2], feat_dim, feat_dim)                 # u_mat (no bias)
    wv = init_w(ks[3], feat_dim, feat_dim)                 # v_mat (no bias)
    w1 = init_w(ks[4], 2 * feat_dim, feat_dim)             # s_dense[0]
    b1 = 0.01 * jax.random.normal(ks[5], (1, feat_dim), jnp.float32)
    w2 = init_w(ks[6], feat_dim, 3 * feat_dim)             # s_dense[1]
    b2 = 0.01 * jax.random.normal(ks[7], (1, 3 * feat_dim), jnp.float32)

    # Kernel inputs: bf16 features, vector features already in (3, N, F).
    # In the full model this layout / dtype is carried between layers, so the
    # big tensors are never transposed or re-cast per layer.
    s_bf = s_f32.astype(jnp.bfloat16)
    v_bf = jnp.transpose(v_f32, (2, 0, 1)).astype(jnp.bfloat16)   # (3, N, F)

    ds, dv = update_block(s_bf, v_bf, wu, wv, w1, b1, w2, b2, tile_n=256)
    jax.block_until_ready((ds, dv))

    # f32 reference on the same bf16-rounded inputs / weights (tolerances
    # baselined for bf16 I/O with f32 accumulation).
    f32 = lambda x: x.astype(jnp.float32)
    ds_ref, dv_ref = ref_update_block(
        f32(s_bf), jnp.transpose(f32(v_bf), (1, 2, 0)),
        f32(wu.astype(jnp.bfloat16)), f32(wv.astype(jnp.bfloat16)),
        f32(w1.astype(jnp.bfloat16)), b1,
        f32(w2.astype(jnp.bfloat16)), b2)
    dv_ref = jnp.transpose(dv_ref, (2, 0, 1))                     # (3, N, F)

    def rel_err(x, ref):
        return float(jnp.linalg.norm(f32(x) - ref) / (jnp.linalg.norm(ref) + 1e-12))

    e_ds = rel_err(ds, ds_ref)
    e_dv = rel_err(dv, dv_ref)
    assert e_ds < 2e-2, f"delta_s rel err {e_ds}"
    assert e_dv < 2e-2, f"delta_v rel err {e_dv}"

    print("KERNEL_OK")
</pallas_src>

<mosaic_0001>
module attributes {stable_mosaic.version = 11 : i64} {
  func.func @_update_kernel(%arg0: i32, %arg1: memref<256x128xbf16, #tpu.memory_space<vmem>>, %arg2: memref<3x256x128xbf16, #tpu.memory_space<vmem>>, %arg3: memref<128x256xbf16, #tpu.memory_space<vmem>>, %arg4: memref<128x128xbf16, #tpu.memory_space<vmem>>, %arg5: memref<128x128xbf16, #tpu.memory_space<vmem>>, %arg6: memref<1x128xf32, #tpu.memory_space<vmem>>, %arg7: memref<128x128xbf16, #tpu.memory_space<vmem>>, %arg8: memref<128x128xbf16, #tpu.memory_space<vmem>>, %arg9: memref<128x128xbf16, #tpu.memory_space<vmem>>, %arg10: memref<1x128xf32, #tpu.memory_space<vmem>>, %arg11: memref<1x128xf32, #tpu.memory_space<vmem>>, %arg12: memref<1x128xf32, #tpu.memory_space<vmem>>, %arg13: memref<256x128xbf16, #tpu.memory_space<vmem>>, %arg14: memref<3x256x128xbf16, #tpu.memory_space<vmem>>) attributes {dimension_semantics = [#tpu.dimension_semantics<parallel>], iteration_bounds = array<i64: 2>, scalar_prefetch = 0 : i64, scratch_operands = 0 : i64, tpu.core_type = #tpu.core_type<tc>, window_params = [{transform_indices = @transform_0, window_bounds = array<i64: 256, 128>}, {transform_indices = @transform_1, window_bounds = array<i64: 3, 256, 128>}, {pipeline_mode = #tpu.pipeline_mode<synchronous>, transform_indices = @transform_2, window_bounds = array<i64: 128, 256>}, {pipeline_mode = #tpu.pipeline_mode<synchronous>, transform_indices = @transform_3, window_bounds = array<i64: 128, 128>}, {pipeline_mode = #tpu.pipeline_mode<synchronous>, transform_indices = @transform_4, window_bounds = array<i64: 128, 128>}, {pipeline_mode = #tpu.pipeline_mode<synchronous>, transform_indices = @transform_5, window_bounds = array<i64: 1, 128>}, {pipeline_mode = #tpu.pipeline_mode<synchronous>, transform_indices = @transform_6, window_bounds = array<i64: 128, 128>}, {pipeline_mode = #tpu.pipeline_mode<synchronous>, transform_indices = @transform_7, window_bounds = array<i64: 128, 128>}, {pipeline_mode = #tpu.pipeline_mode<synchronous>, transform_indices = @transform_8, window_bounds = array<i64: 128, 128>}, {pipeline_mode = #tpu.pipeline_mode<synchronous>, transform_indices = @transform_9, window_bounds = array<i64: 1, 128>}, {pipeline_mode = #tpu.pipeline_mode<synchronous>, transform_indices = @transform_10, window_bounds = array<i64: 1, 128>}, {pipeline_mode = #tpu.pipeline_mode<synchronous>, transform_indices = @transform_11, window_bounds = array<i64: 1, 128>}, {transform_indices = @transform_12, window_bounds = array<i64: 256, 128>}, {transform_indices = @transform_13, window_bounds = array<i64: 3, 256, 128>}]} {
    %c0 = arith.constant 0 : index
    %c0_0 = arith.constant 0 : index
    %c0_1 = arith.constant 0 : index
    %0 = vector.load %arg2[%c0, %c0_0, %c0_1] : memref<3x256x128xbf16, #tpu.memory_space<vmem>>, vector<3x256x128xbf16>
    %1 = vector.shape_cast %0 : vector<3x256x128xbf16> to vector<768x128xbf16>
    %c0_2 = arith.constant 0 : index
    %c0_3 = arith.constant 0 : index
    %2 = vector.load %arg3[%c0_2, %c0_3] : memref<128x256xbf16, #tpu.memory_space<vmem>>, vector<128x256xbf16>
    %cst = arith.constant dense<0.000000e+00> : vector<768x256xf32>
    %3 = tpu.matmul %1, %2, %cst {dimension_numbers = #tpu.dot_dimension_numbers<[1], [0], [0], [1], [0, 0, 1, 1], [], []>} : vector<768x128xbf16>, vector<128x256xbf16>, vector<768x256xf32> -> vector<768x256xf32>
    %4 = vector.shape_cast %3 : vector<768x256xf32> to vector<3x256x256xf32>
    %5 = vector.extract_strided_slice %4 {offsets = [0, 0, 0], sizes = [3, 256, 128], strides = [1, 1, 1]} : vector<3x256x256xf32> to vector<3x256x128xf32>
    %6 = vector.extract_strided_slice %4 {offsets = [0, 0, 128], sizes = [3, 256, 128], strides = [1, 1, 1]} : vector<3x256x256xf32> to vector<3x256x128xf32>
    %7 = arith.mulf %6, %6 : vector<3x256x128xf32>
    %cst_4 = arith.constant 1.000000e-15 : f32
    %8 = vector.broadcast %cst_4 : f32 to vector<3x256x128xf32>
    %9 = arith.addf %7, %8 : vector<3x256x128xf32>
    %cst_5 = arith.constant dense<0.000000e+00> : vector<256x128xf32>
    %10 = vector.multi_reduction <add>, %9, %cst_5 [0] : vector<3x256x128xf32> to vector<256x128xf32>
    %11 = math.sqrt %10 : vector<256x128xf32>
    %12 = arith.mulf %5, %6 : vector<3x256x128xf32>
    %cst_6 = arith.constant dense<0.000000e+00> : vector<256x128xf32>
    %13 = vector.multi_reduction <add>, %12, %cst_6 [0] : vector<3x256x128xf32> to vector<256x128xf32>
    %14 = arith.truncf %5 : vector<3x256x128xf32> to vector<3x256x128xbf16>
    %c0_7 = arith.constant 0 : index
    %c0_8 = arith.constant 0 : index
    %15 = vector.load %arg1[%c0_7, %c0_8] : memref<256x128xbf16, #tpu.memory_space<vmem>>, vector<256x128xbf16>
    %c0_9 = arith.constant 0 : index
    %c0_10 = arith.constant 0 : index
    %16 = vector.load %arg4[%c0_9, %c0_10] : memref<128x128xbf16, #tpu.memory_space<vmem>>, vector<128x128xbf16>
    %cst_11 = arith.constant dense<0.000000e+00> : vector<256x128xf32>
    %17 = tpu.matmul %15, %16, %cst_11 {dimension_numbers = #tpu.dot_dimension_numbers<[1], [0], [0], [1], [0, 0, 1, 1], [], []>} : vector<256x128xbf16>, vector<128x128xbf16>, vector<256x128xf32> -> vector<256x128xf32>
    %18 = arith.truncf %11 : vector<256x128xf32> to vector<256x128xbf16>
    %c0_12 = arith.constant 0 : index
    %c0_13 = arith.constant 0 : index
    %19 = vector.load %arg5[%c0_12, %c0_13] : memref<128x128xbf16, #tpu.memory_space<vmem>>, vector<128x128xbf16>
    %cst_14 = arith.constant dense<0.000000e+00> : vector<256x128xf32>
    %20 = tpu.matmul %18, %19, %cst_14 {dimension_numbers = #tpu.dot_dimension_numbers<[1], [0], [0], [1], [0, 0, 1, 1], [], []>} : vector<256x128xbf16>, vector<128x128xbf16>, vector<256x128xf32> -> vector<256x128xf32>
    %21 = arith.addf %17, %20 : vector<256x128xf32>
    %c0_15 = arith.constant 0 : index
    %c0_16 = arith.constant 0 : index
    %22 = vector.load %arg6[%c0_15, %c0_16] : memref<1x128xf32, #tpu.memory_space<vmem>>, vector<1x128xf32>
    %23 = vector.broadcast %22 : vector<1x128xf32> to vector<256x128xf32>
    %24 = arith.addf %21, %23 : vector<256x128xf32>
    %25 = arith.negf %24 : vector<256x128xf32>
    %26 = math.exp %25 : vector<256x128xf32>
    %cst_17 = arith.constant 1.000000e+00 : f32
    %27 = vector.broadcast %cst_17 : f32 to vector<256x128xf32>
    %28 = arith.addf %27, %26 : vector<256x128xf32>
    %29 = arith.divf %27, %28 : vector<256x128xf32>
    %30 = arith.mulf %24, %29 : vector<256x128xf32>
    %31 = arith.truncf %30 : vector<256x128xf32> to vector<256x128xbf16>
    %c0_18 = arith.constant 0 : index
    %c0_19 = arith.constant 0 : index
    %32 = vector.load %arg7[%c0_18, %c0_19] : memref<128x128xbf16, #tpu.memory_space<vmem>>, vector<128x128xbf16>
    %cst_20 = arith.constant dense<0.000000e+00> : vector<256x128xf32>
    %33 = tpu.matmul %31, %32, %cst_20 {dimension_numbers = #tpu.dot_dimension_numbers<[1], [0], [0], [1], [0, 0, 1, 1], [], []>} : vector<256x128xbf16>, vector<128x128xbf16>, vector<256x128xf32> -> vector<256x128xf32>
    %c0_21 = arith.constant 0 : index
    %c0_22 = arith.constant 0 : index
    %34 = vector.load %arg10[%c0_21, %c0_22] : memref<1x128xf32, #tpu.memory_space<vmem>>, vector<1x128xf32>
    %35 = vector.broadcast %34 : vector<1x128xf32> to vector<256x128xf32>
    %36 = arith.addf %33, %35 : vector<256x128xf32>
    %c0_23 = arith.constant 0 : index
    %c0_24 = arith.constant 0 : index
    %37 = vector.load %arg8[%c0_23, %c0_24] : memref<128x128xbf16, #tpu.memory_space<vmem>>, vector<128x128xbf16>
    %cst_25 = arith.constant dense<0.000000e+00> : vector<256x128xf32>
    %38 = tpu.matmul %31, %37, %cst_25 {dimension_numbers = #tpu.dot_dimension_numbers<[1], [0], [0], [1], [0, 0, 1, 1], [], []>} : vector<256x128xbf16>, vector<128x128xbf16>, vector<256x128xf32> -> vector<256x128xf32>
    %c0_26 = arith.constant 0 : index
    %c0_27 = arith.constant 0 : index
    %39 = vector.load %arg11[%c0_26, %c0_27] : memref<1x128xf32, #tpu.memory_space<vmem>>, vector<1x128xf32>
    %40 = vector.broadcast %39 : vector<1x128xf32> to vector<256x128xf32>
    %41 = arith.addf %38, %40 : vector<256x128xf32>
    %c0_28 = arith.constant 0 : index
    %c0_29 = arith.constant 0 : index
    %42 = vector.load %arg9[%c0_28, %c0_29] : memref<128x128xbf16, #tpu.memory_space<vmem>>, vector<128x128xbf16>
    %cst_30 = arith.constant dense<0.000000e+00> : vector<256x128xf32>
    %43 = tpu.matmul %31, %42, %cst_30 {dimension_numbers = #tpu.dot_dimension_numbers<[1], [0], [0], [1], [0, 0, 1, 1], [], []>} : vector<256x128xbf16>, vector<128x128xbf16>, vector<256x128xf32> -> vector<256x128xf32>
    %c0_31 = arith.constant 0 : index
    %c0_32 = arith.constant 0 : index
    %44 = vector.load %arg12[%c0_31, %c0_32] : memref<1x128xf32, #tpu.memory_space<vmem>>, vector<1x128xf32>
    %45 = vector.broadcast %44 : vector<1x128xf32> to vector<256x128xf32>
    %46 = arith.addf %43, %45 : vector<256x128xf32>
    %47 = arith.mulf %13, %41 : vector<256x128xf32>
    %48 = arith.addf %47, %46 : vector<256x128xf32>
    %49 = arith.truncf %48 : vector<256x128xf32> to vector<256x128xbf16>
    %c0_33 = arith.constant 0 : index
    %c0_34 = arith.constant 0 : index
    %50 = vector.load %arg13[%c0_33, %c0_34] : memref<256x128xbf16, #tpu.memory_space<vmem>>, vector<256x128xbf16>
    tpu.vector_store %arg13[%c0_33, %c0_34], %49 {strides = array<i32>} : memref<256x128xbf16, #tpu.memory_space<vmem>>, vector<256x128xbf16>,
    %51 = arith.extf %14 : vector<3x256x128xbf16> to vector<3x256x128xf32>
    %52 = vector.shape_cast %36 : vector<256x128xf32> to vector<1x256x128xf32>
    %53 = vector.broadcast %52 : vector<1x256x128xf32> to vector<3x256x128xf32>
    %54 = arith.mulf %51, %53 : vector<3x256x128xf32>
    %55 = arith.truncf %54 : vector<3x256x128xf32> to vector<3x256x128xbf16>
    %c0_35 = arith.constant 0 : index
    %c0_36 = arith.constant 0 : index
    %c0_37 = arith.constant 0 : index
    %56 = vector.load %arg14[%c0_35, %c0_36, %c0_37] : memref<3x256x128xbf16, #tpu.memory_space<vmem>>, vector<3x256x128xbf16>
    tpu.vector_store %arg14[%c0_35, %c0_36, %c0_37], %55 {strides = array<i32>} : memref<3x256x128xbf16, #tpu.memory_space<vmem>>, vector<3x256x128xbf16>,
    return
  }
  func.func @transform_0(%arg0: i32) -> (i32, i32) {
    %c0_i32 = arith.constant 0 : i32
    %c0_i32_0 = arith.constant 0 : i32
    return %arg0, %c0_i32 : i32, i32
  }
  func.func @transform_1(%arg0: i32) -> (i32, i32, i32) {
    %c0_i32 = arith.constant 0 : i32
    %c0_i32_0 = arith.constant 0 : i32
    %c0_i32_1 = arith.constant 0 : i32
    return %c0_i32, %arg0, %c0_i32_0 : i32, i32, i32
  }
  func.func @transform_2(%arg0: i32) -> (i32, i32) {
    %c0_i32 = arith.constant 0 : i32
    %c0_i32_0 = arith.constant 0 : i32
    %c0_i32_1 = arith.constant 0 : i32
    return %c0_i32, %c0_i32_0 : i32, i32
  }
  func.func @transform_3(%arg0: i32) -> (i32, i32) {
    %c0_i32 = arith.constant 0 : i32
    %c0_i32_0 = arith.constant 0 : i32
    %c0_i32_1 = arith.constant 0 : i32
    return %c0_i32, %c0_i32_0 : i32, i32
  }
  func.func @transform_4(%arg0: i32) -> (i32, i32) {
    %c0_i32 = arith.constant 0 : i32
    %c0_i32_0 = arith.constant 0 : i32
    %c0_i32_1 = arith.constant 0 : i32
    return %c0_i32, %c0_i32_0 : i32, i32
  }
  func.func @transform_5(%arg0: i32) -> (i32, i32) {
    %c0_i32 = arith.constant 0 : i32
    %c0_i32_0 = arith.constant 0 : i32
    %c0_i32_1 = arith.constant 0 : i32
    return %c0_i32, %c0_i32_0 : i32, i32
  }
  func.func @transform_6(%arg0: i32) -> (i32, i32) {
    %c0_i32 = arith.constant 0 : i32
    %c0_i32_0 = arith.constant 0 : i32
    %c0_i32_1 = arith.constant 0 : i32
    return %c0_i32, %c0_i32_0 : i32, i32
  }
  func.func @transform_7(%arg0: i32) -> (i32, i32) {
    %c0_i32 = arith.constant 0 : i32
    %c0_i32_0 = arith.constant 0 : i32
    %c0_i32_1 = arith.constant 0 : i32
    return %c0_i32, %c0_i32_0 : i32, i32
  }
  func.func @transform_8(%arg0: i32) -> (i32, i32) {
    %c0_i32 = arith.constant 0 : i32
    %c0_i32_0 = arith.constant 0 : i32
    %c0_i32_1 = arith.constant 0 : i32
    return %c0_i32, %c0_i32_0 : i32, i32
  }
  func.func @transform_9(%arg0: i32) -> (i32, i32) {
    %c0_i32 = arith.constant 0 : i32
    %c0_i32_0 = arith.constant 0 : i32
    %c0_i32_1 = arith.constant 0 : i32
    return %c0_i32, %c0_i32_0 : i32, i32
  }
  func.func @transform_10(%arg0: i32) -> (i32, i32) {
    %c0_i32 = arith.constant 0 : i32
    %c0_i32_0 = arith.constant 0 : i32
    %c0_i32_1 = arith.constant 0 : i32
    return %c0_i32, %c0_i32_0 : i32, i32
  }
  func.func @transform_11(%arg0: i32) -> (i32, i32) {
    %c0_i32 = arith.constant 0 : i32
    %c0_i32_0 = arith.constant 0 : i32
    %c0_i32_1 = arith.constant 0 : i32
    return %c0_i32, %c0_i32_0 : i32, i32
  }
  func.func @transform_12(%arg0: i32) -> (i32, i32) {
    %c0_i32 = arith.constant 0 : i32
    %c0_i32_0 = arith.constant 0 : i32
    return %arg0, %c0_i32 : i32, i32
  }
  func.func @transform_13(%arg0: i32) -> (i32, i32, i32) {
    %c0_i32 = arith.constant 0 : i32
    %c0_i32_0 = arith.constant 0 : i32
    %c0_i32_1 = arith.constant 0 : i32
    return %c0_i32, %arg0, %c0_i32_0 : i32, i32, i32
  }
}

</mosaic_0001>

<llo_original>
// kernel: update_block.1
$region0: #{update_block.1}
  #allocation0 [shape = 'u32[]', space=smem, size = 0x4, offset = 0x4, fixed_abs, tag = 'smem constant byte address 0x4 - core index']
  #allocation1 [shape = 'u32[144,128]{1,0:T(1,128)}', space=vmem, size = 0x12000, scoped, tag = 'internal scratch']
  #allocation7 [shape = 's32[]', space=sflag, size = 0x4, offset = 0, fixed_abs, tag = 'sflag constant byte address 0x0 - dummy sync flag']
  %s0 = inlined_call_operand.vmem [shape: bf16[512,128], index: 0, kind: input, shape index: {}]
  %s1 = inlined_call_operand.vmem [shape: bf16[3,512,128], index: 1, kind: input, shape index: {}]
  %s2 = inlined_call_operand.vmem [shape: bf16[128,256], index: 2, kind: input, shape index: {}]
  %s3 = inlined_call_operand.vmem [shape: bf16[128,128], index: 3, kind: input, shape index: {}]
  %s4 = inlined_call_operand.vmem [shape: bf16[128,128], index: 4, kind: input, shape index: {}]
  %s5 = inlined_call_operand.vmem [shape: f32[1,128], index: 5, kind: input, shape index: {}]
  %s6 = inlined_call_operand.vmem [shape: bf16[128,128], index: 6, kind: input, shape index: {}]
  %s7 = inlined_call_operand.vmem [shape: bf16[128,128], index: 7, kind: input, shape index: {}]
  %s8 = inlined_call_operand.vmem [shape: bf16[128,128], index: 8, kind: input, shape index: {}]
  %s9 = inlined_call_operand.vmem [shape: f32[1,128], index: 9, kind: input, shape index: {}]
  %s10 = inlined_call_operand.vmem [shape: f32[1,128], index: 10, kind: input, shape index: {}]
  %s11 = inlined_call_operand.vmem [shape: f32[1,128], index: 11, kind: input, shape index: {}]
  %s12 = inlined_call_operand.hbm [shape: bf16[512,128], index: 12, kind: output, shape index: {0}]
  %s13 = inlined_call_operand.hbm [shape: bf16[3,512,128], index: 13, kind: output, shape index: {1}]
  %14 = xla_tuple %s12, %s13
  %s15 = sld [smem:[#allocation0]]
  $region130: #{update_block.1} parent=0
    _
  %s17 = ssub.s32 1, %s15
  %s18 = scalar_select 0, %s17, %s15
  $region1: #{update_block.1} parent=0
    #allocation2 [shape = 'u8[393216]{0}', space=vmem, size = 0x60000, scoped, tag = 'input window, operand 1']
    #allocation3 [shape = 'u8[131072]{0}', space=vmem, size = 0x20000, scoped, tag = 'output window, operand 0']
    #allocation4 [shape = 's32[2]{0}', space=sflag, size = 0x8, scoped, tag = 'scoped memory for update_block.1']
    #allocation5 [shape = 'u8[393216]{0}', space=vmem, size = 0x60000, scoped, tag = 'output window, operand 1']
    #allocation6 [shape = 's32[2]{0}', space=sflag, size = 0x8, scoped, tag = 'scoped memory for update_block.1']
    %19 = vsyncpa [#allocation4], 0
    %s20 = scalar_lea.sflag [#allocation4], 1
    %21 = vsyncpa %s20, 0
    %22 = vsyncpa [#allocation6], 0
    %s23 = scalar_lea.sflag [#allocation6], 1
    %24 = vsyncpa %s23, 0
    loop: start=0, step=1, limit=4
    $region2: #{update_block.1} parent=1 // loop_pre_header
      _
    $region3: #{update_block.1} parent=1 // loop_header
      %s26 = sphi 0, %s30
      %p27 = scmp.ge.s32.totalorder %s26, 4
      %s36 = sphi 0, %s38
      %s39 = sphi 0, %s36
      %s40 = sphi 0, %s39
      %s56 = sphi 0, %s40
      %s62 = sphi 0, %s64
      %s65 = sphi 0, %s62
      %s66 = sphi 0, %s65
      %s82 = sphi 0, %s66
      %s86 = sphi 0, %s86
      %s88 = sphi 0, %s86
      %s89 = sphi 0, %s88
      %s103 = sphi 0, %s89
      %s107 = sphi 0, %s107
      %s109 = sphi 0, %s107
      %s110 = sphi 0, %s109
      %s124 = sphi 0, %s110
      %s128 = sphi 0, %s128
      %s130 = sphi 0, %s128
      %s131 = sphi 0, %s130
      %s145 = sphi 0, %s131
      %s149 = sphi 0, %s149
      %s151 = sphi 0, %s149
      %s152 = sphi 0, %s151
      %s166 = sphi 0, %s152
      %s170 = sphi 0, %s170
      %s172 = sphi 0, %s170
      %s173 = sphi 0, %s172
      %s187 = sphi 0, %s173
      %s191 = sphi 0, %s191
      %s193 = sphi 0, %s191
      %s194 = sphi 0, %s193
      %s208 = sphi 0, %s194
      %s212 = sphi 0, %s212
      %s214 = sphi 0, %s212
      %s215 = sphi 0, %s214
      %s229 = sphi 0, %s215
      %s233 = sphi 0, %s233
      %s235 = sphi 0, %s233
      %s236 = sphi 0, %s235
      %s250 = sphi 0, %s236
      %s254 = sphi 0, %s254
      %s256 = sphi 0, %s254
      %s257 = sphi 0, %s256
      %s271 = sphi 0, %s257
      %s275 = sphi 0, %s275
      %s277 = sphi 0, %s275
      %s278 = sphi 0, %s277
      %s292 = sphi 0, %s278
      %s298 = sphi 0, %s300
      %s301 = sphi 0, %s298
      %s302 = sphi 0, %s301
      %s318 = sphi 0, %s302
      %s324 = sphi 0, %s326
      %s327 = sphi 0, %s324
      %s328 = sphi 0, %s327
      %s344 = sphi 0, %s328
    $region4: #{update_block.1} parent=1 // loop_header_branch
      %29 = sbr.rel (%p27) target = $region8
    $region5: #{update_block.1} parent=1 // loop_body
      %s31 = ssub.s32 %s26, 1
      %s32 = ssub.s32 %s26, 2
      %s33 = sadd.s32 %s26, 1
      %s34 = ssub.s32 %s26, %s33
      %p35 = scmp.eq.s32.totalorder %s34, 0
      %s37 = sadd.s32 %s36, 1
      %s38 = scalar_select %p35, %s36, %s37
      %p41 = pneg %p35
      %p42 = scmp.eq.s32.totalorder %s26, 1
      %p43 = por %p41, %p42
      %p44 = scmp.ne.s32.totalorder %s36, %s39
      %p45 = scmp.eq.s32.totalorder %s26, 0
      %p46 = por %p44, %p45
      %p47 = scmp.ne.s32.totalorder %s36, %s39
      %p48 = scmp.eq.s32.totalorder %s31, 1
      %p49 = por %p47, %p48
      %p50 = scmp.ne.s32.totalorder %s39, %s40
      %p51 = scmp.eq.s32.totalorder %s31, 0
      %p52 = por %p50, %p51
      %p53 = scmp.ne.s32.totalorder %s39, %s40
      %p54 = scmp.eq.s32.totalorder %s32, 1
      %p55 = por %p53, %p54
      %p57 = scmp.ne.s32.totalorder %s40, %s56
      %p58 = scmp.eq.s32.totalorder %s32, 0
      %p59 = por %p57, %p58
      %s60 = ssub.s32 %s26, %s33
      %p61 = scmp.eq.s32.totalorder %s60, 0
      %s63 = sadd.s32 %s62, 1
      %s64 = scalar_select %p61, %s62, %s63
      %p67 = pneg %p61
      %p68 = scmp.eq.s32.totalorder %s26, 1
      %p69 = por %p67, %p68
      %p70 = scmp.ne.s32.totalorder %s62, %s65
      %p71 = scmp.eq.s32.totalorder %s26, 0
      %p72 = por %p70, %p71
      %p73 = scmp.ne.s32.totalorder %s62, %s65
      %p74 = scmp.eq.s32.totalorder %s31, 1
      %p75 = por %p73, %p74
      %p76 = scmp.ne.s32.totalorder %s65, %s66
      %p77 = scmp.eq.s32.totalorder %s31, 0
      %p78 = por %p76, %p77
      %p79 = scmp.ne.s32.totalorder %s65, %s66
      %p80 = scmp.eq.s32.totalorder %s32, 1
      %p81 = por %p79, %p80
      %p83 = scmp.ne.s32.totalorder %s66, %s82
      %p84 = scmp.eq.s32.totalorder %s32, 0
      %p85 = por %p83, %p84
      %s87 = sadd.s32 %s86, 1
      %p90 = scmp.eq.s32.totalorder %s26, 1
      %p91 = scmp.ne.s32.totalorder %s86, %s88
      %p92 = scmp.eq.s32.totalorder %s26, 0
      %p93 = por %p91, %p92
      %p94 = scmp.ne.s32.totalorder %s86, %s88
      %p95 = scmp.eq.s32.totalorder %s31, 1
      %p96 = por %p94, %p95
      %p97 = scmp.ne.s32.totalorder %s88, %s89
      %p98 = scmp.eq.s32.totalorder %s31, 0
      %p99 = por %p97, %p98
      %p100 = scmp.ne.s32.totalorder %s88, %s89
      %p101 = scmp.eq.s32.totalorder %s32, 1
      %p102 = por %p100, %p101
      %p104 = scmp.ne.s32.totalorder %s89, %s103
      %p105 = scmp.eq.s32.totalorder %s32, 0
      %p106 = por %p104, %p105
      %s108 = sadd.s32 %s107, 1
      %p111 = scmp.eq.s32.totalorder %s26, 1
      %p112 = scmp.ne.s32.totalorder %s107, %s109
      %p113 = scmp.eq.s32.totalorder %s26, 0
      %p114 = por %p112, %p113
      %p115 = scmp.ne.s32.totalorder %s107, %s109
      %p116 = scmp.eq.s32.totalorder %s31, 1
      %p117 = por %p115, %p116
      %p118 = scmp.ne.s32.totalorder %s109, %s110
      %p119 = scmp.eq.s32.totalorder %s31, 0
      %p120 = por %p118, %p119
      %p121 = scmp.ne.s32.totalorder %s109, %s110
      %p122 = scmp.eq.s32.totalorder %s32, 1
      %p123 = por %p121, %p122
      %p125 = scmp.ne.s32.totalorder %s110, %s124
      %p126 = scmp.eq.s32.totalorder %s32, 0
      %p127 = por %p125, %p126
      %s129 = sadd.s32 %s128, 1
      %p132 = scmp.eq.s32.totalorder %s26, 1
      %p133 = scmp.ne.s32.totalorder %s128, %s130
      %p134 = scmp.eq.s32.totalorder %s26, 0
      %p135 = por %p133, %p134
      %p136 = scmp.ne.s32.totalorder %s128, %s130
      %p137 = scmp.eq.s32.totalorder %s31, 1
      %p138 = por %p136, %p137
      %p139 = scmp.ne.s32.totalorder %s130, %s131
      %p140 = scmp.eq.s32.totalorder %s31, 0
      %p141 = por %p139, %p140
      %p142 = scmp.ne.s32.totalorder %s130, %s131
      %p143 = scmp.eq.s32.totalorder %s32, 1
      %p144 = por %p142, %p143
      %p146 = scmp.ne.s32.totalorder %s131, %s145
      %p147 = scmp.eq.s32.totalorder %s32, 0
      %p148 = por %p146, %p147
      %s150 = sadd.s32 %s149, 1
      %p153 = scmp.eq.s32.totalorder %s26, 1
      %p154 = scmp.ne.s32.totalorder %s149, %s151
      %p155 = scmp.eq.s32.totalorder %s26, 0
      %p156 = por %p154, %p155
      %p157 = scmp.ne.s32.totalorder %s149, %s151
      %p158 = scmp.eq.s32.totalorder %s31, 1
      %p159 = por %p157, %p158
      %p160 = scmp.ne.s32.totalorder %s151, %s152
      %p161 = scmp.eq.s32.totalorder %s31, 0
      %p162 = por %p160, %p161
      %p163 = scmp.ne.s32.totalorder %s151, %s152
      %p164 = scmp.eq.s32.totalorder %s32, 1
      %p165 = por %p163, %p164
      %p167 = scmp.ne.s32.totalorder %s152, %s166
      %p168 = scmp.eq.s32.totalorder %s32, 0
      %p169 = por %p167, %p168
      %s171 = sadd.s32 %s170, 1
      %p174 = scmp.eq.s32.totalorder %s26, 1
      %p175 = scmp.ne.s32.totalorder %s170, %s172
      %p176 = scmp.eq.s32.totalorder %s26, 0
      %p177 = por %p175, %p176
      %p178 = scmp.ne.s32.totalorder %s170, %s172
      %p179 = scmp.eq.s32.totalorder %s31, 1
      %p180 = por %p178, %p179
      %p181 = scmp.ne.s32.totalorder %s172, %s173
      %p182 = scmp.eq.s32.totalorder %s31, 0
      %p183 = por %p181, %p182
      %p184 = scmp.ne.s32.totalorder %s172, %s173
      %p185 = scmp.eq.s32.totalorder %s32, 1
      %p186 = por %p184, %p185
      %p188 = scmp.ne.s32.totalorder %s173, %s187
      %p189 = scmp.eq.s32.totalorder %s32, 0
      %p190 = por %p188, %p189
      %s192 = sadd.s32 %s191, 1
      %p195 = scmp.eq.s32.totalorder %s26, 1
      %p196 = scmp.ne.s32.totalorder %s191, %s193
      %p197 = scmp.eq.s32.totalorder %s26, 0
      %p198 = por %p196, %p197
      %p199 = scmp.ne.s32.totalorder %s191, %s193
      %p200 = scmp.eq.s32.totalorder %s31, 1
      %p201 = por %p199, %p200
      %p202 = scmp.ne.s32.totalorder %s193, %s194
      %p203 = scmp.eq.s32.totalorder %s31, 0
      %p204 = por %p202, %p203
      %p205 = scmp.ne.s32.totalorder %s193, %s194
      %p206 = scmp.eq.s32.totalorder %s32, 1
      %p207 = por %p205, %p206
      %p209 = scmp.ne.s32.totalorder %s194, %s208
      %p210 = scmp.eq.s32.totalorder %s32, 0
      %p211 = por %p209, %p210
      %s213 = sadd.s32 %s212, 1
      %p216 = scmp.eq.s32.totalorder %s26, 1
      %p217 = scmp.ne.s32.totalorder %s212, %s214
      %p218 = scmp.eq.s32.totalorder %s26, 0
      %p219 = por %p217, %p218
      %p220 = scmp.ne.s32.totalorder %s212, %s214
      %p221 = scmp.eq.s32.totalorder %s31, 1
      %p222 = por %p220, %p221
      %p223 = scmp.ne.s32.totalorder %s214, %s215
      %p224 = scmp.eq.s32.totalorder %s31, 0
      %p225 = por %p223, %p224
      %p226 = scmp.ne.s32.totalorder %s214, %s215
      %p227 = scmp.eq.s32.totalorder %s32, 1
      %p228 = por %p226, %p227
      %p230 = scmp.ne.s32.totalorder %s215, %s229
      %p231 = scmp.eq.s32.totalorder %s32, 0
      %p232 = por %p230, %p231
      %s234 = sadd.s32 %s233, 1
      %p237 = scmp.eq.s32.totalorder %s26, 1
      %p238 = scmp.ne.s32.totalorder %s233, %s235
      %p239 = scmp.eq.s32.totalorder %s26, 0
      %p240 = por %p238, %p239
      %p241 = scmp.ne.s32.totalorder %s233, %s235
      %p242 = scmp.eq.s32.totalorder %s31, 1
      %p243 = por %p241, %p242
      %p244 = scmp.ne.s32.totalorder %s235, %s236
      %p245 = scmp.eq.s32.totalorder %s31, 0
      %p246 = por %p244, %p245
      %p247 = scmp.ne.s32.totalorder %s235, %s236
      %p248 = scmp.eq.s32.totalorder %s32, 1
      %p249 = por %p247, %p248
      %p251 = scmp.ne.s32.totalorder %s236, %s250
      %p252 = scmp.eq.s32.totalorder %s32, 0
      %p253 = por %p251, %p252
      %s255 = sadd.s32 %s254, 1
      %p258 = scmp.eq.s32.totalorder %s26, 1
      %p259 = scmp.ne.s32.totalorder %s254, %s256
      %p260 = scmp.eq.s32.totalorder %s26, 0
      %p261 = por %p259, %p260
      %p262 = scmp.ne.s32.totalorder %s254, %s256
      %p263 = scmp.eq.s32.totalorder %s31, 1
      %p264 = por %p262, %p263
      %p265 = scmp.ne.s32.totalorder %s256, %s257
      %p266 = scmp.eq.s32.totalorder %s31, 0
      %p267 = por %p265, %p266
      %p268 = scmp.ne.s32.totalorder %s256, %s257
      %p269 = scmp.eq.s32.totalorder %s32, 1
      %p270 = por %p268, %p269
      %p272 = scmp.ne.s32.totalorder %s257, %s271
      %p273 = scmp.eq.s32.totalorder %s32, 0
      %p274 = por %p272, %p273
      %s276 = sadd.s32 %s275, 1
      %p279 = scmp.eq.s32.totalorder %s26, 1
      %p280 = scmp.ne.s32.totalorder %s275, %s277
      %p281 = scmp.eq.s32.totalorder %s26, 0
      %p282 = por %p280, %p281
      %p283 = scmp.ne.s32.totalorder %s275, %s277
      %p284 = scmp.eq.s32.totalorder %s31, 1
      %p285 = por %p283, %p284
      %p286 = scmp.ne.s32.totalorder %s277, %s278
      %p287 = scmp.eq.s32.totalorder %s31, 0
      %p288 = por %p286, %p287
      %p289 = scmp.ne.s32.totalorder %s277, %s278
      %p290 = scmp.eq.s32.totalorder %s32, 1
      %p291 = por %p289, %p290
      %p293 = scmp.ne.s32.totalorder %s278, %s292
      %p294 = scmp.eq.s32.totalorder %s32, 0
      %p295 = por %p293, %p294
      %s296 = ssub.s32 %s26, %s33
      %p297 = scmp.eq.s32.totalorder %s296, 0
      %s299 = sadd.s32 %s298, 1
      %s300 = scalar_select %p297, %s298, %s299
      %p303 = pneg %p297
      %p304 = scmp.eq.s32.totalorder %s26, 1
      %p305 = por %p303, %p304
      %p306 = scmp.ne.s32.totalorder %s298, %s301
      %p307 = scmp.eq.s32.totalorder %s26, 0
      %p308 = por %p306, %p307
      %p309 = scmp.ne.s32.totalorder %s298, %s301
      %p310 = scmp.eq.s32.totalorder %s31, 1
      %p311 = por %p309, %p310
      %p312 = scmp.ne.s32.totalorder %s301, %s302
      %p313 = scmp.eq.s32.totalorder %s31, 0
      %p314 = por %p312, %p313
      %p315 = scmp.ne.s32.totalorder %s301, %s302
      %p316 = scmp.eq.s32.totalorder %s32, 1
      %p317 = por %p315, %p316
      %p319 = scmp.ne.s32.totalorder %s302, %s318
      %p320 = scmp.eq.s32.totalorder %s32, 0
      %p321 = por %p319, %p320
      %s322 = ssub.s32 %s26, %s33
      %p323 = scmp.eq.s32.totalorder %s322, 0
      %s325 = sadd.s32 %s324, 1
      %s326 = scalar_select %p323, %s324, %s325
      %p329 = pneg %p323
      %p330 = scmp.eq.s32.totalorder %s26, 1
      %p331 = por %p329, %p330
      %p332 = scmp.ne.s32.totalorder %s324, %s327
      %p333 = scmp.eq.s32.totalorder %s26, 0
      %p334 = por %p332, %p333
      %p335 = scmp.ne.s32.totalorder %s324, %s327
      %p336 = scmp.eq.s32.totalorder %s31, 1
      %p337 = por %p335, %p336
      %p338 = scmp.ne.s32.totalorder %s327, %s328
      %p339 = scmp.eq.s32.totalorder %s31, 0
      %p340 = por %p338, %p339
      %p341 = scmp.ne.s32.totalorder %s327, %s328
      %p342 = scmp.eq.s32.totalorder %s32, 1
      %p343 = por %p341, %p342
      %p345 = scmp.ne.s32.totalorder %s328, %s344
      %p346 = scmp.eq.s32.totalorder %s32, 0
      %p347 = por %p345, %p346
      %p348 = scmp.le.s32.totalorder 1, %s26
      %p349 = scmp.lt.s32.totalorder %s26, 3
      %p350 = pnand %p348, %p349
      %p351 = pneg %p350
      // Predicated region
      $region9: #{update_block.1} parent=5 // pred_check
        _
      $region10: #{update_block.1} parent=5 // pred_check_branch
        %353 = sbr.rel (%p350) target = $region12
      $region11: #{update_block.1} parent=5 // pred_region
        %s354 = ssub.s32 %s26, 1
        // Predicated region
        $region13: #{update_block.1} parent=11 // pred_check
          %p355 = pneg %p99
        $region14: #{update_block.1} parent=11 // pred_check_branch
          %357 = sbr.rel (%p355) target = $region16
        $region15: #{update_block.1} parent=11 // pred_region
          _
        $region16: #{update_block.1} parent=11 // pred_fallthru
          _
        // Predicated region
        $region17: #{update_block.1} parent=11 // pred_check
          %p358 = pneg %p120
        $region18: #{update_block.1} parent=11 // pred_check_branch
          %360 = sbr.rel (%p358) target = $region20
        $region19: #{update_block.1} parent=11 // pred_region
          _
        $region20: #{update_block.1} parent=11 // pred_fallthru
          _
        // Predicated region
        $region21: #{update_block.1} parent=11 // pred_check
          %p361 = pneg %p141
        $region22: #{update_block.1} parent=11 // pred_check_branch
          %363 = sbr.rel (%p361) target = $region24
        $region23: #{update_block.1} parent=11 // pred_region
          _
        $region24: #{update_block.1} parent=11 // pred_fallthru
          _
        // Predicated region
        $region25: #{update_block.1} parent=11 // pred_check
          %p364 = pneg %p162
        $region26: #{update_block.1} parent=11 // pred_check_branch
          %366 = sbr.rel (%p364) target = $region28
        $region27: #{update_block.1} parent=11 // pred_region
          _
        $region28: #{update_block.1} parent=11 // pred_fallthru
          _
        // Predicated region
        $region29: #{update_block.1} parent=11 // pred_check
          %p367 = pneg %p183
        $region30: #{update_block.1} parent=11 // pred_check_branch
          %369 = sbr.rel (%p367) target = $region32
        $region31: #{update_block.1} parent=11 // pred_region
          _
        $region32: #{update_block.1} parent=11 // pred_fallthru
          _
        // Predicated region
        $region33: #{update_block.1} parent=11 // pred_check
          %p370 = pneg %p204
        $region34: #{update_block.1} parent=11 // pred_check_branch
          %372 = sbr.rel (%p370) target = $region36
        $region35: #{update_block.1} parent=11 // pred_region
          _
        $region36: #{update_block.1} parent=11 // pred_fallthru
          _
        // Predicated region
        $region37: #{update_block.1} parent=11 // pred_check
          %p373 = pneg %p225
        $region38: #{update_block.1} parent=11 // pred_check_branch
          %375 = sbr.rel (%p373) target = $region40
        $region39: #{update_block.1} parent=11 // pred_region
          _
        $region40: #{update_block.1} parent=11 // pred_fallthru
          _
        // Predicated region
        $region41: #{update_block.1} parent=11 // pred_check
          %p376 = pneg %p246
        $region42: #{update_block.1} parent=11 // pred_check_branch
          %378 = sbr.rel (%p376) target = $region44
        $region43: #{update_block.1} parent=11 // pred_region
          _
        $region44: #{update_block.1} parent=11 // pred_fallthru
          _
        // Predicated region
        $region45: #{update_block.1} parent=11 // pred_check
          %p379 = pneg %p267
        $region46: #{update_block.1} parent=11 // pred_check_branch
          %381 = sbr.rel (%p379) target = $region48
        $region47: #{update_block.1} parent=11 // pred_region
          _
        $region48: #{update_block.1} parent=11 // pred_fallthru
          _
        // Predicated region
        $region49: #{update_block.1} parent=11 // pred_check
          %p382 = pneg %p288
        $region50: #{update_block.1} parent=11 // pred_check_branch
          %384 = sbr.rel (%p382) target = $region52
        $region51: #{update_block.1} parent=11 // pred_region
          _
        $region52: #{update_block.1} parent=11 // pred_fallthru
          _
      $region12: #{update_block.1} parent=5 // pred_fallthru
        _
      %p385 = scmp.lt.s32.totalorder %s26, 2
      // Predicated region
      $region53: #{update_block.1} parent=5 // pred_check
        %p386 = pneg %p385
      $region54: #{update_block.1} parent=5 // pred_check_branch
        %388 = sbr.rel (%p386) target = $region56
      $region55: #{update_block.1} parent=5 // pred_region
        // Predicated region
        $region57: #{update_block.1} parent=55 // pred_check
          %p389 = pneg %p46
        $region58: #{update_block.1} parent=55 // pred_check_branch
          %391 = sbr.rel (%p389) target = $region60
        $region59: #{update_block.1} parent=55 // pred_region
          %s392 = smul.u32 32, %s26
          %p393 = scmp.lt.s32.totalorder %s392, 63
          %s394 = scalar_select %p393, %s392, 63
          %s395 = smul.addr %s394, 4
          %s396 = scalar_lea.vmem %s0, %s395
          %s397 = smul.u32 32, %s26
        $region60: #{update_block.1} parent=55 // pred_fallthru
          _
        // Predicated region
        $region61: #{update_block.1} parent=55 // pred_check
          %p398 = pneg %p72
        $region62: #{update_block.1} parent=55 // pred_check_branch
          %400 = sbr.rel (%p398) target = $region64
        $region63: #{update_block.1} parent=55 // pred_region
          %s401 = sand.u32 %s62, 1
          %s402 = sand.u32 %s62, 1
          %s403 = smul.addr %s402, 384
          %s404 = scalar_lea.vmem [#allocation2], %s403
          %s405 = smul.u32 32, %s26
          %s406 = smul.addr %s405, 4
          %s407 = scalar_lea.vmem %s1, %s406
          // Predicated region
          $region65: #{update_block.1} parent=63 // pred_check
            _
          $region66: #{update_block.1} parent=63 // pred_check_branch
            %409 = sbr.rel (0) target = $region68
          $region67: #{update_block.1} parent=63 // pred_region
            // Predicated region
            $region69: #{update_block.1} parent=67 // pred_check
              _
            $region70: #{update_block.1} parent=67 // pred_check_branch
              %411 = sbr.rel target = $region72
            $region71: #{update_block.1} parent=67 // pred_region
              // Predicated region
              $region84: #{update_block.1} parent=71 // pred_check
                _
              $region85: #{update_block.1} parent=71 // pred_check_branch
                %616 = sbr.rel (0) target = $region87
              $region86: #{update_block.1} parent=71 // pred_region
                loop: start=0, step=1, limit=1
                $region88: #{update_block.1} parent=86 // loop_pre_header
                  _
                $region89: #{update_block.1} parent=86 // loop_header
                  %s618 = sphi 0, %s622
                  %p619 = scmp.ge.s32.totalorder %s618, 1
                  %s623 = sphi %s407, %s407
                  %s624 = sphi %s404, %s404
                $region90: #{update_block.1} parent=86 // loop_header_branch
                  %621 = sbr.rel (%p619) target = $region94
                $region91: #{update_block.1} parent=86 // loop_body
                  _
                $region92: #{update_block.1} parent=86 // loop_footer
                  %s622 = sadd.s32 1, %s618
                $region93: #{update_block.1} parent=86 // loop_footer_branch
                  %617 = sbr.rel target = $region89
                $region94: #{update_block.1} parent=86 // loop_exit
                  _
                loop: start=0, step=1, limit=1
                $region95: #{update_block.1} parent=86 // loop_pre_header
                  _
                $region96: #{update_block.1} parent=86 // loop_header
                  %s627 = sphi 0, %s631
                  %p628 = scmp.ge.s32.totalorder %s627, 1
                  %s632 = sphi %s407, %s407
                  %s633 = sphi %s404, %s404
                $region97: #{update_block.1} parent=86 // loop_header_branch
                  %630 = sbr.rel (%p628) target = $region101
                $region98: #{update_block.1} parent=86 // loop_body
                  %v634 = vld [vmem:[%s632] sm:$0xf]
                  %635 = vst [vmem:[%s633] sm:$0xf] %v634
                  %v636 = vld [vmem:[%s632 + $0x4] sm:$0xf]
                  %637 = vst [vmem:[%s633 + $0x4] sm:$0xf] %v636
                  %v638 = vld [vmem:[%s632 + $0x8] sm:$0xf]
                  %639 = vst [vmem:[%s633 + $0x8] sm:$0xf] %v638
                  %v640 = vld [vmem:[%s632 + $0xc] sm:$0xf]
                  %641 = vst [vmem:[%s633 + $0xc] sm:$0xf] %v640
                  %v642 = vld [vmem:[%s632 + $0x10] sm:$0xf]
                  %643 = vst [vmem:[%s633 + $0x10] sm:$0xf] %v642
                  %v644 = vld [vmem:[%s632 + $0x14] sm:$0xf]
                  %645 = vst [vmem:[%s633 + $0x14] sm:$0xf] %v644
                  %v646 = vld [vmem:[%s632 + $0x18] sm:$0xf]
                  %647 = vst [vmem:[%s633 + $0x18] sm:$0xf] %v646
                  %v648 = vld [vmem:[%s632 + $0x1c] sm:$0xf]
                  %649 = vst [vmem:[%s633 + $0x1c] sm:$0xf] %v648
                  %v650 = vld [vmem:[%s632 + $0x20] sm:$0xf]
                  %651 = vst [vmem:[%s633 + $0x20] sm:$0xf] %v650
                  %v652 = vld [vmem:[%s632 + $0x24] sm:$0xf]
                  %653 = vst [vmem:[%s633 + $0x24] sm:$0xf] %v652
                  %v654 = vld [vmem:[%s632 + $0x28] sm:$0xf]
                  %655 = vst [vmem:[%s633 + $0x28] sm:$0xf] %v654
                  %v656 = vld [vmem:[%s632 + $0x2c] sm:$0xf]
                  %657 = vst [vmem:[%s633 + $0x2c] sm:$0xf] %v656
                  %v658 = vld [vmem:[%s632 + $0x30] sm:$0xf]
                  %659 = vst [vmem:[%s633 + $0x30] sm:$0xf] %v658
                  %v660 = vld [vmem:[%s632 + $0x34] sm:$0xf]
                  %661 = vst [vmem:[%s633 + $0x34] sm:$0xf] %v660
                  %v662 = vld [vmem:[%s632 + $0x38] sm:$0xf]
                  %663 = vst [vmem:[%s633 + $0x38] sm:$0xf] %v662
                  %v664 = vld [vmem:[%s632 + $0x3c] sm:$0xf]
                  %665 = vst [vmem:[%s633 + $0x3c] sm:$0xf] %v664
                  %v666 = vld [vmem:[%s632 + $0x40] sm:$0xf]
                  %667 = vst [vmem:[%s633 + $0x40] sm:$0xf] %v666
                  %v668 = vld [vmem:[%s632 + $0x44] sm:$0xf]
                  %669 = vst [vmem:[%s633 + $0x44] sm:$0xf] %v668
                  %v670 = vld [vmem:[%s632 + $0x48] sm:$0xf]
                  %671 = vst [vmem:[%s633 + $0x48] sm:$0xf] %v670
                  %v672 = vld [vmem:[%s632 + $0x4c] sm:$0xf]
                  %673 = vst [vmem:[%s633 + $0x4c] sm:$0xf] %v672
                  %v674 = vld [vmem:[%s632 + $0x50] sm:$0xf]
                  %675 = vst [vmem:[%s633 + $0x50] sm:$0xf] %v674
                  %v676 = vld [vmem:[%s632 + $0x54] sm:$0xf]
                  %677 = vst [vmem:[%s633 + $0x54] sm:$0xf] %v676
                  %v678 = vld [vmem:[%s632 + $0x58] sm:$0xf]
                  %679 = vst [vmem:[%s633 + $0x58] sm:$0xf] %v678
                  %v680 = vld [vmem:[%s632 + $0x5c] sm:$0xf]
                  %681 = vst [vmem:[%s633 + $0x5c] sm:$0xf] %v680
                  %v682 = vld [vmem:[%s632 + $0x60] sm:$0xf]
                  %683 = vst [vmem:[%s633 + $0x60] sm:$0xf] %v682
                  %v684 = vld [vmem:[%s632 + $0x64] sm:$0xf]
                  %685 = vst [vmem:[%s633 + $0x64] sm:$0xf] %v684
                  %v686 = vld [vmem:[%s632 + $0x68] sm:$0xf]
                  %687 = vst [vmem:[%s633 + $0x68] sm:$0xf] %v686
                  %v688 = vld [vmem:[%s632 + $0x6c] sm:$0xf]
                  %689 = vst [vmem:[%s633 + $0x6c] sm:$0xf] %v688
                  %v690 = vld [vmem:[%s632 + $0x70] sm:$0xf]
                  %691 = vst [vmem:[%s633 + $0x70] sm:$0xf] %v690
                  %v692 = vld [vmem:[%s632 + $0x74] sm:$0xf]
                  %693 = vst [vmem:[%s633 + $0x74] sm:$0xf] %v692
                  %v694 = vld [vmem:[%s632 + $0x78] sm:$0xf]
                  %695 = vst [vmem:[%s633 + $0x78] sm:$0xf] %v694
                  %v696 = vld [vmem:[%s632 + $0x7c] sm:$0xf]
                  %697 = vst [vmem:[%s633 + $0x7c] sm:$0xf] %v696
                  %v698 = vld [vmem:[%s632 + $0x100] sm:$0xf]
                  %699 = vst [vmem:[%s633 + $0x80] sm:$0xf] %v698
                  %v700 = vld [vmem:[%s632 + $0x104] sm:$0xf]
                  %701 = vst [vmem:[%s633 + $0x84] sm:$0xf] %v700
                  %v702 = vld [vmem:[%s632 + $0x108] sm:$0xf]
                  %703 = vst [vmem:[%s633 + $0x88] sm:$0xf] %v702
                  %v704 = vld [vmem:[%s632 + $0x10c] sm:$0xf]
                  %705 = vst [vmem:[%s633 + $0x8c] sm:$0xf] %v704
                  %v706 = vld [vmem:[%s632 + $0x110] sm:$0xf]
                  %707 = vst [vmem:[%s633 + $0x90] sm:$0xf] %v706
                  %v708 = vld [vmem:[%s632 + $0x114] sm:$0xf]
                  %709 = vst [vmem:[%s633 + $0x94] sm:$0xf] %v708
                  %v710 = vld [vmem:[%s632 + $0x118] sm:$0xf]
                  %711 = vst [vmem:[%s633 + $0x98] sm:$0xf] %v710
                  %v712 = vld [vmem:[%s632 + $0x11c] sm:$0xf]
                  %713 = vst [vmem:[%s633 + $0x9c] sm:$0xf] %v712
                  %v714 = vld [vmem:[%s632 + $0x120] sm:$0xf]
                  %715 = vst [vmem:[%s633 + $0xa0] sm:$0xf] %v714
                  %v716 = vld [vmem:[%s632 + $0x124] sm:$0xf]
                  %717 = vst [vmem:[%s633 + $0xa4] sm:$0xf] %v716
                  %v718 = vld [vmem:[%s632 + $0x128] sm:$0xf]
                  %719 = vst [vmem:[%s633 + $0xa8] sm:$0xf] %v718
                  %v720 = vld [vmem:[%s632 + $0x12c] sm:$0xf]
                  %721 = vst [vmem:[%s633 + $0xac] sm:$0xf] %v720
                  %v722 = vld [vmem:[%s632 + $0x130] sm:$0xf]
                  %723 = vst [vmem:[%s633 + $0xb0] sm:$0xf] %v722
                  %v724 = vld [vmem:[%s632 + $0x134] sm:$0xf]
                  %725 = vst [vmem:[%s633 + $0xb4] sm:$0xf] %v724
                  %v726 = vld [vmem:[%s632 + $0x138] sm:$0xf]
                  %727 = vst [vmem:[%s633 + $0xb8] sm:$0xf] %v726
                  %v728 = vld [vmem:[%s632 + $0x13c] sm:$0xf]
                  %729 = vst [vmem:[%s633 + $0xbc] sm:$0xf] %v728
                  %v730 = vld [vmem:[%s632 + $0x140] sm:$0xf]
                  %731 = vst [vmem:[%s633 + $0xc0] sm:$0xf] %v730
                  %v732 = vld [vmem:[%s632 + $0x144] sm:$0xf]
                  %733 = vst [vmem:[%s633 + $0xc4] sm:$0xf] %v732
                  %v734 = vld [vmem:[%s632 + $0x148] sm:$0xf]
                  %735 = vst [vmem:[%s633 + $0xc8] sm:$0xf] %v734
                  %v736 = vld [vmem:[%s632 + $0x14c] sm:$0xf]
                  %737 = vst [vmem:[%s633 + $0xcc] sm:$0xf] %v736
                  %v738 = vld [vmem:[%s632 + $0x150] sm:$0xf]
                  %739 = vst [vmem:[%s633 + $0xd0] sm:$0xf] %v738
                  %v740 = vld [vmem:[%s632 + $0x154] sm:$0xf]
                  %741 = vst [vmem:[%s633 + $0xd4] sm:$0xf] %v740
                  %v742 = vld [vmem:[%s632 + $0x158] sm:$0xf]
                  %743 = vst [vmem:[%s633 + $0xd8] sm:$0xf] %v742
                  %v744 = vld [vmem:[%s632 + $0x15c] sm:$0xf]
                  %745 = vst [vmem:[%s633 + $0xdc] sm:$0xf] %v744
                  %v746 = vld [vmem:[%s632 + $0x160] sm:$0xf]
                  %747 = vst [vmem:[%s633 + $0xe0] sm:$0xf] %v746
                  %v748 = vld [vmem:[%s632 + $0x164] sm:$0xf]
                  %749 = vst [vmem:[%s633 + $0xe4] sm:$0xf] %v748
                  %v750 = vld [vmem:[%s632 + $0x168] sm:$0xf]
                  %751 = vst [vmem:[%s633 + $0xe8] sm:$0xf] %v750
                  %v752 = vld [vmem:[%s632 + $0x16c] sm:$0xf]
                  %753 = vst [vmem:[%s633 + $0xec] sm:$0xf] %v752
                  %v754 = vld [vmem:[%s632 + $0x170] sm:$0xf]
                  %755 = vst [vmem:[%s633 + $0xf0] sm:$0xf] %v754
                  %v756 = vld [vmem:[%s632 + $0x174] sm:$0xf]
                  %757 = vst [vmem:[%s633 + $0xf4] sm:$0xf] %v756
                  %v758 = vld [vmem:[%s632 + $0x178] sm:$0xf]
                  %759 = vst [vmem:[%s633 + $0xf8] sm:$0xf] %v758
                  %v760 = vld [vmem:[%s632 + $0x17c] sm:$0xf]
                  %761 = vst [vmem:[%s633 + $0xfc] sm:$0xf] %v760
                  %v762 = vld [vmem:[%s632 + $0x200] sm:$0xf]
                  %763 = vst [vmem:[%s633 + $0x100] sm:$0xf] %v762
                  %v764 = vld [vmem:[%s632 + $0x204] sm:$0xf]
                  %765 = vst [vmem:[%s633 + $0x104] sm:$0xf] %v764
                  %v766 = vld [vmem:[%s632 + $0x208] sm:$0xf]
                  %767 = vst [vmem:[%s633 + $0x108] sm:$0xf] %v766
                  %v768 = vld [vmem:[%s632 + $0x20c] sm:$0xf]
                  %769 = vst [vmem:[%s633 + $0x10c] sm:$0xf] %v768
                  %v770 = vld [vmem:[%s632 + $0x210] sm:$0xf]
                  %771 = vst [vmem:[%s633 + $0x110] sm:$0xf] %v770
                  %v772 = vld [vmem:[%s632 + $0x214] sm:$0xf]
                  %773 = vst [vmem:[%s633 + $0x114] sm:$0xf] %v772
                  %v774 = vld [vmem:[%s632 + $0x218] sm:$0xf]
                  %775 = vst [vmem:[%s633 + $0x118] sm:$0xf] %v774
                  %v776 = vld [vmem:[%s632 + $0x21c] sm:$0xf]
                  %777 = vst [vmem:[%s633 + $0x11c] sm:$0xf] %v776
                  %v778 = vld [vmem:[%s632 + $0x220] sm:$0xf]
                  %779 = vst [vmem:[%s633 + $0x120] sm:$0xf] %v778
                  %v780 = vld [vmem:[%s632 + $0x224] sm:$0xf]
                  %781 = vst [vmem:[%s633 + $0x124] sm:$0xf] %v780
                  %v782 = vld [vmem:[%s632 + $0x228] sm:$0xf]
                  %783 = vst [vmem:[%s633 + $0x128] sm:$0xf] %v782
                  %v784 = vld [vmem:[%s632 + $0x22c] sm:$0xf]
                  %785 = vst [vmem:[%s633 + $0x12c] sm:$0xf] %v784
                  %v786 = vld [vmem:[%s632 + $0x230] sm:$0xf]
                  %787 = vst [vmem:[%s633 + $0x130] sm:$0xf] %v786
                  %v788 = vld [vmem:[%s632 + $0x234] sm:$0xf]
                  %789 = vst [vmem:[%s633 + $0x134] sm:$0xf] %v788
                  %v790 = vld [vmem:[%s632 + $0x238] sm:$0xf]
                  %791 = vst [vmem:[%s633 + $0x138] sm:$0xf] %v790
                  %v792 = vld [vmem:[%s632 + $0x23c] sm:$0xf]
                  %793 = vst [vmem:[%s633 + $0x13c] sm:$0xf] %v792
                  %v794 = vld [vmem:[%s632 + $0x240] sm:$0xf]
                  %795 = vst [vmem:[%s633 + $0x140] sm:$0xf] %v794
                  %v796 = vld [vmem:[%s632 + $0x244] sm:$0xf]
                  %797 = vst [vmem:[%s633 + $0x144] sm:$0xf] %v796
                  %v798 = vld [vmem:[%s632 + $0x248] sm:$0xf]
                  %799 = vst [vmem:[%s633 + $0x148] sm:$0xf] %v798
                  %v800 = vld [vmem:[%s632 + $0x24c] sm:$0xf]
                  %801 = vst [vmem:[%s633 + $0x14c] sm:$0xf] %v800
                  %v802 = vld [vmem:[%s632 + $0x250] sm:$0xf]
                  %803 = vst [vmem:[%s633 + $0x150] sm:$0xf] %v802
                  %v804 = vld [vmem:[%s632 + $0x254] sm:$0xf]
                  %805 = vst [vmem:[%s633 + $0x154] sm:$0xf] %v804
                  %v806 = vld [vmem:[%s632 + $0x258] sm:$0xf]
                  %807 = vst [vmem:[%s633 + $0x158] sm:$0xf] %v806
                  %v808 = vld [vmem:[%s632 + $0x25c] sm:$0xf]
                  %809 = vst [vmem:[%s633 + $0x15c] sm:$0xf] %v808
                  %v810 = vld [vmem:[%s632 + $0x260] sm:$0xf]
                  %811 = vst [vmem:[%s633 + $0x160] sm:$0xf] %v810
                  %v812 = vld [vmem:[%s632 + $0x264] sm:$0xf]
                  %813 = vst [vmem:[%s633 + $0x164] sm:$0xf] %v812
                  %v814 = vld [vmem:[%s632 + $0x268] sm:$0xf]
                  %815 = vst [vmem:[%s633 + $0x168] sm:$0xf] %v814
                  %v816 = vld [vmem:[%s632 + $0x26c] sm:$0xf]
                  %817 = vst [vmem:[%s633 + $0x16c] sm:$0xf] %v816
                  %v818 = vld [vmem:[%s632 + $0x270] sm:$0xf]
                  %819 = vst [vmem:[%s633 + $0x170] sm:$0xf] %v818
                  %v820 = vld [vmem:[%s632 + $0x274] sm:$0xf]
                  %821 = vst [vmem:[%s633 + $0x174] sm:$0xf] %v820
                  %v822 = vld [vmem:[%s632 + $0x278] sm:$0xf]
                  %823 = vst [vmem:[%s633 + $0x178] sm:$0xf] %v822
                  %v824 = vld [vmem:[%s632 + $0x27c] sm:$0xf]
                  %825 = vst [vmem:[%s633 + $0x17c] sm:$0xf] %v824
                $region99: #{update_block.1} parent=86 // loop_footer
                  %s631 = sadd.s32 1, %s627
                $region100: #{update_block.1} parent=86 // loop_footer_branch
                  %626 = sbr.rel target = $region96
                $region101: #{update_block.1} parent=86 // loop_exit
                  _
              $region87: #{update_block.1} parent=71 // pred_fallthru
                _
            $region72: #{update_block.1} parent=67 // pred_fallthru
              _
            // Predicated region
            $region73: #{update_block.1} parent=67 // pred_check
              _
            $region74: #{update_block.1} parent=67 // pred_check_branch
              %413 = sbr.rel (0) target = $region76
            $region75: #{update_block.1} parent=67 // pred_region
              loop: start=0, step=1, limit=1
              $region77: #{update_block.1} parent=75 // loop_pre_header
                _
              $region78: #{update_block.1} parent=75 // loop_header
                %s416 = sphi 0, %s420
                %p417 = scmp.ge.s32.totalorder %s416, 1
                %s421 = sphi %s407, %s407
                %s422 = sphi %s404, %s404
              $region79: #{update_block.1} parent=75 // loop_header_branch
                %419 = sbr.rel (%p417) target = $region83
              $region80: #{update_block.1} parent=75 // loop_body
                %v423 = vld [vmem:[%s421] sm:$0xf]
                %424 = vst [vmem:[%s422] sm:$0xf] %v423
                %v425 = vld [vmem:[%s421 + $0x4] sm:$0xf]
                %426 = vst [vmem:[%s422 + $0x4] sm:$0xf] %v425
                %v427 = vld [vmem:[%s421 + $0x8] sm:$0xf]
                %428 = vst [vmem:[%s422 + $0x8] sm:$0xf] %v427
                %v429 = vld [vmem:[%s421 + $0xc] sm:$0xf]
                %430 = vst [vmem:[%s422 + $0xc] sm:$0xf] %v429
                %v431 = vld [vmem:[%s421 + $0x10] sm:$0xf]
                %432 = vst [vmem:[%s422 + $0x10] sm:$0xf] %v431
                %v433 = vld [vmem:[%s421 + $0x14] sm:$0xf]
                %434 = vst [vmem:[%s422 + $0x14] sm:$0xf] %v433
                %v435 = vld [vmem:[%s421 + $0x18] sm:$0xf]
                %436 = vst [vmem:[%s422 + $0x18] sm:$0xf] %v435
                %v437 = vld [vmem:[%s421 + $0x1c] sm:$0xf]
                %438 = vst [vmem:[%s422 + $0x1c] sm:$0xf] %v437
                %v439 = vld [vmem:[%s421 + $0x20] sm:$0xf]
                %440 = vst [vmem:[%s422 + $0x20] sm:$0xf] %v439
                %v441 = vld [vmem:[%s421 + $0x24] sm:$0xf]
                %442 = vst [vmem:[%s422 + $0x24] sm:$0xf] %v441
                %v443 = vld [vmem:[%s421 + $0x28] sm:$0xf]
                %444 = vst [vmem:[%s422 + $0x28] sm:$0xf] %v443
                %v445 = vld [vmem:[%s421 + $0x2c] sm:$0xf]
                %446 = vst [vmem:[%s422 + $0x2c] sm:$0xf] %v445
                %v447 = vld [vmem:[%s421 + $0x30] sm:$0xf]
                %448 = vst [vmem:[%s422 + $0x30] sm:$0xf] %v447
                %v449 = vld [vmem:[%s421 + $0x34] sm:$0xf]
                %450 = vst [vmem:[%s422 + $0x34] sm:$0xf] %v449
                %v451 = vld [vmem:[%s421 + $0x38] sm:$0xf]
                %452 = vst [vmem:[%s422 + $0x38] sm:$0xf] %v451
                %v453 = vld [vmem:[%s421 + $0x3c] sm:$0xf]
                %454 = vst [vmem:[%s422 + $0x3c] sm:$0xf] %v453
                %v455 = vld [vmem:[%s421 + $0x40] sm:$0xf]
                %456 = vst [vmem:[%s422 + $0x40] sm:$0xf] %v455
                %v457 = vld [vmem:[%s421 + $0x44] sm:$0xf]
                %458 = vst [vmem:[%s422 + $0x44] sm:$0xf] %v457
                %v459 = vld [vmem:[%s421 + $0x48] sm:$0xf]
                %460 = vst [vmem:[%s422 + $0x48] sm:$0xf] %v459
                %v461 = vld [vmem:[%s421 + $0x4c] sm:$0xf]
                %462 = vst [vmem:[%s422 + $0x4c] sm:$0xf] %v461
                %v463 = vld [vmem:[%s421 + $0x50] sm:$0xf]
                %464 = vst [vmem:[%s422 + $0x50] sm:$0xf] %v463
                %v465 = vld [vmem:[%s421 + $0x54] sm:$0xf]
                %466 = vst [vmem:[%s422 + $0x54] sm:$0xf] %v465
                %v467 = vld [vmem:[%s421 + $0x58] sm:$0xf]
                %468 = vst [vmem:[%s422 + $0x58] sm:$0xf] %v467
                %v469 = vld [vmem:[%s421 + $0x5c] sm:$0xf]
                %470 = vst [vmem:[%s422 + $0x5c] sm:$0xf] %v469
                %v471 = vld [vmem:[%s421 + $0x60] sm:$0xf]
                %472 = vst [vmem:[%s422 + $0x60] sm:$0xf] %v471
                %v473 = vld [vmem:[%s421 + $0x64] sm:$0xf]
                %474 = vst [vmem:[%s422 + $0x64] sm:$0xf] %v473
                %v475 = vld [vmem:[%s421 + $0x68] sm:$0xf]
                %476 = vst [vmem:[%s422 + $0x68] sm:$0xf] %v475
                %v477 = vld [vmem:[%s421 + $0x6c] sm:$0xf]
                %478 = vst [vmem:[%s422 + $0x6c] sm:$0xf] %v477
                %v479 = vld [vmem:[%s421 + $0x70] sm:$0xf]
                %480 = vst [vmem:[%s422 + $0x70] sm:$0xf] %v479
                %v481 = vld [vmem:[%s421 + $0x74] sm:$0xf]
                %482 = vst [vmem:[%s422 + $0x74] sm:$0xf] %v481
                %v483 = vld [vmem:[%s421 + $0x78] sm:$0xf]
                %484 = vst [vmem:[%s422 + $0x78] sm:$0xf] %v483
                %v485 = vld [vmem:[%s421 + $0x7c] sm:$0xf]
                %486 = vst [vmem:[%s422 + $0x7c] sm:$0xf] %v485
                %v487 = vld [vmem:[%s421 + $0x100] sm:$0xf]
                %488 = vst [vmem:[%s422 + $0x80] sm:$0xf] %v487
                %v489 = vld [vmem:[%s421 + $0x104] sm:$0xf]
                %490 = vst [vmem:[%s422 + $0x84] sm:$0xf] %v489
                %v491 = vld [vmem:[%s421 + $0x108] sm:$0xf]
                %492 = vst [vmem:[%s422 + $0x88] sm:$0xf] %v491
                %v493 = vld [vmem:[%s421 + $0x10c] sm:$0xf]
                %494 = vst [vmem:[%s422 + $0x8c] sm:$0xf] %v493
                %v495 = vld [vmem:[%s421 + $0x110] sm:$0xf]
                %496 = vst [vmem:[%s422 + $0x90] sm:$0xf] %v495
                %v497 = vld [vmem:[%s421 + $0x114] sm:$0xf]
                %498 = vst [vmem:[%s422 + $0x94] sm:$0xf] %v497
                %v499 = vld [vmem:[%s421 + $0x118] sm:$0xf]
                %500 = vst [vmem:[%s422 + $0x98] sm:$0xf] %v499
                %v501 = vld [vmem:[%s421 + $0x11c] sm:$0xf]
                %502 = vst [vmem:[%s422 + $0x9c] sm:$0xf] %v501
                %v503 = vld [vmem:[%s421 + $0x120] sm:$0xf]
                %504 = vst [vmem:[%s422 + $0xa0] sm:$0xf] %v503
                %v505 = vld [vmem:[%s421 + $0x124] sm:$0xf]
                %506 = vst [vmem:[%s422 + $0xa4] sm:$0xf] %v505
                %v507 = vld [vmem:[%s421 + $0x128] sm:$0xf]
                %508 = vst [vmem:[%s422 + $0xa8] sm:$0xf] %v507
                %v509 = vld [vmem:[%s421 + $0x12c] sm:$0xf]
                %510 = vst [vmem:[%s422 + $0xac] sm:$0xf] %v509
                %v511 = vld [vmem:[%s421 + $0x130] sm:$0xf]
                %512 = vst [vmem:[%s422 + $0xb0] sm:$0xf] %v511
                %v513 = vld [vmem:[%s421 + $0x134] sm:$0xf]
                %514 = vst [vmem:[%s422 + $0xb4] sm:$0xf] %v513
                %v515 = vld [vmem:[%s421 + $0x138] sm:$0xf]
                %516 = vst [vmem:[%s422 + $0xb8] sm:$0xf] %v515
                %v517 = vld [vmem:[%s421 + $0x13c] sm:$0xf]
                %518 = vst [vmem:[%s422 + $0xbc] sm:$0xf] %v517
                %v519 = vld [vmem:[%s421 + $0x140] sm:$0xf]
                %520 = vst [vmem:[%s422 + $0xc0] sm:$0xf] %v519
                %v521 = vld [vmem:[%s421 + $0x144] sm:$0xf]
                %522 = vst [vmem:[%s422 + $0xc4] sm:$0xf] %v521
                %v523 = vld [vmem:[%s421 + $0x148] sm:$0xf]
                %524 = vst [vmem:[%s422 + $0xc8] sm:$0xf] %v523
                %v525 = vld [vmem:[%s421 + $0x14c] sm:$0xf]
                %526 = vst [vmem:[%s422 + $0xcc] sm:$0xf] %v525
                %v527 = vld [vmem:[%s421 + $0x150] sm:$0xf]
                %528 = vst [vmem:[%s422 + $0xd0] sm:$0xf] %v527
                %v529 = vld [vmem:[%s421 + $0x154] sm:$0xf]
                %530 = vst [vmem:[%s422 + $0xd4] sm:$0xf] %v529
                %v531 = vld [vmem:[%s421 + $0x158] sm:$0xf]
                %532 = vst [vmem:[%s422 + $0xd8] sm:$0xf] %v531
                %v533 = vld [vmem:[%s421 + $0x15c] sm:$0xf]
                %534 = vst [vmem:[%s422 + $0xdc] sm:$0xf] %v533
                %v535 = vld [vmem:[%s421 + $0x160] sm:$0xf]
                %536 = vst [vmem:[%s422 + $0xe0] sm:$0xf] %v535
                %v537 = vld [vmem:[%s421 + $0x164] sm:$0xf]
                %538 = vst [vmem:[%s422 + $0xe4] sm:$0xf] %v537
                %v539 = vld [vmem:[%s421 + $0x168] sm:$0xf]
                %540 = vst [vmem:[%s422 + $0xe8] sm:$0xf] %v539
                %v541 = vld [vmem:[%s421 + $0x16c] sm:$0xf]
                %542 = vst [vmem:[%s422 + $0xec] sm:$0xf] %v541
                %v543 = vld [vmem:[%s421 + $0x170] sm:$0xf]
                %544 = vst [vmem:[%s422 + $0xf0] sm:$0xf] %v543
                %v545 = vld [vmem:[%s421 + $0x174] sm:$0xf]
                %546 = vst [vmem:[%s422 + $0xf4] sm:$0xf] %v545
                %v547 = vld [vmem:[%s421 + $0x178] sm:$0xf]
                %548 = vst [vmem:[%s422 + $0xf8] sm:$0xf] %v547
                %v549 = vld [vmem:[%s421 + $0x17c] sm:$0xf]
                %550 = vst [vmem:[%s422 + $0xfc] sm:$0xf] %v549
                %v551 = vld [vmem:[%s421 + $0x200] sm:$0xf]
                %552 = vst [vmem:[%s422 + $0x100] sm:$0xf] %v551
                %v553 = vld [vmem:[%s421 + $0x204] sm:$0xf]
                %554 = vst [vmem:[%s422 + $0x104] sm:$0xf] %v553
                %v555 = vld [vmem:[%s421 + $0x208] sm:$0xf]
                %556 = vst [vmem:[%s422 + $0x108] sm:$0xf] %v555
                %v557 = vld [vmem:[%s421 + $0x20c] sm:$0xf]
                %558 = vst [vmem:[%s422 + $0x10c] sm:$0xf] %v557
                %v559 = vld [vmem:[%s421 + $0x210] sm:$0xf]
                %560 = vst [vmem:[%s422 + $0x110] sm:$0xf] %v559
                %v561 = vld [vmem:[%s421 + $0x214] sm:$0xf]
                %562 = vst [vmem:[%s422 + $0x114] sm:$0xf] %v561
                %v563 = vld [vmem:[%s421 + $0x218] sm:$0xf]
                %564 = vst [vmem:[%s422 + $0x118] sm:$0xf] %v563
                %v565 = vld [vmem:[%s421 + $0x21c] sm:$0xf]
                %566 = vst [vmem:[%s422 + $0x11c] sm:$0xf] %v565
                %v567 = vld [vmem:[%s421 + $0x220] sm:$0xf]
                %568 = vst [vmem:[%s422 + $0x120] sm:$0xf] %v567
                %v569 = vld [vmem:[%s421 + $0x224] sm:$0xf]
                %570 = vst [vmem:[%s422 + $0x124] sm:$0xf] %v569
                %v571 = vld [vmem:[%s421 + $0x228] sm:$0xf]
                %572 = vst [vmem:[%s422 + $0x128] sm:$0xf] %v571
                %v573 = vld [vmem:[%s421 + $0x22c] sm:$0xf]
                %574 = vst [vmem:[%s422 + $0x12c] sm:$0xf] %v573
                %v575 = vld [vmem:[%s421 + $0x230] sm:$0xf]
                %576 = vst [vmem:[%s422 + $0x130] sm:$0xf] %v575
                %v577 = vld [vmem:[%s421 + $0x234] sm:$0xf]
                %578 = vst [vmem:[%s422 + $0x134] sm:$0xf] %v577
                %v579 = vld [vmem:[%s421 + $0x238] sm:$0xf]
                %580 = vst [vmem:[%s422 + $0x138] sm:$0xf] %v579
                %v581 = vld [vmem:[%s421 + $0x23c] sm:$0xf]
                %582 = vst [vmem:[%s422 + $0x13c] sm:$0xf] %v581
                %v583 = vld [vmem:[%s421 + $0x240] sm:$0xf]
                %584 = vst [vmem:[%s422 + $0x140] sm:$0xf] %v583
                %v585 = vld [vmem:[%s421 + $0x244] sm:$0xf]
                %586 = vst [vmem:[%s422 + $0x144] sm:$0xf] %v585
                %v587 = vld [vmem:[%s421 + $0x248] sm:$0xf]
                %588 = vst [vmem:[%s422 + $0x148] sm:$0xf] %v587
                %v589 = vld [vmem:[%s421 + $0x24c] sm:$0xf]
                %590 = vst [vmem:[%s422 + $0x14c] sm:$0xf] %v589
                %v591 = vld [vmem:[%s421 + $0x250] sm:$0xf]
                %592 = vst [vmem:[%s422 + $0x150] sm:$0xf] %v591
                %v593 = vld [vmem:[%s421 + $0x254] sm:$0xf]
                %594 = vst [vmem:[%s422 + $0x154] sm:$0xf] %v593
                %v595 = vld [vmem:[%s421 + $0x258] sm:$0xf]
                %596 = vst [vmem:[%s422 + $0x158] sm:$0xf] %v595
                %v597 = vld [vmem:[%s421 + $0x25c] sm:$0xf]
                %598 = vst [vmem:[%s422 + $0x15c] sm:$0xf] %v597
                %v599 = vld [vmem:[%s421 + $0x260] sm:$0xf]
                %600 = vst [vmem:[%s422 + $0x160] sm:$0xf] %v599
                %v601 = vld [vmem:[%s421 + $0x264] sm:$0xf]
                %602 = vst [vmem:[%s422 + $0x164] sm:$0xf] %v601
                %v603 = vld [vmem:[%s421 + $0x268] sm:$0xf]
                %604 = vst [vmem:[%s422 + $0x168] sm:$0xf] %v603
                %v605 = vld [vmem:[%s421 + $0x26c] sm:$0xf]
                %606 = vst [vmem:[%s422 + $0x16c] sm:$0xf] %v605
                %v607 = vld [vmem:[%s421 + $0x270] sm:$0xf]
                %608 = vst [vmem:[%s422 + $0x170] sm:$0xf] %v607
                %v609 = vld [vmem:[%s421 + $0x274] sm:$0xf]
                %610 = vst [vmem:[%s422 + $0x174] sm:$0xf] %v609
                %v611 = vld [vmem:[%s421 + $0x278] sm:$0xf]
                %612 = vst [vmem:[%s422 + $0x178] sm:$0xf] %v611
                %v613 = vld [vmem:[%s421 + $0x27c] sm:$0xf]
                %614 = vst [vmem:[%s422 + $0x17c] sm:$0xf] %v613
              $region81: #{update_block.1} parent=75 // loop_footer
                %s420 = sadd.s32 1, %s416
              $region82: #{update_block.1} parent=75 // loop_footer_branch
                %415 = sbr.rel target = $region78
              $region83: #{update_block.1} parent=75 // loop_exit
                _
            $region76: #{update_block.1} parent=67 // pred_fallthru
              _
          $region68: #{update_block.1} parent=63 // pred_fallthru
            _
          %826 = vnop
        $region64: #{update_block.1} parent=55 // pred_fallthru
          _
      $region56: #{update_block.1} parent=5 // pred_fallthru
        _
      %p827 = scmp.le.s32.totalorder 1, %s26
      %p828 = scmp.lt.s32.totalorder %s26, 3
      %p829 = pnand %p827, %p828
      %p830 = pneg %p829
      // Predicated region
      $region102: #{update_block.1} parent=5 // pred_check
        _
      $region103: #{update_block.1} parent=5 // pred_check_branch
        %832 = sbr.rel (%p829) target = $region105
      $region104: #{update_block.1} parent=5 // pred_region
        %s833 = ssub.s32 %s26, 1
        %s834 = sand.u32 %s65, 1
        %s835 = sand.u32 %s65, 1
        %s836 = smul.addr %s835, 384
        %s837 = scalar_lea.vmem [#allocation2], %s836
        // Predicated region
        $region106: #{update_block.1} parent=104 // pred_check
          %p838 = pneg %p78
        $region107: #{update_block.1} parent=104 // pred_check_branch
          %840 = sbr.rel (%p838) target = $region109
        $region108: #{update_block.1} parent=104 // pred_region
          _
        $region109: #{update_block.1} parent=104 // pred_fallthru
          _
        %s841 = smul.u32 32, %s31
        %p842 = scmp.lt.s32.totalorder %s841, 63
        %s843 = scalar_select %p842, %s841, 63
        %s844 = smul.addr %s843, 4
        %s845 = scalar_lea.vmem %s0, %s844
        %p846 = pneg %p52
        %p847 = pneg %p49
        %s848 = sand.u32 %s65, 1
        %s849 = sand.u32 %s65, 1
        %s850 = smul.addr %s849, 384
        %s851 = scalar_lea.vmem [#allocation2], %s850
        %p852 = pneg %p78
        %p853 = pneg %p75
        %p854 = pneg %p99
        %p855 = pneg %p96
        %p856 = pneg %p120
        %p857 = pneg %p117
        %p858 = pneg %p141
        %p859 = pneg %p138
        %p860 = pneg %p162
        %p861 = pneg %p159
        %p862 = pneg %p183
        %p863 = pneg %p180
        %p864 = pneg %p204
        %p865 = pneg %p201
        %p866 = pneg %p225
        %p867 = pneg %p222
        %p868 = pneg %p246
        %p869 = pneg %p243
        %p870 = pneg %p267
        %p871 = pneg %p264
        %p872 = pneg %p288
        %p873 = pneg %p285
        %p874 = pneg %p314
        %p875 = pneg %p311
        %s876 = sand.u32 %s301, 1
        %s877 = scalar_lea.sflag [#allocation4], %s876
        %s878 = sand.u32 %s301, 1
        %s879 = smul.addr %s878, 128
        %s880 = scalar_lea.vmem [#allocation3], %s879
        %p881 = pneg %p340
        %p882 = pneg %p337
        %s883 = sand.u32 %s327, 1
        %s884 = scalar_lea.sflag [#allocation6], %s883
        %s885 = sand.u32 %s327, 1
        %s886 = smul.addr %s885, 384
        %s887 = scalar_lea.vmem [#allocation5], %s886
        %s888 = smul.u32 32, %s31
        %p889 = scmp.lt.s32.totalorder %s888, 63
        %s890 = scalar_select %p889, %s888, 63
        %s891 = smul.addr %s890, 4
        %s892 = scalar_lea.vmem %s0, %s891
        %s893 = smul.u32 32, %s31
        %s894 = smul.u32 32, %s31
        %s895 = smul.u32 32, %s31
        %s896 = smul.u32 32, %s31
        %v898 = vld [vmem:[%s837] sm:$0xf]
        %v899 = vld [vmem:[%s837 + $0x4] sm:$0xf]
        %v900 = vld [vmem:[%s837 + $0x8] sm:$0xf]
        %v901 = vld [vmem:[%s837 + $0xc] sm:$0xf]
        %v902 = vld [vmem:[%s837 + $0x10] sm:$0xf]
        %v903 = vld [vmem:[%s837 + $0x14] sm:$0xf]
        %v904 = vld [vmem:[%s837 + $0x18] sm:$0xf]
        %v905 = vld [vmem:[%s837 + $0x1c] sm:$0xf]
        %v906 = vld [vmem:[%s837 + $0x20] sm:$0xf]
        %v907 = vld [vmem:[%s837 + $0x24] sm:$0xf]
        %v908 = vld [vmem:[%s837 + $0x28] sm:$0xf]
        %v909 = vld [vmem:[%s837 + $0x2c] sm:$0xf]
        %v910 = vld [vmem:[%s837 + $0x30] sm:$0xf]
        %v911 = vld [vmem:[%s837 + $0x34] sm:$0xf]
        %v912 = vld [vmem:[%s837 + $0x38] sm:$0xf]
        %v913 = vld [vmem:[%s837 + $0x3c] sm:$0xf]
        %v914 = vld [vmem:[%s837 + $0x40] sm:$0xf]
        %v915 = vld [vmem:[%s837 + $0x44] sm:$0xf]
        %v916 = vld [vmem:[%s837 + $0x48] sm:$0xf]
        %v917 = vld [vmem:[%s837 + $0x4c] sm:$0xf]
        %v918 = vld [vmem:[%s837 + $0x50] sm:$0xf]
        %v919 = vld [vmem:[%s837 + $0x54] sm:$0xf]
        %v920 = vld [vmem:[%s837 + $0x58] sm:$0xf]
        %v921 = vld [vmem:[%s837 + $0x5c] sm:$0xf]
        %v922 = vld [vmem:[%s837 + $0x60] sm:$0xf]
        %v923 = vld [vmem:[%s837 + $0x64] sm:$0xf]
        %v924 = vld [vmem:[%s837 + $0x68] sm:$0xf]
        %v925 = vld [vmem:[%s837 + $0x6c] sm:$0xf]
        %v926 = vld [vmem:[%s837 + $0x70] sm:$0xf]
        %v927 = vld [vmem:[%s837 + $0x74] sm:$0xf]
        %v928 = vld [vmem:[%s837 + $0x78] sm:$0xf]
        %v929 = vld [vmem:[%s837 + $0x7c] sm:$0xf]
        %v930 = vld [vmem:[%s837 + $0x80] sm:$0xf]
        %v931 = vld [vmem:[%s837 + $0x84] sm:$0xf]
        %v932 = vld [vmem:[%s837 + $0x88] sm:$0xf]
        %v933 = vld [vmem:[%s837 + $0x8c] sm:$0xf]
        %v934 = vld [vmem:[%s837 + $0x90] sm:$0xf]
        %v935 = vld [vmem:[%s837 + $0x94] sm:$0xf]
        %v936 = vld [vmem:[%s837 + $0x98] sm:$0xf]
        %v937 = vld [vmem:[%s837 + $0x9c] sm:$0xf]
        %v938 = vld [vmem:[%s837 + $0xa0] sm:$0xf]
        %v939 = vld [vmem:[%s837 + $0xa4] sm:$0xf]
        %v940 = vld [vmem:[%s837 + $0xa8] sm:$0xf]
        %v941 = vld [vmem:[%s837 + $0xac] sm:$0xf]
        %v942 = vld [vmem:[%s837 + $0xb0] sm:$0xf]
        %v943 = vld [vmem:[%s837 + $0xb4] sm:$0xf]
        %v944 = vld [vmem:[%s837 + $0xb8] sm:$0xf]
        %v945 = vld [vmem:[%s837 + $0xbc] sm:$0xf]
        %v946 = vld [vmem:[%s837 + $0xc0] sm:$0xf]
        %v947 = vld [vmem:[%s837 + $0xc4] sm:$0xf]
        %v948 = vld [vmem:[%s837 + $0xc8] sm:$0xf]
        %v949 = vld [vmem:[%s837 + $0xcc] sm:$0xf]
        %v950 = vld [vmem:[%s837 + $0xd0] sm:$0xf]
        %v951 = vld [vmem:[%s837 + $0xd4] sm:$0xf]
        %v952 = vld [vmem:[%s837 + $0xd8] sm:$0xf]
        %v953 = vld [vmem:[%s837 + $0xdc] sm:$0xf]
        %v954 = vld [vmem:[%s837 + $0xe0] sm:$0xf]
        %v955 = vld [vmem:[%s837 + $0xe4] sm:$0xf]
        %v956 = vld [vmem:[%s837 + $0xe8] sm:$0xf]
        %v957 = vld [vmem:[%s837 + $0xec] sm:$0xf]
        %v958 = vld [vmem:[%s837 + $0xf0] sm:$0xf]
        %v959 = vld [vmem:[%s837 + $0xf4] sm:$0xf]
        %v960 = vld [vmem:[%s837 + $0xf8] sm:$0xf]
        %v961 = vld [vmem:[%s837 + $0xfc] sm:$0xf]
        %v962 = vld [vmem:[%s837 + $0x100] sm:$0xf]
        %v963 = vld [vmem:[%s837 + $0x104] sm:$0xf]
        %v964 = vld [vmem:[%s837 + $0x108] sm:$0xf]
        %v965 = vld [vmem:[%s837 + $0x10c] sm:$0xf]
        %v966 = vld [vmem:[%s837 + $0x110] sm:$0xf]
        %v967 = vld [vmem:[%s837 + $0x114] sm:$0xf]
        %v968 = vld [vmem:[%s837 + $0x118] sm:$0xf]
        %v969 = vld [vmem:[%s837 + $0x11c] sm:$0xf]
        %v970 = vld [vmem:[%s837 + $0x120] sm:$0xf]
        %v971 = vld [vmem:[%s837 + $0x124] sm:$0xf]
        %v972 = vld [vmem:[%s837 + $0x128] sm:$0xf]
        %v973 = vld [vmem:[%s837 + $0x12c] sm:$0xf]
        %v974 = vld [vmem:[%s837 + $0x130] sm:$0xf]
        %v975 = vld [vmem:[%s837 + $0x134] sm:$0xf]
        %v976 = vld [vmem:[%s837 + $0x138] sm:$0xf]
        %v977 = vld [vmem:[%s837 + $0x13c] sm:$0xf]
        %v978 = vld [vmem:[%s837 + $0x140] sm:$0xf]
        %v979 = vld [vmem:[%s837 + $0x144] sm:$0xf]
        %v980 = vld [vmem:[%s837 + $0x148] sm:$0xf]
        %v981 = vld [vmem:[%s837 + $0x14c] sm:$0xf]
        %v982 = vld [vmem:[%s837 + $0x150] sm:$0xf]
        %v983 = vld [vmem:[%s837 + $0x154] sm:$0xf]
        %v984 = vld [vmem:[%s837 + $0x158] sm:$0xf]
        %v985 = vld [vmem:[%s837 + $0x15c] sm:$0xf]
        %v986 = vld [vmem:[%s837 + $0x160] sm:$0xf]
        %v987 = vld [vmem:[%s837 + $0x164] sm:$0xf]
        %v988 = vld [vmem:[%s837 + $0x168] sm:$0xf]
        %v989 = vld [vmem:[%s837 + $0x16c] sm:$0xf]
        %v990 = vld [vmem:[%s837 + $0x170] sm:$0xf]
        %v991 = vld [vmem:[%s837 + $0x174] sm:$0xf]
        %v992 = vld [vmem:[%s837 + $0x178] sm:$0xf]
        %v993 = vld [vmem:[%s837 + $0x17c] sm:$0xf]
        %v994 = vld [vmem:[%s2] sm:$0xff]
        %v995 = vld [vmem:[%s2 + $0x8] sm:$0xff]
        %v996 = vld [vmem:[%s2 + $0x10] sm:$0xff]
        %v997 = vld [vmem:[%s2 + $0x18] sm:$0xff]
        %v998 = vld [vmem:[%s2 + $0x20] sm:$0xff]
        %v999 = vld [vmem:[%s2 + $0x28] sm:$0xff]
        %v1000 = vld [vmem:[%s2 + $0x30] sm:$0xff]
        %v1001 = vld [vmem:[%s2 + $0x38] sm:$0xff]
        %v1002 = vld [vmem:[%s2 + $0x40] sm:$0xff]
        %v1003 = vld [vmem:[%s2 + $0x48] sm:$0xff]
        %v1004 = vld [vmem:[%s2 + $0x50] sm:$0xff]
        %v1005 = vld [vmem:[%s2 + $0x58] sm:$0xff]
        %v1006 = vld [vmem:[%s2 + $0x60] sm:$0xff]
        %v1007 = vld [vmem:[%s2 + $0x68] sm:$0xff]
        %v1008 = vld [vmem:[%s2 + $0x70] sm:$0xff]
        %v1009 = vld [vmem:[%s2 + $0x78] sm:$0xff]
        %v1106 = vunpack.c.l.b16 %v898
        %v1107 = vunpack.c.l.b16 %v899
        %v1108 = vunpack.c.l.b16 %v900
        %v1109 = vunpack.c.l.b16 %v901
        %v1110 = vunpack.c.l.b16 %v902
        %v1111 = vunpack.c.l.b16 %v903
        %v1112 = vunpack.c.l.b16 %v904
        %v1113 = vunpack.c.l.b16 %v905
        %v1114 = vunpack.c.l.b16 %v906
        %v1115 = vunpack.c.l.b16 %v907
        %v1116 = vunpack.c.l.b16 %v908
        %v1117 = vunpack.c.l.b16 %v909
        %v1118 = vunpack.c.l.b16 %v910
        %v1119 = vunpack.c.l.b16 %v911
        %v1120 = vunpack.c.l.b16 %v912
        %v1121 = vunpack.c.l.b16 %v913
        %v1122 = vunpack.c.l.b16 %v914
        %v1123 = vunpack.c.l.b16 %v915
        %v1124 = vunpack.c.l.b16 %v916
        %v1125 = vunpack.c.l.b16 %v917
        %v1126 = vunpack.c.l.b16 %v918
        %v1127 = vunpack.c.l.b16 %v919
        %v1128 = vunpack.c.l.b16 %v920
        %v1129 = vunpack.c.l.b16 %v921
        %v1130 = vunpack.c.l.b16 %v922
        %v1131 = vunpack.c.l.b16 %v923
        %v1132 = vunpack.c.l.b16 %v924
        %v1133 = vunpack.c.l.b16 %v925
        %v1134 = vunpack.c.l.b16 %v926
        %v1135 = vunpack.c.l.b16 %v927
        %v1136 = vunpack.c.l.b16 %v928
        %v1137 = vunpack.c.l.b16 %v929
        %v1138 = vunpack.c.l.b16 %v930
        %v1139 = vunpack.c.l.b16 %v931
        %v1140 = vunpack.c.l.b16 %v932
        %v1141 = vunpack.c.l.b16 %v933
        %v1142 = vunpack.c.l.b16 %v934
        %v1143 = vunpack.c.l.b16 %v935
        %v1144 = vunpack.c.l.b16 %v936
        %v1145 = vunpack.c.l.b16 %v937
        %v1146 = vunpack.c.l.b16 %v938
        %v1147 = vunpack.c.l.b16 %v939
        %v1148 = vunpack.c.l.b16 %v940
        %v1149 = vunpack.c.l.b16 %v941
        %v1150 = vunpack.c.l.b16 %v942
        %v1151 = vunpack.c.l.b16 %v943
        %v1152 = vunpack.c.l.b16 %v944
        %v1153 = vunpack.c.l.b16 %v945
        %v1154 = vunpack.c.l.b16 %v946
        %v1155 = vunpack.c.l.b16 %v947
        %v1156 = vunpack.c.l.b16 %v948
        %v1157 = vunpack.c.l.b16 %v949
        %v1158 = vunpack.c.l.b16 %v950
        %v1159 = vunpack.c.l.b16 %v951
        %v1160 = vunpack.c.l.b16 %v952
        %v1161 = vunpack.c.l.b16 %v953
        %v1162 = vunpack.c.l.b16 %v954
        %v1163 = vunpack.c.l.b16 %v955
        %v1164 = vunpack.c.l.b16 %v956
        %v1165 = vunpack.c.l.b16 %v957
        %v1166 = vunpack.c.l.b16 %v958
        %v1167 = vunpack.c.l.b16 %v959
        %v1168 = vunpack.c.l.b16 %v960
        %v1169 = vunpack.c.l.b16 %v961
        %v1170 = vunpack.c.l.b16 %v962
        %v1171 = vunpack.c.l.b16 %v963
        %v1172 = vunpack.c.l.b16 %v964
        %v1173 = vunpack.c.l.b16 %v965
        %v1174 = vunpack.c.l.b16 %v966
        %v1175 = vunpack.c.l.b16 %v967
        %v1176 = vunpack.c.l.b16 %v968
        %v1177 = vunpack.c.l.b16 %v969
        %v1178 = vunpack.c.l.b16 %v970
        %v1179 = vunpack.c.l.b16 %v971
        %v1180 = vunpack.c.l.b16 %v972
        %v1181 = vunpack.c.l.b16 %v973
        %v1182 = vunpack.c.l.b16 %v974
        %v1183 = vunpack.c.l.b16 %v975
        %v1184 = vunpack.c.l.b16 %v976
        %v1185 = vunpack.c.l.b16 %v977
        %v1186 = vunpack.c.l.b16 %v978
        %v1187 = vunpack.c.l.b16 %v979
        %v1188 = vunpack.c.l.b16 %v980
        %v1189 = vunpack.c.l.b16 %v981
        %v1190 = vunpack.c.l.b16 %v982
        %v1191 = vunpack.c.l.b16 %v983
        %v1192 = vunpack.c.l.b16 %v984
        %v1193 = vunpack.c.l.b16 %v985
        %v1194 = vunpack.c.l.b16 %v986
        %v1195 = vunpack.c.l.b16 %v987
        %v1196 = vunpack.c.l.b16 %v988
        %v1197 = vunpack.c.l.b16 %v989
        %v1198 = vunpack.c.l.b16 %v990
        %v1199 = vunpack.c.l.b16 %v991
        %v1200 = vunpack.c.l.b16 %v992
        %v1201 = vunpack.c.l.b16 %v993
        %v1202 = vpack.c.b16 %v1107, %v1106
        %v1203 = vpack.c.b16 %v1109, %v1108
        %v1204 = vpack.c.b16 %v1111, %v1110
        %v1205 = vpack.c.b16 %v1113, %v1112
        %v1206 = vpack.c.b16 %v1115, %v1114
        %v1207 = vpack.c.b16 %v1117, %v1116
        %v1208 = vpack.c.b16 %v1119, %v1118
        %v1209 = vpack.c.b16 %v1121, %v1120
        %v1210 = vpack.c.b16 %v1123, %v1122
        %v1211 = vpack.c.b16 %v1125, %v1124
        %v1212 = vpack.c.b16 %v1127, %v1126
        %v1213 = vpack.c.b16 %v1129, %v1128
        %v1214 = vpack.c.b16 %v1131, %v1130
        %v1215 = vpack.c.b16 %v1133, %v1132
        %v1216 = vpack.c.b16 %v1135, %v1134
        %v1217 = vpack.c.b16 %v1137, %v1136
        %v1218 = vpack.c.b16 %v1139, %v1138
        %v1219 = vpack.c.b16 %v1141, %v1140
        %v1220 = vpack.c.b16 %v1143, %v1142
        %v1221 = vpack.c.b16 %v1145, %v1144
        %v1222 = vpack.c.b16 %v1147, %v1146
        %v1223 = vpack.c.b16 %v1149, %v1148
        %v1224 = vpack.c.b16 %v1151, %v1150
        %v1225 = vpack.c.b16 %v1153, %v1152
        %v1226 = vpack.c.b16 %v1155, %v1154
        %v1227 = vpack.c.b16 %v1157, %v1156
        %v1228 = vpack.c.b16 %v1159, %v1158
        %v1229 = vpack.c.b16 %v1161, %v1160
        %v1230 = vpack.c.b16 %v1163, %v1162
        %v1231 = vpack.c.b16 %v1165, %v1164
        %v1232 = vpack.c.b16 %v1167, %v1166
        %v1233 = vpack.c.b16 %v1169, %v1168
        %v1234 = vpack.c.b16 %v1171, %v1170
        %v1235 = vpack.c.b16 %v1173, %v1172
        %v1236 = vpack.c.b16 %v1175, %v1174
        %v1237 = vpack.c.b16 %v1177, %v1176
        %v1238 = vpack.c.b16 %v1179, %v1178
        %v1239 = vpack.c.b16 %v1181, %v1180
        %v1240 = vpack.c.b16 %v1183, %v1182
        %v1241 = vpack.c.b16 %v1185, %v1184
        %v1242 = vpack.c.b16 %v1187, %v1186
        %v1243 = vpack.c.b16 %v1189, %v1188
        %v1244 = vpack.c.b16 %v1191, %v1190
        %v1245 = vpack.c.b16 %v1193, %v1192
        %v1246 = vpack.c.b16 %v1195, %v1194
        %v1247 = vpack.c.b16 %v1197, %v1196
        %v1248 = vpack.c.b16 %v1199, %v1198
        %v1249 = vpack.c.b16 %v1201, %v1200
        %v1314 = vunpack.c.l.b16 %v994
        %v1315 = vunpack.c.h.b16 %v994
        %v1316 = vunpack.c.l.b16 %v995
        %v1317 = vunpack.c.h.b16 %v995
        %v1318 = vunpack.c.l.b16 %v996
        %v1319 = vunpack.c.h.b16 %v996
        %v1320 = vunpack.c.l.b16 %v997
        %v1321 = vunpack.c.h.b16 %v997
        %v1322 = vunpack.c.l.b16 %v998
        %v1323 = vunpack.c.h.b16 %v998
        %v1324 = vunpack.c.l.b16 %v999
        %v1325 = vunpack.c.h.b16 %v999
        %v1326 = vunpack.c.l.b16 %v1000
        %v1327 = vunpack.c.h.b16 %v1000
        %v1328 = vunpack.c.l.b16 %v1001
        %v1329 = vunpack.c.h.b16 %v1001
        %v1330 = vunpack.c.l.b16 %v1002
        %v1331 = vunpack.c.h.b16 %v1002
        %v1332 = vunpack.c.l.b16 %v1003
        %v1333 = vunpack.c.h.b16 %v1003
        %v1334 = vunpack.c.l.b16 %v1004
        %v1335 = vunpack.c.h.b16 %v1004
        %v1336 = vunpack.c.l.b16 %v1005
        %v1337 = vunpack.c.h.b16 %v1005
        %v1338 = vunpack.c.l.b16 %v1006
        %v1339 = vunpack.c.h.b16 %v1006
        %v1340 = vunpack.c.l.b16 %v1007
        %v1341 = vunpack.c.h.b16 %v1007
        %v1342 = vunpack.c.l.b16 %v1008
        %v1343 = vunpack.c.h.b16 %v1008
        %v1344 = vunpack.c.l.b16 %v1009
        %v1345 = vunpack.c.h.b16 %v1009
        %v1346 = vpack.c.b16 %v1316, %v1314
        %v1347 = vpack.c.b16 %v1317, %v1315
        %v1348 = vpack.c.b16 %v1320, %v1318
        %v1349 = vpack.c.b16 %v1321, %v1319
        %v1350 = vpack.c.b16 %v1324, %v1322
        %v1351 = vpack.c.b16 %v1325, %v1323
        %v1352 = vpack.c.b16 %v1328, %v1326
        %v1353 = vpack.c.b16 %v1329, %v1327
        %v1354 = vpack.c.b16 %v1332, %v1330
        %v1355 = vpack.c.b16 %v1333, %v1331
        %v1356 = vpack.c.b16 %v1336, %v1334
        %v1357 = vpack.c.b16 %v1337, %v1335
        %v1358 = vpack.c.b16 %v1340, %v1338
        %v1359 = vpack.c.b16 %v1341, %v1339
        %v1360 = vpack.c.b16 %v1344, %v1342
        %v1361 = vpack.c.b16 %v1345, %v1343
        %1378 = vmatprep.subr.bf16.mxu0 %v1347
        %1379 = vmatpush1.bf16.msra.mxu0 %v1346
        %1380 = vmatprep.subr.bf16.mxu0 %v1349
        %1381 = vmatpush1.bf16.msra.mxu0 %v1348
        %1382 = vmatprep.subr.bf16.mxu0 %v1351
        %1383 = vmatpush1.bf16.msra.mxu0 %v1350
        %1384 = vmatprep.subr.bf16.mxu0 %v1353
        %1385 = vmatpush1.bf16.msra.mxu0 %v1352
        %1386 = vmatprep.subr.bf16.mxu0 %v1355
        %1387 = vmatpush1.bf16.msra.mxu0 %v1354
        %1388 = vmatprep.subr.bf16.mxu0 %v1357
        %1389 = vmatpush1.bf16.msra.mxu0 %v1356
        %1390 = vmatprep.subr.bf16.mxu0 %v1359
        %1391 = vmatpush1.bf16.msra.mxu0 %v1358
        %1392 = vmatprep.subr.bf16.mxu0 %v1361
        %1393 = vmatpush1.bf16.msra.mxu0 %v1360
        %1394 = vmatprep.subr.bf16.mxu0 0
        %1395 = vmatpush1.bf16.msra.mxu0 0
        %1396 = vmatprep.subr.bf16.mxu0 0
        %1397 = vmatpush1.bf16.msra.mxu0 0
        %1398 = vmatprep.subr.bf16.mxu0 0
        %1399 = vmatpush1.bf16.msra.mxu0 0
        %1400 = vmatprep.subr.bf16.mxu0 0
        %1401 = vmatpush1.bf16.msra.mxu0 0
        %1402 = vmatprep.subr.bf16.mxu0 0
        %1403 = vmatpush1.bf16.msra.mxu0 0
        %1404 = vmatprep.subr.bf16.mxu0 0
        %1405 = vmatpush1.bf16.msra.mxu0 0
        %1406 = vmatprep.subr.bf16.mxu0 0
        %1407 = vmatpush1.bf16.msra.mxu0 0
        %1408 = vmatprep.subr.bf16.mxu0 0
        %1409 = vmatpush1.bf16.msra.mxu0 0
        %1410 = vmatprep.mubr.bf16.mxu0 0
        %1411 = vmatmul.mubr.bf16.gmra.mrb[0].mxu0 %v1202
        %v1412 = vpop.f32.mrb[0].mxu0
        %v1413 = vadd.f32 0.0, %v1412
        %v1414 = vpop.f32.mrb[0].mxu0
        %v1415 = vadd.f32 0.0, %v1414
        %v1416 = vpop.f32.mrb[0].mxu0
        %v1417 = vadd.f32 0.0, %v1416
        %v1418 = vpop.f32.mrb[0].mxu0
        %v1419 = vadd.f32 0.0, %v1418
        %1420 = vmatprep.mubr.bf16.mxu0 0
        %1421 = vmatmul.mubr.bf16.gmra.mrb[0].mxu0 %v1203
        %v1422 = vpop.f32.mrb[0].mxu0
        %v1423 = vadd.f32 0.0, %v1422
        %v1424 = vpop.f32.mrb[0].mxu0
        %v1425 = vadd.f32 0.0, %v1424
        %v1426 = vpop.f32.mrb[0].mxu0
        %v1427 = vadd.f32 0.0, %v1426
        %v1428 = vpop.f32.mrb[0].mxu0
        %v1429 = vadd.f32 0.0, %v1428
        %1430 = vmatprep.mubr.bf16.mxu0 0
        %1431 = vmatmul.mubr.bf16.gmra.mrb[0].mxu0 %v1204
        %v1432 = vpop.f32.mrb[0].mxu0
        %v1433 = vadd.f32 0.0, %v1432
        %v1434 = vpop.f32.mrb[0].mxu0
        %v1435 = vadd.f32 0.0, %v1434
        %v1436 = vpop.f32.mrb[0].mxu0
        %v1437 = vadd.f32 0.0, %v1436
        %v1438 = vpop.f32.mrb[0].mxu0
        %v1439 = vadd.f32 0.0, %v1438
        %1440 = vmatprep.mubr.bf16.mxu0 0
        %1441 = vmatmul.mubr.bf16.gmra.mrb[0].mxu0 %v1205
        %v1442 = vpop.f32.mrb[0].mxu0
        %v1443 = vadd.f32 0.0, %v1442
        %v1444 = vpop.f32.mrb[0].mxu0
        %v1445 = vadd.f32 0.0, %v1444
        %v1446 = vpop.f32.mrb[0].mxu0
        %v1447 = vadd.f32 0.0, %v1446
        %v1448 = vpop.f32.mrb[0].mxu0
        %v1449 = vadd.f32 0.0, %v1448
        %1450 = vmatprep.mubr.bf16.mxu0 0
        %1451 = vmatmul.mubr.bf16.gmra.mrb[0].mxu0 %v1206
        %v1452 = vpop.f32.mrb[0].mxu0
        %v1453 = vadd.f32 0.0, %v1452
        %v1454 = vpop.f32.mrb[0].mxu0
        %v1455 = vadd.f32 0.0, %v1454
        %v1456 = vpop.f32.mrb[0].mxu0
        %v1457 = vadd.f32 0.0, %v1456
        %v1458 = vpop.f32.mrb[0].mxu0
        %v1459 = vadd.f32 0.0, %v1458
        %1460 = vmatprep.mubr.bf16.mxu0 0
        %1461 = vmatmul.mubr.bf16.gmra.mrb[0].mxu0 %v1207
        %v1462 = vpop.f32.mrb[0].mxu0
        %v1463 = vadd.f32 0.0, %v1462
        %v1464 = vpop.f32.mrb[0].mxu0
        %v1465 = vadd.f32 0.0, %v1464
        %v1466 = vpop.f32.mrb[0].mxu0
        %v1467 = vadd.f32 0.0, %v1466
        %v1468 = vpop.f32.mrb[0].mxu0
        %v1469 = vadd.f32 0.0, %v1468
        %1470 = vmatprep.mubr.bf16.mxu0 0
        %1471 = vmatmul.mubr.bf16.gmra.mrb[0].mxu0 %v1208
        %v1472 = vpop.f32.mrb[0].mxu0
        %v1473 = vadd.f32 0.0, %v1472
        %v1474 = vpop.f32.mrb[0].mxu0
        %v1475 = vadd.f32 0.0, %v1474
        %v1476 = vpop.f32.mrb[0].mxu0
        %v1477 = vadd.f32 0.0, %v1476
        %v1478 = vpop.f32.mrb[0].mxu0
        %v1479 = vadd.f32 0.0, %v1478
        %1480 = vmatprep.mubr.bf16.mxu0 0
        %1481 = vmatmul.mubr.bf16.gmra.mrb[0].mxu0 %v1209
        %v1482 = vpop.f32.mrb[0].mxu0
        %v1483 = vadd.f32 0.0, %v1482
        %v1484 = vpop.f32.mrb[0].mxu0
        %v1485 = vadd.f32 0.0, %v1484
        %v1486 = vpop.f32.mrb[0].mxu0
        %v1487 = vadd.f32 0.0, %v1486
        %v1488 = vpop.f32.mrb[0].mxu0
        %v1489 = vadd.f32 0.0, %v1488
        %1490 = vmatprep.mubr.bf16.mxu0 0
        %1491 = vmatmul.mubr.bf16.gmra.mrb[0].mxu0 %v1210
        %v1492 = vpop.f32.mrb[0].mxu0
        %v1493 = vadd.f32 0.0, %v1492
        %v1494 = vpop.f32.mrb[0].mxu0
        %v1495 = vadd.f32 0.0, %v1494
        %v1496 = vpop.f32.mrb[0].mxu0
        %v1497 = vadd.f32 0.0, %v1496
        %v1498 = vpop.f32.mrb[0].mxu0
        %v1499 = vadd.f32 0.0, %v1498
        %1500 = vmatprep.mubr.bf16.mxu0 0
        %1501 = vmatmul.mubr.bf16.gmra.mrb[0].mxu0 %v1211
        %v1502 = vpop.f32.mrb[0].mxu0
        %v1503 = vadd.f32 0.0, %v1502
        %v1504 = vpop.f32.mrb[0].mxu0
        %v1505 = vadd.f32 0.0, %v1504
        %v1506 = vpop.f32.mrb[0].mxu0
        %v1507 = vadd.f32 0.0, %v1506
        %v1508 = vpop.f32.mrb[0].mxu0
        %v1509 = vadd.f32 0.0, %v1508
        %1510 = vmatprep.mubr.bf16.mxu0 0
        %1511 = vmatmul.mubr.bf16.gmra.mrb[0].mxu0 %v1212
        %v1512 = vpop.f32.mrb[0].mxu0
        %v1513 = vadd.f32 0.0, %v1512
        %v1514 = vpop.f32.mrb[0].mxu0
        %v1515 = vadd.f32 0.0, %v1514
        %v1516 = vpop.f32.mrb[0].mxu0
        %v1517 = vadd.f32 0.0, %v1516
        %v1518 = vpop.f32.mrb[0].mxu0
        %v1519 = vadd.f32 0.0, %v1518
        %1520 = vmatprep.mubr.bf16.mxu0 0
        %1521 = vmatmul.mubr.bf16.gmra.mrb[0].mxu0 %v1213
        %v1522 = vpop.f32.mrb[0].mxu0
        %v1523 = vadd.f32 0.0, %v1522
        %v1524 = vpop.f32.mrb[0].mxu0
        %v1525 = vadd.f32 0.0, %v1524
        %v1526 = vpop.f32.mrb[0].mxu0
        %v1527 = vadd.f32 0.0, %v1526
        %v1528 = vpop.f32.mrb[0].mxu0
        %v1529 = vadd.f32 0.0, %v1528
        %1530 = vmatprep.mubr.bf16.mxu0 0
        %1531 = vmatmul.mubr.bf16.gmra.mrb[0].mxu0 %v1214
        %v1532 = vpop.f32.mrb[0].mxu0
        %v1533 = vadd.f32 0.0, %v1532
        %v1534 = vpop.f32.mrb[0].mxu0
        %v1535 = vadd.f32 0.0, %v1534
        %v1536 = vpop.f32.mrb[0].mxu0
        %v1537 = vadd.f32 0.0, %v1536
        %v1538 = vpop.f32.mrb[0].mxu0
        %v1539 = vadd.f32 0.0, %v1538
        %1540 = vmatprep.mubr.bf16.mxu0 0
        %1541 = vmatmul.mubr.bf16.gmra.mrb[0].mxu0 %v1215
        %v1542 = vpop.f32.mrb[0].mxu0
        %v1543 = vadd.f32 0.0, %v1542
        %v1544 = vpop.f32.mrb[0].mxu0
        %v1545 = vadd.f32 0.0, %v1544
        %v1546 = vpop.f32.mrb[0].mxu0
        %v1547 = vadd.f32 0.0, %v1546
        %v1548 = vpop.f32.mrb[0].mxu0
        %v1549 = vadd.f32 0.0, %v1548
        %1550 = vmatprep.mubr.bf16.mxu0 0
        %1551 = vmatmul.mubr.bf16.gmra.mrb[0].mxu0 %v1216
        %v1552 = vpop.f32.mrb[0].mxu0
        %v1553 = vadd.f32 0.0, %v1552
        %v1554 = vpop.f32.mrb[0].mxu0
        %v1555 = vadd.f32 0.0, %v1554
        %v1556 = vpop.f32.mrb[0].mxu0
        %v1557 = vadd.f32 0.0, %v1556
        %v1558 = vpop.f32.mrb[0].mxu0
        %v1559 = vadd.f32 0.0, %v1558
        %1560 = vmatprep.mubr.bf16.mxu0 0
        %1561 = vmatmul.mubr.bf16.gmra.mrb[0].mxu0 %v1217
        %v1562 = vpop.f32.mrb[0].mxu0
        %v1563 = vadd.f32 0.0, %v1562
        %v1564 = vpop.f32.mrb[0].mxu0
        %v1565 = vadd.f32 0.0, %v1564
        %v1566 = vpop.f32.mrb[0].mxu0
        %v1567 = vadd.f32 0.0, %v1566
        %v1568 = vpop.f32.mrb[0].mxu0
        %v1569 = vadd.f32 0.0, %v1568
        %1570 = vmatprep.mubr.bf16.mxu0 0
        %1571 = vmatmul.mubr.bf16.gmra.mrb[0].mxu0 %v1218
        %v1572 = vpop.f32.mrb[0].mxu0
        %v1573 = vadd.f32 0.0, %v1572
        %v1574 = vpop.f32.mrb[0].mxu0
        %v1575 = vadd.f32 0.0, %v1574
        %v1576 = vpop.f32.mrb[0].mxu0
        %v1577 = vadd.f32 0.0, %v1576
        %v1578 = vpop.f32.mrb[0].mxu0
        %v1579 = vadd.f32 0.0, %v1578
        %1580 = vmatprep.mubr.bf16.mxu0 0
        %1581 = vmatmul.mubr.bf16.gmra.mrb[0].mxu0 %v1219
        %v1582 = vpop.f32.mrb[0].mxu0
        %v1583 = vadd.f32 0.0, %v1582
        %v1584 = vpop.f32.mrb[0].mxu0
        %v1585 = vadd.f32 0.0, %v1584
        %v1586 = vpop.f32.mrb[0].mxu0
        %v1587 = vadd.f32 0.0, %v1586
        %v1588 = vpop.f32.mrb[0].mxu0
        %v1589 = vadd.f32 0.0, %v1588
        %1590 = vmatprep.mubr.bf16.mxu0 0
        %1591 = vmatmul.mubr.bf16.gmra.mrb[0].mxu0 %v1220
        %v1592 = vpop.f32.mrb[0].mxu0
        %v1593 = vadd.f32 0.0, %v1592
        %v1594 = vpop.f32.mrb[0].mxu0
        %v1595 = vadd.f32 0.0, %v1594
        %v1596 = vpop.f32.mrb[0].mxu0
        %v1597 = vadd.f32 0.0, %v1596
        %v1598 = vpop.f32.mrb[0].mxu0
        %v1599 = vadd.f32 0.0, %v1598
        %1600 = vmatprep.mubr.bf16.mxu0 0
        %1601 = vmatmul.mubr.bf16.gmra.mrb[0].mxu0 %v1221
        %v1602 = vpop.f32.mrb[0].mxu0
        %v1603 = vadd.f32 0.0, %v1602
        %v1604 = vpop.f32.mrb[0].mxu0
        %v1605 = vadd.f32 0.0, %v1604
        %v1606 = vpop.f32.mrb[0].mxu0
        %v1607 = vadd.f32 0.0, %v1606
        %v1608 = vpop.f32.mrb[0].mxu0
        %v1609 = vadd.f32 0.0, %v1608
        %1610 = vmatprep.mubr.bf16.mxu0 0
        %1611 = vmatmul.mubr.bf16.gmra.mrb[0].mxu0 %v1222
        %v1612 = vpop.f32.mrb[0].mxu0
        %v1613 = vadd.f32 0.0, %v1612
        %v1614 = vpop.f32.mrb[0].mxu0
        %v1615 = vadd.f32 0.0, %v1614
        %v1616 = vpop.f32.mrb[0].mxu0
        %v1617 = vadd.f32 0.0, %v1616
        %v1618 = vpop.f32.mrb[0].mxu0
        %v1619 = vadd.f32 0.0, %v1618
        %1620 = vmatprep.mubr.bf16.mxu0 0
        %1621 = vmatmul.mubr.bf16.gmra.mrb[0].mxu0 %v1223
        %v1622 = vpop.f32.mrb[0].mxu0
        %v1623 = vadd.f32 0.0, %v1622
        %v1624 = vpop.f32.mrb[0].mxu0
        %v1625 = vadd.f32 0.0, %v1624
        %v1626 = vpop.f32.mrb[0].mxu0
        %v1627 = vadd.f32 0.0, %v1626
        %v1628 = vpop.f32.mrb[0].mxu0
        %v1629 = vadd.f32 0.0, %v1628
        %1630 = vmatprep.mubr.bf16.mxu0 0
        %1631 = vmatmul.mubr.bf16.gmra.mrb[0].mxu0 %v1224
        %v1632 = vpop.f32.mrb[0].mxu0
        %v1633 = vadd.f32 0.0, %v1632
        %v1634 = vpop.f32.mrb[0].mxu0
        %v1635 = vadd.f32 0.0, %v1634
        %v1636 = vpop.f32.mrb[0].mxu0
        %v1637 = vadd.f32 0.0, %v1636
        %v1638 = vpop.f32.mrb[0].mxu0
        %v1639 = vadd.f32 0.0, %v1638
        %1640 = vmatprep.mubr.bf16.mxu0 0
        %1641 = vmatmul.mubr.bf16.gmra.mrb[0].mxu0 %v1225
        %v1642 = vpop.f32.mrb[0].mxu0
        %v1643 = vadd.f32 0.0, %v1642
        %v1644 = vpop.f32.mrb[0].mxu0
        %v1645 = vadd.f32 0.0, %v1644
        %v1646 = vpop.f32.mrb[0].mxu0
        %v1647 = vadd.f32 0.0, %v1646
        %v1648 = vpop.f32.mrb[0].mxu0
        %v1649 = vadd.f32 0.0, %v1648
        %1650 = vmatprep.mubr.bf16.mxu0 0
        %1651 = vmatmul.mubr.bf16.gmra.mrb[0].mxu0 %v1226
        %v1652 = vpop.f32.mrb[0].mxu0
        %v1653 = vadd.f32 0.0, %v1652
        %v1654 = vpop.f32.mrb[0].mxu0
        %v1655 = vadd.f32 0.0, %v1654
        %v1656 = vpop.f32.mrb[0].mxu0
        %v1657 = vadd.f32 0.0, %v1656
        %v1658 = vpop.f32.mrb[0].mxu0
        %v1659 = vadd.f32 0.0, %v1658
        %1660 = vmatprep.mubr.bf16.mxu0 0
        %1661 = vmatmul.mubr.bf16.gmra.mrb[0].mxu0 %v1227
        %v1662 = vpop.f32.mrb[0].mxu0
        %v1663 = vadd.f32 0.0, %v1662
        %v1664 = vpop.f32.mrb[0].mxu0
        %v1665 = vadd.f32 0.0, %v1664
        %v1666 = vpop.f32.mrb[0].mxu0
        %v1667 = vadd.f32 0.0, %v1666
        %v1668 = vpop.f32.mrb[0].mxu0
        %v1669 = vadd.f32 0.0, %v1668
        %1670 = vmatprep.mubr.bf16.mxu0 0
        %1671 = vmatmul.mubr.bf16.gmra.mrb[0].mxu0 %v1228
        %v1672 = vpop.f32.mrb[0].mxu0
        %v1673 = vadd.f32 0.0, %v1672
        %v1674 = vpop.f32.mrb[0].mxu0
        %v1675 = vadd.f32 0.0, %v1674
        %v1676 = vpop.f32.mrb[0].mxu0
        %v1677 = vadd.f32 0.0, %v1676
        %v1678 = vpop.f32.mrb[0].mxu0
        %v1679 = vadd.f32 0.0, %v1678
        %1680 = vmatprep.mubr.bf16.mxu0 0
        %1681 = vmatmul.mubr.bf16.gmra.mrb[0].mxu0 %v1229
        %v1682 = vpop.f32.mrb[0].mxu0
        %v1683 = vadd.f32 0.0, %v1682
        %v1684 = vpop.f32.mrb[0].mxu0
        %v1685 = vadd.f32 0.0, %v1684
        %v1686 = vpop.f32.mrb[0].mxu0
        %v1687 = vadd.f32 0.0, %v1686
        %v1688 = vpop.f32.mrb[0].mxu0
        %v1689 = vadd.f32 0.0, %v1688
        %1690 = vmatprep.mubr.bf16.mxu0 0
        %1691 = vmatmul.mubr.bf16.gmra.mrb[0].mxu0 %v1230
        %v1692 = vpop.f32.mrb[0].mxu0
        %v1693 = vadd.f32 0.0, %v1692
        %v1694 = vpop.f32.mrb[0].mxu0
        %v1695 = vadd.f32 0.0, %v1694
        %v1696 = vpop.f32.mrb[0].mxu0
        %v1697 = vadd.f32 0.0, %v1696
        %v1698 = vpop.f32.mrb[0].mxu0
        %v1699 = vadd.f32 0.0, %v1698
        %1700 = vmatprep.mubr.bf16.mxu0 0
        %1701 = vmatmul.mubr.bf16.gmra.mrb[0].mxu0 %v1231
        %v1702 = vpop.f32.mrb[0].mxu0
        %v1703 = vadd.f32 0.0, %v1702
        %v1704 = vpop.f32.mrb[0].mxu0
        %v1705 = vadd.f32 0.0, %v1704
        %v1706 = vpop.f32.mrb[0].mxu0
        %v1707 = vadd.f32 0.0, %v1706
        %v1708 = vpop.f32.mrb[0].mxu0
        %v1709 = vadd.f32 0.0, %v1708
        %1710 = vmatprep.mubr.bf16.mxu0 0
        %1711 = vmatmul.mubr.bf16.gmra.mrb[0].mxu0 %v1232
        %v1712 = vpop.f32.mrb[0].mxu0
        %v1713 = vadd.f32 0.0, %v1712
        %v1714 = vpop.f32.mrb[0].mxu0
        %v1715 = vadd.f32 0.0, %v1714
        %v1716 = vpop.f32.mrb[0].mxu0
        %v1717 = vadd.f32 0.0, %v1716
        %v1718 = vpop.f32.mrb[0].mxu0
        %v1719 = vadd.f32 0.0, %v1718
        %1720 = vmatprep.mubr.bf16.mxu0 0
        %1721 = vmatmul.mubr.bf16.gmra.mrb[0].mxu0 %v1233
        %v1722 = vpop.f32.mrb[0].mxu0
        %v1723 = vadd.f32 0.0, %v1722
        %v1724 = vpop.f32.mrb[0].mxu0
        %v1725 = vadd.f32 0.0, %v1724
        %v1726 = vpop.f32.mrb[0].mxu0
        %v1727 = vadd.f32 0.0, %v1726
        %v1728 = vpop.f32.mrb[0].mxu0
        %v1729 = vadd.f32 0.0, %v1728
        %1730 = vmatprep.mubr.bf16.mxu0 0
        %1731 = vmatmul.mubr.bf16.gmra.mrb[0].mxu0 %v1234
        %v1732 = vpop.f32.mrb[0].mxu0
        %v1733 = vadd.f32 0.0, %v1732
        %v1734 = vpop.f32.mrb[0].mxu0
        %v1735 = vadd.f32 0.0, %v1734
        %v1736 = vpop.f32.mrb[0].mxu0
        %v1737 = vadd.f32 0.0, %v1736
        %v1738 = vpop.f32.mrb[0].mxu0
        %v1739 = vadd.f32 0.0, %v1738
        %1740 = vmatprep.mubr.bf16.mxu0 0
        %1741 = vmatmul.mubr.bf16.gmra.mrb[0].mxu0 %v1235
        %v1742 = vpop.f32.mrb[0].mxu0
        %v1743 = vadd.f32 0.0, %v1742
        %v1744 = vpop.f32.mrb[0].mxu0
        %v1745 = vadd.f32 0.0, %v1744
        %v1746 = vpop.f32.mrb[0].mxu0
        %v1747 = vadd.f32 0.0, %v1746
        %v1748 = vpop.f32.mrb[0].mxu0
        %v1749 = vadd.f32 0.0, %v1748
        %1750 = vmatprep.mubr.bf16.mxu0 0
        %1751 = vmatmul.mubr.bf16.gmra.mrb[0].mxu0 %v1236
        %v1752 = vpop.f32.mrb[0].mxu0
        %v1753 = vadd.f32 0.0, %v1752
        %v1754 = vpop.f32.mrb[0].mxu0
        %v1755 = vadd.f32 0.0, %v1754
        %v1756 = vpop.f32.mrb[0].mxu0
        %v1757 = vadd.f32 0.0, %v1756
        %v1758 = vpop.f32.mrb[0].mxu0
        %v1759 = vadd.f32 0.0, %v1758
        %1760 = vmatprep.mubr.bf16.mxu0 0
        %1761 = vmatmul.mubr.bf16.gmra.mrb[0].mxu0 %v1237
        %v1762 = vpop.f32.mrb[0].mxu0
        %v1763 = vadd.f32 0.0, %v1762
        %v1764 = vpop.f32.mrb[0].mxu0
        %v1765 = vadd.f32 0.0, %v1764
        %v1766 = vpop.f32.mrb[0].mxu0
        %v1767 = vadd.f32 0.0, %v1766
        %v1768 = vpop.f32.mrb[0].mxu0
        %v1769 = vadd.f32 0.0, %v1768
        %1770 = vmatprep.mubr.bf16.mxu0 0
        %1771 = vmatmul.mubr.bf16.gmra.mrb[0].mxu0 %v1238
        %v1772 = vpop.f32.mrb[0].mxu0
        %v1773 = vadd.f32 0.0, %v1772
        %v1774 = vpop.f32.mrb[0].mxu0
        %v1775 = vadd.f32 0.0, %v1774
        %v1776 = vpop.f32.mrb[0].mxu0
        %v1777 = vadd.f32 0.0, %v1776
        %v1778 = vpop.f32.mrb[0].mxu0
        %v1779 = vadd.f32 0.0, %v1778
        %1780 = vmatprep.mubr.bf16.mxu0 0
        %1781 = vmatmul.mubr.bf16.gmra.mrb[0].mxu0 %v1239
        %v1782 = vpop.f32.mrb[0].mxu0
        %v1783 = vadd.f32 0.0, %v1782
        %v1784 = vpop.f32.mrb[0].mxu0
        %v1785 = vadd.f32 0.0, %v1784
        %v1786 = vpop.f32.mrb[0].mxu0
        %v1787 = vadd.f32 0.0, %v1786
        %v1788 = vpop.f32.mrb[0].mxu0
        %v1789 = vadd.f32 0.0, %v1788
        %1790 = vmatprep.mubr.bf16.mxu0 0
        %1791 = vmatmul.mubr.bf16.gmra.mrb[0].mxu0 %v1240
        %v1792 = vpop.f32.mrb[0].mxu0
        %v1793 = vadd.f32 0.0, %v1792
        %v1794 = vpop.f32.mrb[0].mxu0
        %v1795 = vadd.f32 0.0, %v1794
        %v1796 = vpop.f32.mrb[0].mxu0
        %v1797 = vadd.f32 0.0, %v1796
        %v1798 = vpop.f32.mrb[0].mxu0
        %v1799 = vadd.f32 0.0, %v1798
        %1800 = vmatprep.mubr.bf16.mxu0 0
        %1801 = vmatmul.mubr.bf16.gmra.mrb[0].mxu0 %v1241
        %v1802 = vpop.f32.mrb[0].mxu0
        %v1803 = vadd.f32 0.0, %v1802
        %v1804 = vpop.f32.mrb[0].mxu0
        %v1805 = vadd.f32 0.0, %v1804
        %v1806 = vpop.f32.mrb[0].mxu0
        %v1807 = vadd.f32 0.0, %v1806
        %v1808 = vpop.f32.mrb[0].mxu0
        %v1809 = vadd.f32 0.0, %v1808
        %1810 = vmatprep.mubr.bf16.mxu0 0
        %1811 = vmatmul.mubr.bf16.gmra.mrb[0].mxu0 %v1242
        %v1812 = vpop.f32.mrb[0].mxu0
        %v1813 = vadd.f32 0.0, %v1812
        %v1814 = vpop.f32.mrb[0].mxu0
        %v1815 = vadd.f32 0.0, %v1814
        %v1816 = vpop.f32.mrb[0].mxu0
        %v1817 = vadd.f32 0.0, %v1816
        %v1818 = vpop.f32.mrb[0].mxu0
        %v1819 = vadd.f32 0.0, %v1818
        %1820 = vmatprep.mubr.bf16.mxu0 0
        %1821 = vmatmul.mubr.bf16.gmra.mrb[0].mxu0 %v1243
        %v1822 = vpop.f32.mrb[0].mxu0
        %v1823 = vadd.f32 0.0, %v1822
        %v1824 = vpop.f32.mrb[0].mxu0
        %v1825 = vadd.f32 0.0, %v1824
        %v1826 = vpop.f32.mrb[0].mxu0
        %v1827 = vadd.f32 0.0, %v1826
        %v1828 = vpop.f32.mrb[0].mxu0
        %v1829 = vadd.f32 0.0, %v1828
        %1830 = vmatprep.mubr.bf16.mxu0 0
        %1831 = vmatmul.mubr.bf16.gmra.mrb[0].mxu0 %v1244
        %v1832 = vpop.f32.mrb[0].mxu0
        %v1833 = vadd.f32 0.0, %v1832
        %v1834 = vpop.f32.mrb[0].mxu0
        %v1835 = vadd.f32 0.0, %v1834
        %v1836 = vpop.f32.mrb[0].mxu0
        %v1837 = vadd.f32 0.0, %v1836
        %v1838 = vpop.f32.mrb[0].mxu0
        %v1839 = vadd.f32 0.0, %v1838
        %1840 = vmatprep.mubr.bf16.mxu0 0
        %1841 = vmatmul.mubr.bf16.gmra.mrb[0].mxu0 %v1245
        %v1842 = vpop.f32.mrb[0].mxu0
        %v1843 = vadd.f32 0.0, %v1842
        %v1844 = vpop.f32.mrb[0].mxu0
        %v1845 = vadd.f32 0.0, %v1844
        %v1846 = vpop.f32.mrb[0].mxu0
        %v1847 = vadd.f32 0.0, %v1846
        %v1848 = vpop.f32.mrb[0].mxu0
        %v1849 = vadd.f32 0.0, %v1848
        %1850 = vmatprep.mubr.bf16.mxu0 0
        %1851 = vmatmul.mubr.bf16.gmra.mrb[0].mxu0 %v1246
        %v1852 = vpop.f32.mrb[0].mxu0
        %v1853 = vadd.f32 0.0, %v1852
        %v1854 = vpop.f32.mrb[0].mxu0
        %v1855 = vadd.f32 0.0, %v1854
        %v1856 = vpop.f32.mrb[0].mxu0
        %v1857 = vadd.f32 0.0, %v1856
        %v1858 = vpop.f32.mrb[0].mxu0
        %v1859 = vadd.f32 0.0, %v1858
        %1860 = vmatprep.mubr.bf16.mxu0 0
        %1861 = vmatmul.mubr.bf16.gmra.mrb[0].mxu0 %v1247
        %v1862 = vpop.f32.mrb[0].mxu0
        %v1863 = vadd.f32 0.0, %v1862
        %v1864 = vpop.f32.mrb[0].mxu0
        %v1865 = vadd.f32 0.0, %v1864
        %v1866 = vpop.f32.mrb[0].mxu0
        %v1867 = vadd.f32 0.0, %v1866
        %v1868 = vpop.f32.mrb[0].mxu0
        %v1869 = vadd.f32 0.0, %v1868
        %1870 = vmatprep.mubr.bf16.mxu0 0
        %1871 = vmatmul.mubr.bf16.gmra.mrb[0].mxu0 %v1248
        %v1872 = vpop.f32.mrb[0].mxu0
        %v1873 = vadd.f32 0.0, %v1872
        %v1874 = vpop.f32.mrb[0].mxu0
        %v1875 = vadd.f32 0.0, %v1874
        %v1876 = vpop.f32.mrb[0].mxu0
        %v1877 = vadd.f32 0.0, %v1876
        %v1878 = vpop.f32.mrb[0].mxu0
        %v1879 = vadd.f32 0.0, %v1878
        %1880 = vmatprep.mubr.bf16.mxu0 0
        %1881 = vmatmul.mubr.bf16.gmra.mrb[0].mxu0 %v1249
        %v1882 = vpop.f32.mrb[0].mxu0
        %v1883 = vadd.f32 0.0, %v1882
        %v1884 = vpop.f32.mrb[0].mxu0
        %v1885 = vadd.f32 0.0, %v1884
        %v1886 = vpop.f32.mrb[0].mxu0
        %v1887 = vadd.f32 0.0, %v1886
        %v1888 = vpop.f32.mrb[0].mxu0
        %v1889 = vadd.f32 0.0, %v1888
        %1890 = vdwg.mxu0
        %v1891 = vmul.f32 %v1415, %v1415
        %v1892 = vmul.f32 %v1419, %v1419
        %v1893 = vmul.f32 %v1425, %v1425
        %v1894 = vmul.f32 %v1429, %v1429
        %v1895 = vmul.f32 %v1435, %v1435
        %v1896 = vmul.f32 %v1439, %v1439
        %v1897 = vmul.f32 %v1445, %v1445
        %v1898 = vmul.f32 %v1449, %v1449
        %v1899 = vmul.f32 %v1455, %v1455
        %v1900 = vmul.f32 %v1459, %v1459
        %v1901 = vmul.f32 %v1465, %v1465
        %v1902 = vmul.f32 %v1469, %v1469
        %v1903 = vmul.f32 %v1475, %v1475
        %v1904 = vmul.f32 %v1479, %v1479
        %v1905 = vmul.f32 %v1485, %v1485
        %v1906 = vmul.f32 %v1489, %v1489
        %v1907 = vmul.f32 %v1495, %v1495
        %v1908 = vmul.f32 %v1499, %v1499
        %v1909 = vmul.f32 %v1505, %v1505
        %v1910 = vmul.f32 %v1509, %v1509
        %v1911 = vmul.f32 %v1515, %v1515
        %v1912 = vmul.f32 %v1519, %v1519
        %v1913 = vmul.f32 %v1525, %v1525
        %v1914 = vmul.f32 %v1529, %v1529
        %v1915 = vmul.f32 %v1535, %v1535
        %v1916 = vmul.f32 %v1539, %v1539
        %v1917 = vmul.f32 %v1545, %v1545
        %v1918 = vmul.f32 %v1549, %v1549
        %v1919 = vmul.f32 %v1555, %v1555
        %v1920 = vmul.f32 %v1559, %v1559
        %v1921 = vmul.f32 %v1565, %v1565
        %v1922 = vmul.f32 %v1569, %v1569
        %v1923 = vmul.f32 %v1575, %v1575
        %v1924 = vmul.f32 %v1579, %v1579
        %v1925 = vmul.f32 %v1585, %v1585
        %v1926 = vmul.f32 %v1589, %v1589
        %v1927 = vmul.f32 %v1595, %v1595
        %v1928 = vmul.f32 %v1599, %v1599
        %v1929 = vmul.f32 %v1605, %v1605
        %v1930 = vmul.f32 %v1609, %v1609
        %v1931 = vmul.f32 %v1615, %v1615
        %v1932 = vmul.f32 %v1619, %v1619
        %v1933 = vmul.f32 %v1625, %v1625
        %v1934 = vmul.f32 %v1629, %v1629
        %v1935 = vmul.f32 %v1635, %v1635
        %v1936 = vmul.f32 %v1639, %v1639
        %v1937 = vmul.f32 %v1645, %v1645
        %v1938 = vmul.f32 %v1649, %v1649
        %v1939 = vmul.f32 %v1655, %v1655
        %v1940 = vmul.f32 %v1659, %v1659
        %v1941 = vmul.f32 %v1665, %v1665
        %v1942 = vmul.f32 %v1669, %v1669
        %v1943 = vmul.f32 %v1675, %v1675
        %v1944 = vmul.f32 %v1679, %v1679
        %v1945 = vmul.f32 %v1685, %v1685
        %v1946 = vmul.f32 %v1689, %v1689
        %v1947 = vmul.f32 %v1695, %v1695
        %v1948 = vmul.f32 %v1699, %v1699
        %v1949 = vmul.f32 %v1705, %v1705
        %v1950 = vmul.f32 %v1709, %v1709
        %v1951 = vmul.f32 %v1715, %v1715
        %v1952 = vmul.f32 %v1719, %v1719
        %v1953 = vmul.f32 %v1725, %v1725
        %v1954 = vmul.f32 %v1729, %v1729
        %v1955 = vmul.f32 %v1735, %v1735
        %v1956 = vmul.f32 %v1739, %v1739
        %v1957 = vmul.f32 %v1745, %v1745
        %v1958 = vmul.f32 %v1749, %v1749
        %v1959 = vmul.f32 %v1755, %v1755
        %v1960 = vmul.f32 %v1759, %v1759
        %v1961 = vmul.f32 %v1765, %v1765
        %v1962 = vmul.f32 %v1769, %v1769
        %v1963 = vmul.f32 %v1775, %v1775
        %v1964 = vmul.f32 %v1779, %v1779
        %v1965 = vmul.f32 %v1785, %v1785
        %v1966 = vmul.f32 %v1789, %v1789
        %v1967 = vmul.f32 %v1795, %v1795
        %v1968 = vmul.f32 %v1799, %v1799
        %v1969 = vmul.f32 %v1805, %v1805
        %v1970 = vmul.f32 %v1809, %v1809
        %v1971 = vmul.f32 %v1815, %v1815
        %v1972 = vmul.f32 %v1819, %v1819
        %v1973 = vmul.f32 %v1825, %v1825
        %v1974 = vmul.f32 %v1829, %v1829
        %v1975 = vmul.f32 %v1835, %v1835
        %v1976 = vmul.f32 %v1839, %v1839
        %v1977 = vmul.f32 %v1845, %v1845
        %v1978 = vmul.f32 %v1849, %v1849
        %v1979 = vmul.f32 %v1855, %v1855
        %v1980 = vmul.f32 %v1859, %v1859
        %v1981 = vmul.f32 %v1865, %v1865
        %v1982 = vmul.f32 %v1869, %v1869
        %v1983 = vmul.f32 %v1875, %v1875
        %v1984 = vmul.f32 %v1879, %v1879
        %v1985 = vmul.f32 %v1885, %v1885
        %v1986 = vmul.f32 %v1889, %v1889
        %v1987 = vadd.f32 %v1891, 1e-15
        %v1988 = vadd.f32 %v1892, 1e-15
        %v1989 = vadd.f32 %v1893, 1e-15
        %v1990 = vadd.f32 %v1894, 1e-15
        %v1991 = vadd.f32 %v1895, 1e-15
        %v1992 = vadd.f32 %v1896, 1e-15
        %v1993 = vadd.f32 %v1897, 1e-15
        %v1994 = vadd.f32 %v1898, 1e-15
        %v1995 = vadd.f32 %v1899, 1e-15
        %v1996 = vadd.f32 %v1900, 1e-15
        %v1997 = vadd.f32 %v1901, 1e-15
        %v1998 = vadd.f32 %v1902, 1e-15
        %v1999 = vadd.f32 %v1903, 1e-15
        %v2000 = vadd.f32 %v1904, 1e-15
        %v2001 = vadd.f32 %v1905, 1e-15
        %v2002 = vadd.f32 %v1906, 1e-15
        %v2003 = vadd.f32 %v1907, 1e-15
        %v2004 = vadd.f32 %v1908, 1e-15
        %v2005 = vadd.f32 %v1909, 1e-15
        %v2006 = vadd.f32 %v1910, 1e-15
        %v2007 = vadd.f32 %v1911, 1e-15
        %v2008 = vadd.f32 %v1912, 1e-15
        %v2009 = vadd.f32 %v1913, 1e-15
        %v2010 = vadd.f32 %v1914, 1e-15
        %v2011 = vadd.f32 %v1915, 1e-15
        %v2012 = vadd.f32 %v1916, 1e-15
        %v2013 = vadd.f32 %v1917, 1e-15
        %v2014 = vadd.f32 %v1918, 1e-15
        %v2015 = vadd.f32 %v1919, 1e-15
        %v2016 = vadd.f32 %v1920, 1e-15
        %v2017 = vadd.f32 %v1921, 1e-15
        %v2018 = vadd.f32 %v1922, 1e-15
        %v2019 = vadd.f32 %v1923, 1e-15
        %v2020 = vadd.f32 %v1924, 1e-15
        %v2021 = vadd.f32 %v1925, 1e-15
        %v2022 = vadd.f32 %v1926, 1e-15
        %v2023 = vadd.f32 %v1927, 1e-15
        %v2024 = vadd.f32 %v1928, 1e-15
        %v2025 = vadd.f32 %v1929, 1e-15
        %v2026 = vadd.f32 %v1930, 1e-15
        %v2027 = vadd.f32 %v1931, 1e-15
        %v2028 = vadd.f32 %v1932, 1e-15
        %v2029 = vadd.f32 %v1933, 1e-15
        %v2030 = vadd.f32 %v1934, 1e-15
        %v2031 = vadd.f32 %v1935, 1e-15
        %v2032 = vadd.f32 %v1936, 1e-15
        %v2033 = vadd.f32 %v1937, 1e-15
        %v2034 = vadd.f32 %v1938, 1e-15
        %v2035 = vadd.f32 %v1939, 1e-15
        %v2036 = vadd.f32 %v1940, 1e-15
        %v2037 = vadd.f32 %v1941, 1e-15
        %v2038 = vadd.f32 %v1942, 1e-15
        %v2039 = vadd.f32 %v1943, 1e-15
        %v2040 = vadd.f32 %v1944, 1e-15
        %v2041 = vadd.f32 %v1945, 1e-15
        %v2042 = vadd.f32 %v1946, 1e-15
        %v2043 = vadd.f32 %v1947, 1e-15
        %v2044 = vadd.f32 %v1948, 1e-15
        %v2045 = vadd.f32 %v1949, 1e-15
        %v2046 = vadd.f32 %v1950, 1e-15
        %v2047 = vadd.f32 %v1951, 1e-15
        %v2048 = vadd.f32 %v1952, 1e-15
        %v2049 = vadd.f32 %v1953, 1e-15
        %v2050 = vadd.f32 %v1954, 1e-15
        %v2051 = vadd.f32 %v1955, 1e-15
        %v2052 = vadd.f32 %v1956, 1e-15
        %v2053 = vadd.f32 %v1957, 1e-15
        %v2054 = vadd.f32 %v1958, 1e-15
        %v2055 = vadd.f32 %v1959, 1e-15
        %v2056 = vadd.f32 %v1960, 1e-15
        %v2057 = vadd.f32 %v1961, 1e-15
        %v2058 = vadd.f32 %v1962, 1e-15
        %v2059 = vadd.f32 %v1963, 1e-15
        %v2060 = vadd.f32 %v1964, 1e-15
        %v2061 = vadd.f32 %v1965, 1e-15
        %v2062 = vadd.f32 %v1966, 1e-15
        %v2063 = vadd.f32 %v1967, 1e-15
        %v2064 = vadd.f32 %v1968, 1e-15
        %v2065 = vadd.f32 %v1969, 1e-15
        %v2066 = vadd.f32 %v1970, 1e-15
        %v2067 = vadd.f32 %v1971, 1e-15
        %v2068 = vadd.f32 %v1972, 1e-15
        %v2069 = vadd.f32 %v1973, 1e-15
        %v2070 = vadd.f32 %v1974, 1e-15
        %v2071 = vadd.f32 %v1975, 1e-15
        %v2072 = vadd.f32 %v1976, 1e-15
        %v2073 = vadd.f32 %v1977, 1e-15
        %v2074 = vadd.f32 %v1978, 1e-15
        %v2075 = vadd.f32 %v1979, 1e-15
        %v2076 = vadd.f32 %v1980, 1e-15
        %v2077 = vadd.f32 %v1981, 1e-15
        %v2078 = vadd.f32 %v1982, 1e-15
        %v2079 = vadd.f32 %v1983, 1e-15
        %v2080 = vadd.f32 %v1984, 1e-15
        %v2081 = vadd.f32 %v1985, 1e-15
        %v2082 = vadd.f32 %v1986, 1e-15
        %v2083 = vadd.f32 %v1987, %v2019
        %v2084 = vadd.f32 %v2083, %v2051
        %v2085 = vadd.f32 %v1988, %v2020
        %v2086 = vadd.f32 %v2085, %v2052
        %v2087 = vadd.f32 %v1989, %v2021
        %v2088 = vadd.f32 %v2087, %v2053
        %v2089 = vadd.f32 %v1990, %v2022
        %v2090 = vadd.f32 %v2089, %v2054
        %v2091 = vadd.f32 %v1991, %v2023
        %v2092 = vadd.f32 %v2091, %v2055
        %v2093 = vadd.f32 %v1992, %v2024
        %v2094 = vadd.f32 %v2093, %v2056
        %v2095 = vadd.f32 %v1993, %v2025
        %v2096 = vadd.f32 %v2095, %v2057
        %v2097 = vadd.f32 %v1994, %v2026
        %v2098 = vadd.f32 %v2097, %v2058
        %v2099 = vadd.f32 %v1995, %v2027
        %v2100 = vadd.f32 %v2099, %v2059
        %v2101 = vadd.f32 %v1996, %v2028
        %v2102 = vadd.f32 %v2101, %v2060
        %v2103 = vadd.f32 %v1997, %v2029
        %v2104 = vadd.f32 %v2103, %v2061
        %v2105 = vadd.f32 %v1998, %v2030
        %v2106 = vadd.f32 %v2105, %v2062
        %v2107 = vadd.f32 %v1999, %v2031
        %v2108 = vadd.f32 %v2107, %v2063
        %v2109 = vadd.f32 %v2000, %v2032
        %v2110 = vadd.f32 %v2109, %v2064
        %v2111 = vadd.f32 %v2001, %v2033
        %v2112 = vadd.f32 %v2111, %v2065
        %v2113 = vadd.f32 %v2002, %v2034
        %v2114 = vadd.f32 %v2113, %v2066
        %v2115 = vadd.f32 %v2003, %v2035
        %v2116 = vadd.f32 %v2115, %v2067
        %v2117 = vadd.f32 %v2004, %v2036
        %v2118 = vadd.f32 %v2117, %v2068
        %v2119 = vadd.f32 %v2005, %v2037
        %v2120 = vadd.f32 %v2119, %v2069
        %v2121 = vadd.f32 %v2006, %v2038
        %v2122 = vadd.f32 %v2121, %v2070
        %v2123 = vadd.f32 %v2007, %v2039
        %v2124 = vadd.f32 %v2123, %v2071
        %v2125 = vadd.f32 %v2008, %v2040
        %v2126 = vadd.f32 %v2125, %v2072
        %v2127 = vadd.f32 %v2009, %v2041
        %v2128 = vadd.f32 %v2127, %v2073
        %v2129 = vadd.f32 %v2010, %v2042
        %v2130 = vadd.f32 %v2129, %v2074
        %v2131 = vadd.f32 %v2011, %v2043
        %v2132 = vadd.f32 %v2131, %v2075
        %v2133 = vadd.f32 %v2012, %v2044
        %v2134 = vadd.f32 %v2133, %v2076
        %v2135 = vadd.f32 %v2013, %v2045
        %v2136 = vadd.f32 %v2135, %v2077
        %v2137 = vadd.f32 %v2014, %v2046
        %v2138 = vadd.f32 %v2137, %v2078
        %v2139 = vadd.f32 %v2015, %v2047
        %v2140 = vadd.f32 %v2139, %v2079
        %v2141 = vadd.f32 %v2016, %v2048
        %v2142 = vadd.f32 %v2141, %v2080
        %v2143 = vadd.f32 %v2017, %v2049
        %v2144 = vadd.f32 %v2143, %v2081
        %v2145 = vadd.f32 %v2018, %v2050
        %v2146 = vadd.f32 %v2145, %v2082
        %v2147 = vrsqrt.pop %v2084
        %v2148 = vmul.f32 %v2084, %v2147
        %vm2149 = vcmp.eq.f32.partialorder %v2084, inf
        %v2150 = vsel %vm2149, %v2084, %v2148
        %vm2151 = vcmp.eq.f32.partialorder %v2084, 0.0
        %v2152 = vand.u32 %v2084, 2147483648
        %v2153 = vsel %vm2151, %v2152, %v2150
        %v2154 = vrsqrt.pop %v2086
        %v2155 = vmul.f32 %v2086, %v2154
        %vm2156 = vcmp.eq.f32.partialorder %v2086, inf
        %v2157 = vsel %vm2156, %v2086, %v2155
        %vm2158 = vcmp.eq.f32.partialorder %v2086, 0.0
        %v2159 = vand.u32 %v2086, 2147483648
        %v2160 = vsel %vm2158, %v2159, %v2157
        %v2161 = vrsqrt.pop %v2088
        %v2162 = vmul.f32 %v2088, %v2161
        %vm2163 = vcmp.eq.f32.partialorder %v2088, inf
        %v2164 = vsel %vm2163, %v2088, %v2162
        %vm2165 = vcmp.eq.f32.partialorder %v2088, 0.0
        %v2166 = vand.u32 %v2088, 2147483648
        %v2167 = vsel %vm2165, %v2166, %v2164
        %v2168 = vrsqrt.pop %v2090
        %v2169 = vmul.f32 %v2090, %v2168
        %vm2170 = vcmp.eq.f32.partialorder %v2090, inf
        %v2171 = vsel %vm2170, %v2090, %v2169
        %vm2172 = vcmp.eq.f32.partialorder %v2090, 0.0
        %v2173 = vand.u32 %v2090, 2147483648
        %v2174 = vsel %vm2172, %v2173, %v2171
        %v2175 = vrsqrt.pop %v2092
        %v2176 = vmul.f32 %v2092, %v2175
        %vm2177 = vcmp.eq.f32.partialorder %v2092, inf
        %v2178 = vsel %vm2177, %v2092, %v2176
        %vm2179 = vcmp.eq.f32.partialorder %v2092, 0.0
        %v2180 = vand.u32 %v2092, 2147483648
        %v2181 = vsel %vm2179, %v2180, %v2178
        %v2182 = vrsqrt.pop %v2094
        %v2183 = vmul.f32 %v2094, %v2182
        %vm2184 = vcmp.eq.f32.partialorder %v2094, inf
        %v2185 = vsel %vm2184, %v2094, %v2183
        %vm2186 = vcmp.eq.f32.partialorder %v2094, 0.0
        %v2187 = vand.u32 %v2094, 2147483648
        %v2188 = vsel %vm2186, %v2187, %v2185
        %v2189 = vrsqrt.pop %v2096
        %v2190 = vmul.f32 %v2096, %v2189
        %vm2191 = vcmp.eq.f32.partialorder %v2096, inf
        %v2192 = vsel %vm2191, %v2096, %v2190
        %vm2193 = vcmp.eq.f32.partialorder %v2096, 0.0
        %v2194 = vand.u32 %v2096, 2147483648
        %v2195 = vsel %vm2193, %v2194, %v2192
        %v2196 = vrsqrt.pop %v2098
        %v2197 = vmul.f32 %v2098, %v2196
        %vm2198 = vcmp.eq.f32.partialorder %v2098, inf
        %v2199 = vsel %vm2198, %v2098, %v2197
        %vm2200 = vcmp.eq.f32.partialorder %v2098, 0.0
        %v2201 = vand.u32 %v2098, 2147483648
        %v2202 = vsel %vm2200, %v2201, %v2199
        %v2203 = vrsqrt.pop %v2100
        %v2204 = vmul.f32 %v2100, %v2203
        %vm2205 = vcmp.eq.f32.partialorder %v2100, inf
        %v2206 = vsel %vm2205, %v2100, %v2204
        %vm2207 = vcmp.eq.f32.partialorder %v2100, 0.0
        %v2208 = vand.u32 %v2100, 2147483648
        %v2209 = vsel %vm2207, %v2208, %v2206
        %v2210 = vrsqrt.pop %v2102
        %v2211 = vmul.f32 %v2102, %v2210
        %vm2212 = vcmp.eq.f32.partialorder %v2102, inf
        %v2213 = vsel %vm2212, %v2102, %v2211
        %vm2214 = vcmp.eq.f32.partialorder %v2102, 0.0
        %v2215 = vand.u32 %v2102, 2147483648
        %v2216 = vsel %vm2214, %v2215, %v2213
        %v2217 = vrsqrt.pop %v2104
        %v2218 = vmul.f32 %v2104, %v2217
        %vm2219 = vcmp.eq.f32.partialorder %v2104, inf
        %v2220 = vsel %vm2219, %v2104, %v2218
        %vm2221 = vcmp.eq.f32.partialorder %v2104, 0.0
        %v2222 = vand.u32 %v2104, 2147483648
        %v2223 = vsel %vm2221, %v2222, %v2220
        %v2224 = vrsqrt.pop %v2106
        %v2225 = vmul.f32 %v2106, %v2224
        %vm2226 = vcmp.eq.f32.partialorder %v2106, inf
        %v2227 = vsel %vm2226, %v2106, %v2225
        %vm2228 = vcmp.eq.f32.partialorder %v2106, 0.0
        %v2229 = vand.u32 %v2106, 2147483648
        %v2230 = vsel %vm2228, %v2229, %v2227
        %v2231 = vrsqrt.pop %v2108
        %v2232 = vmul.f32 %v2108, %v2231
        %vm2233 = vcmp.eq.f32.partialorder %v2108, inf
        %v2234 = vsel %vm2233, %v2108, %v2232
        %vm2235 = vcmp.eq.f32.partialorder %v2108, 0.0
        %v2236 = vand.u32 %v2108, 2147483648
        %v2237 = vsel %vm2235, %v2236, %v2234
        %v2238 = vrsqrt.pop %v2110
        %v2239 = vmul.f32 %v2110, %v2238
        %vm2240 = vcmp.eq.f32.partialorder %v2110, inf
        %v2241 = vsel %vm2240, %v2110, %v2239
        %vm2242 = vcmp.eq.f32.partialorder %v2110, 0.0
        %v2243 = vand.u32 %v2110, 2147483648
        %v2244 = vsel %vm2242, %v2243, %v2241
        %v2245 = vrsqrt.pop %v2112
        %v2246 = vmul.f32 %v2112, %v2245
        %vm2247 = vcmp.eq.f32.partialorder %v2112, inf
        %v2248 = vsel %vm2247, %v2112, %v2246
        %vm2249 = vcmp.eq.f32.partialorder %v2112, 0.0
        %v2250 = vand.u32 %v2112, 2147483648
        %v2251 = vsel %vm2249, %v2250, %v2248
        %v2252 = vrsqrt.pop %v2114
        %v2253 = vmul.f32 %v2114, %v2252
        %vm2254 = vcmp.eq.f32.partialorder %v2114, inf
        %v2255 = vsel %vm2254, %v2114, %v2253
        %vm2256 = vcmp.eq.f32.partialorder %v2114, 0.0
        %v2257 = vand.u32 %v2114, 2147483648
        %v2258 = vsel %vm2256, %v2257, %v2255
        %v2259 = vrsqrt.pop %v2116
        %v2260 = vmul.f32 %v2116, %v2259
        %vm2261 = vcmp.eq.f32.partialorder %v2116, inf
        %v2262 = vsel %vm2261, %v2116, %v2260
        %vm2263 = vcmp.eq.f32.partialorder %v2116, 0.0
        %v2264 = vand.u32 %v2116, 2147483648
        %v2265 = vsel %vm2263, %v2264, %v2262
        %v2266 = vrsqrt.pop %v2118
        %v2267 = vmul.f32 %v2118, %v2266
        %vm2268 = vcmp.eq.f32.partialorder %v2118, inf
        %v2269 = vsel %vm2268, %v2118, %v2267
        %vm2270 = vcmp.eq.f32.partialorder %v2118, 0.0
        %v2271 = vand.u32 %v2118, 2147483648
        %v2272 = vsel %vm2270, %v2271, %v2269
        %v2273 = vrsqrt.pop %v2120
        %v2274 = vmul.f32 %v2120, %v2273
        %vm2275 = vcmp.eq.f32.partialorder %v2120, inf
        %v2276 = vsel %vm2275, %v2120, %v2274
        %vm2277 = vcmp.eq.f32.partialorder %v2120, 0.0
        %v2278 = vand.u32 %v2120, 2147483648
        %v2279 = vsel %vm2277, %v2278, %v2276
        %v2280 = vrsqrt.pop %v2122
        %v2281 = vmul.f32 %v2122, %v2280
        %vm2282 = vcmp.eq.f32.partialorder %v2122, inf
        %v2283 = vsel %vm2282, %v2122, %v2281
        %vm2284 = vcmp.eq.f32.partialorder %v2122, 0.0
        %v2285 = vand.u32 %v2122, 2147483648
        %v2286 = vsel %vm2284, %v2285, %v2283
        %v2287 = vrsqrt.pop %v2124
        %v2288 = vmul.f32 %v2124, %v2287
        %vm2289 = vcmp.eq.f32.partialorder %v2124, inf
        %v2290 = vsel %vm2289, %v2124, %v2288
        %vm2291 = vcmp.eq.f32.partialorder %v2124, 0.0
        %v2292 = vand.u32 %v2124, 2147483648
        %v2293 = vsel %vm2291, %v2292, %v2290
        %v2294 = vrsqrt.pop %v2126
        %v2295 = vmul.f32 %v2126, %v2294
        %vm2296 = vcmp.eq.f32.partialorder %v2126, inf
        %v2297 = vsel %vm2296, %v2126, %v2295
        %vm2298 = vcmp.eq.f32.partialorder %v2126, 0.0
        %v2299 = vand.u32 %v2126, 2147483648
        %v2300 = vsel %vm2298, %v2299, %v2297
        %v2301 = vrsqrt.pop %v2128
        %v2302 = vmul.f32 %v2128, %v2301
        %vm2303 = vcmp.eq.f32.partialorder %v2128, inf
        %v2304 = vsel %vm2303, %v2128, %v2302
        %vm2305 = vcmp.eq.f32.partialorder %v2128, 0.0
        %v2306 = vand.u32 %v2128, 2147483648
        %v2307 = vsel %vm2305, %v2306, %v2304
        %v2308 = vrsqrt.pop %v2130
        %v2309 = vmul.f32 %v2130, %v2308
        %vm2310 = vcmp.eq.f32.partialorder %v2130, inf
        %v2311 = vsel %vm2310, %v2130, %v2309
        %vm2312 = vcmp.eq.f32.partialorder %v2130, 0.0
        %v2313 = vand.u32 %v2130, 2147483648
        %v2314 = vsel %vm2312, %v2313, %v2311
        %v2315 = vrsqrt.pop %v2132
        %v2316 = vmul.f32 %v2132, %v2315
        %vm2317 = vcmp.eq.f32.partialorder %v2132, inf
        %v2318 = vsel %vm2317, %v2132, %v2316
        %vm2319 = vcmp.eq.f32.partialorder %v2132, 0.0
        %v2320 = vand.u32 %v2132, 2147483648
        %v2321 = vsel %vm2319, %v2320, %v2318
        %v2322 = vrsqrt.pop %v2134
        %v2323 = vmul.f32 %v2134, %v2322
        %vm2324 = vcmp.eq.f32.partialorder %v2134, inf
        %v2325 = vsel %vm2324, %v2134, %v2323
        %vm2326 = vcmp.eq.f32.partialorder %v2134, 0.0
        %v2327 = vand.u32 %v2134, 2147483648
        %v2328 = vsel %vm2326, %v2327, %v2325
        %v2329 = vrsqrt.pop %v2136
        %v2330 = vmul.f32 %v2136, %v2329
        %vm2331 = vcmp.eq.f32.partialorder %v2136, inf
        %v2332 = vsel %vm2331, %v2136, %v2330
        %vm2333 = vcmp.eq.f32.partialorder %v2136, 0.0
        %v2334 = vand.u32 %v2136, 2147483648
        %v2335 = vsel %vm2333, %v2334, %v2332
        %v2336 = vrsqrt.pop %v2138
        %v2337 = vmul.f32 %v2138, %v2336
        %vm2338 = vcmp.eq.f32.partialorder %v2138, inf
        %v2339 = vsel %vm2338, %v2138, %v2337
        %vm2340 = vcmp.eq.f32.partialorder %v2138, 0.0
        %v2341 = vand.u32 %v2138, 2147483648
        %v2342 = vsel %vm2340, %v2341, %v2339
        %v2343 = vrsqrt.pop %v2140
        %v2344 = vmul.f32 %v2140, %v2343
        %vm2345 = vcmp.eq.f32.partialorder %v2140, inf
        %v2346 = vsel %vm2345, %v2140, %v2344
        %vm2347 = vcmp.eq.f32.partialorder %v2140, 0.0
        %v2348 = vand.u32 %v2140, 2147483648
        %v2349 = vsel %vm2347, %v2348, %v2346
        %v2350 = vrsqrt.pop %v2142
        %v2351 = vmul.f32 %v2142, %v2350
        %vm2352 = vcmp.eq.f32.partialorder %v2142, inf
        %v2353 = vsel %vm2352, %v2142, %v2351
        %vm2354 = vcmp.eq.f32.partialorder %v2142, 0.0
        %v2355 = vand.u32 %v2142, 2147483648
        %v2356 = vsel %vm2354, %v2355, %v2353
        %v2357 = vrsqrt.pop %v2144
        %v2358 = vmul.f32 %v2144, %v2357
        %vm2359 = vcmp.eq.f32.partialorder %v2144, inf
        %v2360 = vsel %vm2359, %v2144, %v2358
        %vm2361 = vcmp.eq.f32.partialorder %v2144, 0.0
        %v2362 = vand.u32 %v2144, 2147483648
        %v2363 = vsel %vm2361, %v2362, %v2360
        %v2364 = vrsqrt.pop %v2146
        %v2365 = vmul.f32 %v2146, %v2364
        %vm2366 = vcmp.eq.f32.partialorder %v2146, inf
        %v2367 = vsel %vm2366, %v2146, %v2365
        %vm2368 = vcmp.eq.f32.partialorder %v2146, 0.0
        %v2369 = vand.u32 %v2146, 2147483648
        %v2370 = vsel %vm2368, %v2369, %v2367
        %v2371 = vmul.f32 %v1413, %v1415
        %v2372 = vmul.f32 %v1417, %v1419
        %v2373 = vmul.f32 %v1423, %v1425
        %v2374 = vmul.f32 %v1427, %v1429
        %v2375 = vmul.f32 %v1433, %v1435
        %v2376 = vmul.f32 %v1437, %v1439
        %v2377 = vmul.f32 %v1443, %v1445
        %v2378 = vmul.f32 %v1447, %v1449
        %v2379 = vmul.f32 %v1453, %v1455
        %v2380 = vmul.f32 %v1457, %v1459
        %v2381 = vmul.f32 %v1463, %v1465
        %v2382 = vmul.f32 %v1467, %v1469
        %v2383 = vmul.f32 %v1473, %v1475
        %v2384 = vmul.f32 %v1477, %v1479
        %v2385 = vmul.f32 %v1483, %v1485
        %v2386 = vmul.f32 %v1487, %v1489
        %v2387 = vmul.f32 %v1493, %v1495
        %v2388 = vmul.f32 %v1497, %v1499
        %v2389 = vmul.f32 %v1503, %v1505
        %v2390 = vmul.f32 %v1507, %v1509
        %v2391 = vmul.f32 %v1513, %v1515
        %v2392 = vmul.f32 %v1517, %v1519
        %v2393 = vmul.f32 %v1523, %v1525
        %v2394 = vmul.f32 %v1527, %v1529
        %v2395 = vmul.f32 %v1533, %v1535
        %v2396 = vmul.f32 %v1537, %v1539
        %v2397 = vmul.f32 %v1543, %v1545
        %v2398 = vmul.f32 %v1547, %v1549
        %v2399 = vmul.f32 %v1553, %v1555
        %v2400 = vmul.f32 %v1557, %v1559
        %v2401 = vmul.f32 %v1563, %v1565
        %v2402 = vmul.f32 %v1567, %v1569
        %v2403 = vmul.f32 %v1573, %v1575
        %v2404 = vmul.f32 %v1577, %v1579
        %v2405 = vmul.f32 %v1583, %v1585
        %v2406 = vmul.f32 %v1587, %v1589
        %v2407 = vmul.f32 %v1593, %v1595
        %v2408 = vmul.f32 %v1597, %v1599
        %v2409 = vmul.f32 %v1603, %v1605
        %v2410 = vmul.f32 %v1607, %v1609
        %v2411 = vmul.f32 %v1613, %v1615
        %v2412 = vmul.f32 %v1617, %v1619
        %v2413 = vmul.f32 %v1623, %v1625
        %v2414 = vmul.f32 %v1627, %v1629
        %v2415 = vmul.f32 %v1633, %v1635
        %v2416 = vmul.f32 %v1637, %v1639
        %v2417 = vmul.f32 %v1643, %v1645
        %v2418 = vmul.f32 %v1647, %v1649
        %v2419 = vmul.f32 %v1653, %v1655
        %v2420 = vmul.f32 %v1657, %v1659
        %v2421 = vmul.f32 %v1663, %v1665
        %v2422 = vmul.f32 %v1667, %v1669
        %v2423 = vmul.f32 %v1673, %v1675
        %v2424 = vmul.f32 %v1677, %v1679
        %v2425 = vmul.f32 %v1683, %v1685
        %v2426 = vmul.f32 %v1687, %v1689
        %v2427 = vmul.f32 %v1693, %v1695
        %v2428 = vmul.f32 %v1697, %v1699
        %v2429 = vmul.f32 %v1703, %v1705
        %v2430 = vmul.f32 %v1707, %v1709
        %v2431 = vmul.f32 %v1713, %v1715
        %v2432 = vmul.f32 %v1717, %v1719
        %v2433 = vmul.f32 %v1723, %v1725
        %v2434 = vmul.f32 %v1727, %v1729
        %v2435 = vmul.f32 %v1733, %v1735
        %v2436 = vmul.f32 %v1737, %v1739
        %v2437 = vmul.f32 %v1743, %v1745
        %v2438 = vmul.f32 %v1747, %v1749
        %v2439 = vmul.f32 %v1753, %v1755
        %v2440 = vmul.f32 %v1757, %v1759
        %v2441 = vmul.f32 %v1763, %v1765
        %v2442 = vmul.f32 %v1767, %v1769
        %v2443 = vmul.f32 %v1773, %v1775
        %v2444 = vmul.f32 %v1777, %v1779
        %v2445 = vmul.f32 %v1783, %v1785
        %v2446 = vmul.f32 %v1787, %v1789
        %v2447 = vmul.f32 %v1793, %v1795
        %v2448 = vmul.f32 %v1797, %v1799
        %v2449 = vmul.f32 %v1803, %v1805
        %v2450 = vmul.f32 %v1807, %v1809
        %v2451 = vmul.f32 %v1813, %v1815
        %v2452 = vmul.f32 %v1817, %v1819
        %v2453 = vmul.f32 %v1823, %v1825
        %v2454 = vmul.f32 %v1827, %v1829
        %v2455 = vmul.f32 %v1833, %v1835
        %v2456 = vmul.f32 %v1837, %v1839
        %v2457 = vmul.f32 %v1843, %v1845
        %v2458 = vmul.f32 %v1847, %v1849
        %v2459 = vmul.f32 %v1853, %v1855
        %v2460 = vmul.f32 %v1857, %v1859
        %v2461 = vmul.f32 %v1863, %v1865
        %v2462 = vmul.f32 %v1867, %v1869
        %v2463 = vmul.f32 %v1873, %v1875
        %v2464 = vmul.f32 %v1877, %v1879
        %v2465 = vmul.f32 %v1883, %v1885
        %v2466 = vmul.f32 %v1887, %v1889
        %v2467 = vadd.f32 %v2371, %v2403
        %v2468 = vadd.f32 %v2467, %v2435
        %v2469 = vadd.f32 %v2372, %v2404
        %v2470 = vadd.f32 %v2469, %v2436
        %v2471 = vadd.f32 %v2373, %v2405
        %v2472 = vadd.f32 %v2471, %v2437
        %v2473 = vadd.f32 %v2374, %v2406
        %v2474 = vadd.f32 %v2473, %v2438
        %v2475 = vadd.f32 %v2375, %v2407
        %v2476 = vadd.f32 %v2475, %v2439
        %v2477 = vadd.f32 %v2376, %v2408
        %v2478 = vadd.f32 %v2477, %v2440
        %v2479 = vadd.f32 %v2377, %v2409
        %v2480 = vadd.f32 %v2479, %v2441
        %v2481 = vadd.f32 %v2378, %v2410
        %v2482 = vadd.f32 %v2481, %v2442
        %v2483 = vadd.f32 %v2379, %v2411
        %v2484 = vadd.f32 %v2483, %v2443
        %v2485 = vadd.f32 %v2380, %v2412
        %v2486 = vadd.f32 %v2485, %v2444
        %v2487 = vadd.f32 %v2381, %v2413
        %v2488 = vadd.f32 %v2487, %v2445
        %v2489 = vadd.f32 %v2382, %v2414
        %v2490 = vadd.f32 %v2489, %v2446
        %v2491 = vadd.f32 %v2383, %v2415
        %v2492 = vadd.f32 %v2491, %v2447
        %v2493 = vadd.f32 %v2384, %v2416
        %v2494 = vadd.f32 %v2493, %v2448
        %v2495 = vadd.f32 %v2385, %v2417
        %v2496 = vadd.f32 %v2495, %v2449
        %v2497 = vadd.f32 %v2386, %v2418
        %v2498 = vadd.f32 %v2497, %v2450
        %v2499 = vadd.f32 %v2387, %v2419
        %v2500 = vadd.f32 %v2499, %v2451
        %v2501 = vadd.f32 %v2388, %v2420
        %v2502 = vadd.f32 %v2501, %v2452
        %v2503 = vadd.f32 %v2389, %v2421
        %v2504 = vadd.f32 %v2503, %v2453
        %v2505 = vadd.f32 %v2390, %v2422
        %v2506 = vadd.f32 %v2505, %v2454
        %v2507 = vadd.f32 %v2391, %v2423
        %v2508 = vadd.f32 %v2507, %v2455
        %v2509 = vadd.f32 %v2392, %v2424
        %v2510 = vadd.f32 %v2509, %v2456
        %v2511 = vadd.f32 %v2393, %v2425
        %v2512 = vadd.f32 %v2511, %v2457
        %v2513 = vadd.f32 %v2394, %v2426
        %v2514 = vadd.f32 %v2513, %v2458
        %v2515 = vadd.f32 %v2395, %v2427
        %v2516 = vadd.f32 %v2515, %v2459
        %v2517 = vadd.f32 %v2396, %v2428
        %v2518 = vadd.f32 %v2517, %v2460
        %v2519 = vadd.f32 %v2397, %v2429
        %v2520 = vadd.f32 %v2519, %v2461
        %v2521 = vadd.f32 %v2398, %v2430
        %v2522 = vadd.f32 %v2521, %v2462
        %v2523 = vadd.f32 %v2399, %v2431
        %v2524 = vadd.f32 %v2523, %v2463
        %v2525 = vadd.f32 %v2400, %v2432
        %v2526 = vadd.f32 %v2525, %v2464
        %v2527 = vadd.f32 %v2401, %v2433
        %v2528 = vadd.f32 %v2527, %v2465
        %v2529 = vadd.f32 %v2402, %v2434
        %v2530 = vadd.f32 %v2529, %v2466
        %v2531 = vpack.c.bf16 %v1417, %v1413
        %v2532 = vpack.c.bf16 %v1427, %v1423
        %v2533 = vpack.c.bf16 %v1437, %v1433
        %v2534 = vpack.c.bf16 %v1447, %v1443
        %v2535 = vpack.c.bf16 %v1457, %v1453
        %v2536 = vpack.c.bf16 %v1467, %v1463
        %v2537 = vpack.c.bf16 %v1477, %v1473
        %v2538 = vpack.c.bf16 %v1487, %v1483
        %v2539 = vpack.c.bf16 %v1497, %v1493
        %v2540 = vpack.c.bf16 %v1507, %v1503
        %v2541 = vpack.c.bf16 %v1517, %v1513
        %v2542 = vpack.c.bf16 %v1527, %v1523
        %v2543 = vpack.c.bf16 %v1537, %v1533
        %v2544 = vpack.c.bf16 %v1547, %v1543
        %v2545 = vpack.c.bf16 %v1557, %v1553
        %v2546 = vpack.c.bf16 %v1567, %v1563
        %v2547 = vpack.c.bf16 %v1577, %v1573
        %v2548 = vpack.c.bf16 %v1587, %v1583
        %v2549 = vpack.c.bf16 %v1597, %v1593
        %v2550 = vpack.c.bf16 %v1607, %v1603
        %v2551 = vpack.c.bf16 %v1617, %v1613
        %v2552 = vpack.c.bf16 %v1627, %v1623
        %v2553 = vpack.c.bf16 %v1637, %v1633
        %v2554 = vpack.c.bf16 %v1647, %v1643
        %v2555 = vpack.c.bf16 %v1657, %v1653
        %v2556 = vpack.c.bf16 %v1667, %v1663
        %v2557 = vpack.c.bf16 %v1677, %v1673
        %v2558 = vpack.c.bf16 %v1687, %v1683
        %v2559 = vpack.c.bf16 %v1697, %v1693
        %v2560 = vpack.c.bf16 %v1707, %v1703
        %v2561 = vpack.c.bf16 %v1717, %v1713
        %v2562 = vpack.c.bf16 %v1727, %v1723
        %v2563 = vpack.c.bf16 %v1737, %v1733
        %v2564 = vpack.c.bf16 %v1747, %v1743
        %v2565 = vpack.c.bf16 %v1757, %v1753
        %v2566 = vpack.c.bf16 %v1767, %v1763
        %v2567 = vpack.c.bf16 %v1777, %v1773
        %v2568 = vpack.c.bf16 %v1787, %v1783
        %v2569 = vpack.c.bf16 %v1797, %v1793
        %v2570 = vpack.c.bf16 %v1807, %v1803
        %v2571 = vpack.c.bf16 %v1817, %v1813
        %v2572 = vpack.c.bf16 %v1827, %v1823
        %v2573 = vpack.c.bf16 %v1837, %v1833
        %v2574 = vpack.c.bf16 %v1847, %v1843
        %v2575 = vpack.c.bf16 %v1857, %v1853
        %v2576 = vpack.c.bf16 %v1867, %v1863
        %v2577 = vpack.c.bf16 %v1877, %v1873
        %v2578 = vpack.c.bf16 %v1887, %v1883
        %v2579 = vld [vmem:[%s892] sm:$0xf]
        %v2580 = vld [vmem:[%s892 + $0x4] sm:$0xf]
        %v2581 = vld [vmem:[%s892 + $0x8] sm:$0xf]
        %v2582 = vld [vmem:[%s892 + $0xc] sm:$0xf]
        %v2583 = vld [vmem:[%s892 + $0x10] sm:$0xf]
        %v2584 = vld [vmem:[%s892 + $0x14] sm:$0xf]
        %v2585 = vld [vmem:[%s892 + $0x18] sm:$0xf]
        %v2586 = vld [vmem:[%s892 + $0x1c] sm:$0xf]
        %v2587 = vld [vmem:[%s892 + $0x20] sm:$0xf]
        %v2588 = vld [vmem:[%s892 + $0x24] sm:$0xf]
        %v2589 = vld [vmem:[%s892 + $0x28] sm:$0xf]
        %v2590 = vld [vmem:[%s892 + $0x2c] sm:$0xf]
        %v2591 = vld [vmem:[%s892 + $0x30] sm:$0xf]
        %v2592 = vld [vmem:[%s892 + $0x34] sm:$0xf]
        %v2593 = vld [vmem:[%s892 + $0x38] sm:$0xf]
        %v2594 = vld [vmem:[%s892 + $0x3c] sm:$0xf]
        %v2595 = vld [vmem:[%s892 + $0x40] sm:$0xf]
        %v2596 = vld [vmem:[%s892 + $0x44] sm:$0xf]
        %v2597 = vld [vmem:[%s892 + $0x48] sm:$0xf]
        %v2598 = vld [vmem:[%s892 + $0x4c] sm:$0xf]
        %v2599 = vld [vmem:[%s892 + $0x50] sm:$0xf]
        %v2600 = vld [vmem:[%s892 + $0x54] sm:$0xf]
        %v2601 = vld [vmem:[%s892 + $0x58] sm:$0xf]
        %v2602 = vld [vmem:[%s892 + $0x5c] sm:$0xf]
        %v2603 = vld [vmem:[%s892 + $0x60] sm:$0xf]
        %v2604 = vld [vmem:[%s892 + $0x64] sm:$0xf]
        %v2605 = vld [vmem:[%s892 + $0x68] sm:$0xf]
        %v2606 = vld [vmem:[%s892 + $0x6c] sm:$0xf]
        %v2607 = vld [vmem:[%s892 + $0x70] sm:$0xf]
        %v2608 = vld [vmem:[%s892 + $0x74] sm:$0xf]
        %v2609 = vld [vmem:[%s892 + $0x78] sm:$0xf]
        %v2610 = vld [vmem:[%s892 + $0x7c] sm:$0xf]
        %v2611 = vld [vmem:[%s3] sm:$0xf]
        %v2612 = vld [vmem:[%s3 + $0x4] sm:$0xf]
        %v2613 = vld [vmem:[%s3 + $0x8] sm:$0xf]
        %v2614 = vld [vmem:[%s3 + $0xc] sm:$0xf]
        %v2615 = vld [vmem:[%s3 + $0x10] sm:$0xf]
        %v2616 = vld [vmem:[%s3 + $0x14] sm:$0xf]
        %v2617 = vld [vmem:[%s3 + $0x18] sm:$0xf]
        %v2618 = vld [vmem:[%s3 + $0x1c] sm:$0xf]
        %v2619 = vld [vmem:[%s3 + $0x20] sm:$0xf]
        %v2620 = vld [vmem:[%s3 + $0x24] sm:$0xf]
        %v2621 = vld [vmem:[%s3 + $0x28] sm:$0xf]
        %v2622 = vld [vmem:[%s3 + $0x2c] sm:$0xf]
        %v2623 = vld [vmem:[%s3 + $0x30] sm:$0xf]
        %v2624 = vld [vmem:[%s3 + $0x34] sm:$0xf]
        %v2625 = vld [vmem:[%s3 + $0x38] sm:$0xf]
        %v2626 = vld [vmem:[%s3 + $0x3c] sm:$0xf]
        %v2627 = vpack.c.bf16 %v2160, %v2153
        %v2628 = vpack.c.bf16 %v2174, %v2167
        %v2629 = vpack.c.bf16 %v2188, %v2181
        %v2630 = vpack.c.bf16 %v2202, %v2195
        %v2631 = vpack.c.bf16 %v2216, %v2209
        %v2632 = vpack.c.bf16 %v2230, %v2223
        %v2633 = vpack.c.bf16 %v2244, %v2237
        %v2634 = vpack.c.bf16 %v2258, %v2251
        %v2635 = vpack.c.bf16 %v2272, %v2265
        %v2636 = vpack.c.bf16 %v2286, %v2279
        %v2637 = vpack.c.bf16 %v2300, %v2293
        %v2638 = vpack.c.bf16 %v2314, %v2307
        %v2639 = vpack.c.bf16 %v2328, %v2321
        %v2640 = vpack.c.bf16 %v2342, %v2335
        %v2641 = vpack.c.bf16 %v2356, %v2349
        %v2642 = vpack.c.bf16 %v2370, %v2363
        %v2643 = vld [vmem:[%s4] sm:$0xf]
        %v2644 = vld [vmem:[%s4 + $0x4] sm:$0xf]
        %v2645 = vld [vmem:[%s4 + $0x8] sm:$0xf]
        %v2646 = vld [vmem:[%s4 + $0xc] sm:$0xf]
        %v2647 = vld [vmem:[%s4 + $0x10] sm:$0xf]
        %v2648 = vld [vmem:[%s4 + $0x14] sm:$0xf]
        %v2649 = vld [vmem:[%s4 + $0x18] sm:$0xf]
        %v2650 = vld [vmem:[%s4 + $0x1c] sm:$0xf]
        %v2651 = vld [vmem:[%s4 + $0x20] sm:$0xf]
        %v2652 = vld [vmem:[%s4 + $0x24] sm:$0xf]
        %v2653 = vld [vmem:[%s4 + $0x28] sm:$0xf]
        %v2654 = vld [vmem:[%s4 + $0x2c] sm:$0xf]
        %v2655 = vld [vmem:[%s4 + $0x30] sm:$0xf]
        %v2656 = vld [vmem:[%s4 + $0x34] sm:$0xf]
        %v2657 = vld [vmem:[%s4 + $0x38] sm:$0xf]
        %v2658 = vld [vmem:[%s4 + $0x3c] sm:$0xf]
        %v2675 = vunpack.c.l.b16 %v2643
        %v2676 = vunpack.c.l.b16 %v2644
        %v2677 = vunpack.c.l.b16 %v2645
        %v2678 = vunpack.c.l.b16 %v2646
        %v2679 = vunpack.c.l.b16 %v2647
        %v2680 = vunpack.c.l.b16 %v2648
        %v2681 = vunpack.c.l.b16 %v2649
        %v2682 = vunpack.c.l.b16 %v2650
        %v2683 = vunpack.c.l.b16 %v2651
        %v2684 = vunpack.c.l.b16 %v2652
        %v2685 = vunpack.c.l.b16 %v2653
        %v2686 = vunpack.c.l.b16 %v2654
        %v2687 = vunpack.c.l.b16 %v2655
        %v2688 = vunpack.c.l.b16 %v2656
        %v2689 = vunpack.c.l.b16 %v2657
        %v2690 = vunpack.c.l.b16 %v2658
        %v2691 = vpack.c.b16 %v2676, %v2675
        %v2692 = vpack.c.b16 %v2678, %v2677
        %v2693 = vpack.c.b16 %v2680, %v2679
        %v2694 = vpack.c.b16 %v2682, %v2681
        %v2695 = vpack.c.b16 %v2684, %v2683
        %v2696 = vpack.c.b16 %v2686, %v2685
        %v2697 = vpack.c.b16 %v2688, %v2687
        %v2698 = vpack.c.b16 %v2690, %v2689
        %2707 = vmatprep.subr.bf16.mxu0 0
        %2708 = vmatpush1.bf16.msra.mxu0 %v2691
        %2709 = vmatprep.subr.bf16.mxu0 0
        %2710 = vmatpush1.bf16.msra.mxu0 %v2692
        %2711 = vmatprep.subr.bf16.mxu0 0
        %2712 = vmatpush1.bf16.msra.mxu0 %v2693
        %2713 = vmatprep.subr.bf16.mxu0 0
        %2714 = vmatpush1.bf16.msra.mxu0 %v2694
        %2715 = vmatprep.subr.bf16.mxu0 0
        %2716 = vmatpush1.bf16.msra.mxu0 %v2695
        %2717 = vmatprep.subr.bf16.mxu0 0
        %2718 = vmatpush1.bf16.msra.mxu0 %v2696
        %2719 = vmatprep.subr.bf16.mxu0 0
        %2720 = vmatpush1.bf16.msra.mxu0 %v2697
        %2721 = vmatprep.subr.bf16.mxu0 0
        %2722 = vmatpush1.bf16.msra.mxu0 %v2698
        %2723 = vmatprep.subr.bf16.mxu0 0
        %2724 = vmatpush1.bf16.msra.mxu0 0
        %2725 = vmatprep.subr.bf16.mxu0 0
        %2726 = vmatpush1.bf16.msra.mxu0 0
        %2727 = vmatprep.subr.bf16.mxu0 0
        %2728 = vmatpush1.bf16.msra.mxu0 0
        %2729 = vmatprep.subr.bf16.mxu0 0
        %2730 = vmatpush1.bf16.msra.mxu0 0
        %2731 = vmatprep.subr.bf16.mxu0 0
        %2732 = vmatpush1.bf16.msra.mxu0 0
        %2733 = vmatprep.subr.bf16.mxu0 0
        %2734 = vmatpush1.bf16.msra.mxu0 0
        %2735 = vmatprep.subr.bf16.mxu0 0
        %2736 = vmatpush1.bf16.msra.mxu0 0
        %2737 = vmatprep.subr.bf16.mxu0 0
        %2738 = vmatpush1.bf16.msra.mxu0 0
        %2739 = vmatprep.mubr.bf16.mxu0 0
        %2740 = vmatmul.mubr.bf16.gmra.mrb[0].mxu0 %v2627
        %v2741 = vpop.f32.mrb[0].mxu0
        %v2742 = vadd.f32 0.0, %v2741
        %v2743 = vpop.f32.mrb[0].mxu0
        %v2744 = vpop.f32.mrb[0].mxu0
        %v2745 = vadd.f32 0.0, %v2744
        %v2746 = vpop.f32.mrb[0].mxu0
        %2747 = vmatprep.mubr.bf16.mxu0 0
        %2748 = vmatmul.mubr.bf16.gmra.mrb[0].mxu0 %v2628
        %v2749 = vpop.f32.mrb[0].mxu0
        %v2750 = vadd.f32 0.0, %v2749
        %v2751 = vpop.f32.mrb[0].mxu0
        %v2752 = vpop.f32.mrb[0].mxu0
        %v2753 = vadd.f32 0.0, %v2752
        %v2754 = vpop.f32.mrb[0].mxu0
        %2755 = vmatprep.mubr.bf16.mxu0 0
        %2756 = vmatmul.mubr.bf16.gmra.mrb[0].mxu0 %v2629
        %v2757 = vpop.f32.mrb[0].mxu0
        %v2758 = vadd.f32 0.0, %v2757
        %v2759 = vpop.f32.mrb[0].mxu0
        %v2760 = vpop.f32.mrb[0].mxu0
        %v2761 = vadd.f32 0.0, %v2760
        %v2762 = vpop.f32.mrb[0].mxu0
        %2763 = vmatprep.mubr.bf16.mxu0 0
        %2764 = vmatmul.mubr.bf16.gmra.mrb[0].mxu0 %v2630
        %v2765 = vpop.f32.mrb[0].mxu0
        %v2766 = vadd.f32 0.0, %v2765
        %v2767 = vpop.f32.mrb[0].mxu0
        %v2768 = vpop.f32.mrb[0].mxu0
        %v2769 = vadd.f32 0.0, %v2768
        %v2770 = vpop.f32.mrb[0].mxu0
        %2771 = vmatprep.mubr.bf16.mxu0 0
        %2772 = vmatmul.mubr.bf16.gmra.mrb[0].mxu0 %v2631
        %v2773 = vpop.f32.mrb[0].mxu0
        %v2774 = vadd.f32 0.0, %v2773
        %v2775 = vpop.f32.mrb[0].mxu0
        %v2776 = vpop.f32.mrb[0].mxu0
        %v2777 = vadd.f32 0.0, %v2776
        %v2778 = vpop.f32.mrb[0].mxu0
        %2779 = vmatprep.mubr.bf16.mxu0 0
        %2780 = vmatmul.mubr.bf16.gmra.mrb[0].mxu0 %v2632
        %v2781 = vpop.f32.mrb[0].mxu0
        %v2782 = vadd.f32 0.0, %v2781
        %v2783 = vpop.f32.mrb[0].mxu0
        %v2784 = vpop.f32.mrb[0].mxu0
        %v2785 = vadd.f32 0.0, %v2784
        %v2786 = vpop.f32.mrb[0].mxu0
        %2787 = vmatprep.mubr.bf16.mxu0 0
        %2788 = vmatmul.mubr.bf16.gmra.mrb[0].mxu0 %v2633
        %v2789 = vpop.f32.mrb[0].mxu0
        %v2790 = vadd.f32 0.0, %v2789
        %v2791 = vpop.f32.mrb[0].mxu0
        %v2792 = vpop.f32.mrb[0].mxu0
        %v2793 = vadd.f32 0.0, %v2792
        %v2794 = vpop.f32.mrb[0].mxu0
        %2795 = vmatprep.mubr.bf16.mxu0 0
        %2796 = vmatmul.mubr.bf16.gmra.mrb[0].mxu0 %v2634
        %v2797 = vpop.f32.mrb[0].mxu0
        %v2798 = vadd.f32 0.0, %v2797
        %v2799 = vpop.f32.mrb[0].mxu0
        %v2800 = vpop.f32.mrb[0].mxu0
        %v2801 = vadd.f32 0.0, %v2800
        %v2802 = vpop.f32.mrb[0].mxu0
        %2803 = vmatprep.mubr.bf16.mxu0 0
        %2804 = vmatmul.mubr.bf16.gmra.mrb[0].mxu0 %v2635
        %v2805 = vpop.f32.mrb[0].mxu0
        %v2806 = vadd.f32 0.0, %v2805
        %v2807 = vpop.f32.mrb[0].mxu0
        %v2808 = vpop.f32.mrb[0].mxu0
        %v2809 = vadd.f32 0.0, %v2808
        %v2810 = vpop.f32.mrb[0].mxu0
        %2811 = vmatprep.mubr.bf16.mxu0 0
        %2812 = vmatmul.mubr.bf16.gmra.mrb[0].mxu0 %v2636
        %v2813 = vpop.f32.mrb[0].mxu0
        %v2814 = vadd.f32 0.0, %v2813
        %v2815 = vpop.f32.mrb[0].mxu0
        %v2816 = vpop.f32.mrb[0].mxu0
        %v2817 = vadd.f32 0.0, %v2816
        %v2818 = vpop.f32.mrb[0].mxu0
        %2819 = vmatprep.mubr.bf16.mxu0 0
        %2820 = vmatmul.mubr.bf16.gmra.mrb[0].mxu0 %v2637
        %v2821 = vpop.f32.mrb[0].mxu0
        %v2822 = vadd.f32 0.0, %v2821
        %v2823 = vpop.f32.mrb[0].mxu0
        %v2824 = vpop.f32.mrb[0].mxu0
        %v2825 = vadd.f32 0.0, %v2824
        %v2826 = vpop.f32.mrb[0].mxu0
        %2827 = vmatprep.mubr.bf16.mxu0 0
        %2828 = vmatmul.mubr.bf16.gmra.mrb[0].mxu0 %v2638
        %v2829 = vpop.f32.mrb[0].mxu0
        %v2830 = vadd.f32 0.0, %v2829
        %v2831 = vpop.f32.mrb[0].mxu0
        %v2832 = vpop.f32.mrb[0].mxu0
        %v2833 = vadd.f32 0.0, %v2832
        %v2834 = vpop.f32.mrb[0].mxu0
        %2835 = vmatprep.mubr.bf16.mxu0 0
        %2836 = vmatmul.mubr.bf16.gmra.mrb[0].mxu0 %v2639
        %v2837 = vpop.f32.mrb[0].mxu0
        %v2838 = vadd.f32 0.0, %v2837
        %v2839 = vpop.f32.mrb[0].mxu0
        %v2840 = vpop.f32.mrb[0].mxu0
        %v2841 = vadd.f32 0.0, %v2840
        %v2842 = vpop.f32.mrb[0].mxu0
        %2843 = vmatprep.mubr.bf16.mxu0 0
        %2844 = vmatmul.mubr.bf16.gmra.mrb[0].mxu0 %v2640
        %v2845 = vpop.f32.mrb[0].mxu0
        %v2846 = vadd.f32 0.0, %v2845
        %v2847 = vpop.f32.mrb[0].mxu0
        %v2848 = vpop.f32.mrb[0].mxu0
        %v2849 = vadd.f32 0.0, %v2848
        %v2850 = vpop.f32.mrb[0].mxu0
        %2851 = vmatprep.mubr.bf16.mxu0 0
        %2852 = vmatmul.mubr.bf16.gmra.mrb[0].mxu0 %v2641
        %v2853 = vpop.f32.mrb[0].mxu0
        %v2854 = vadd.f32 0.0, %v2853
        %v2855 = vpop.f32.mrb[0].mxu0
        %v2856 = vpop.f32.mrb[0].mxu0
        %v2857 = vadd.f32 0.0, %v2856
        %v2858 = vpop.f32.mrb[0].mxu0
        %2859 = vmatprep.mubr.bf16.mxu0 0
        %2860 = vmatmul.mubr.bf16.gmra.mrb[0].mxu0 %v2642
        %v2861 = vpop.f32.mrb[0].mxu0
        %v2862 = vadd.f32 0.0, %v2861
        %v2863 = vpop.f32.mrb[0].mxu0
        %v2864 = vpop.f32.mrb[0].mxu0
        %v2865 = vadd.f32 0.0, %v2864
        %v2866 = vpop.f32.mrb[0].mxu0
        %2867 = vdwg.mxu0
        %v2900 = vunpack.c.l.b16 %v2579
        %v2901 = vunpack.c.l.b16 %v2580
        %v2902 = vunpack.c.l.b16 %v2581
        %v2903 = vunpack.c.l.b16 %v2582
        %v2904 = vunpack.c.l.b16 %v2583
        %v2905 = vunpack.c.l.b16 %v2584
        %v2906 = vunpack.c.l.b16 %v2585
        %v2907 = vunpack.c.l.b16 %v2586
        %v2908 = vunpack.c.l.b16 %v2587
        %v2909 = vunpack.c.l.b16 %v2588
        %v2910 = vunpack.c.l.b16 %v2589
        %v2911 = vunpack.c.l.b16 %v2590
        %v2912 = vunpack.c.l.b16 %v2591
        %v2913 = vunpack.c.l.b16 %v2592
        %v2914 = vunpack.c.l.b16 %v2593
        %v2915 = vunpack.c.l.b16 %v2594
        %v2916 = vunpack.c.l.b16 %v2595
        %v2917 = vunpack.c.l.b16 %v2596
        %v2918 = vunpack.c.l.b16 %v2597
        %v2919 = vunpack.c.l.b16 %v2598
        %v2920 = vunpack.c.l.b16 %v2599
        %v2921 = vunpack.c.l.b16 %v2600
        %v2922 = vunpack.c.l.b16 %v2601
        %v2923 = vunpack.c.l.b16 %v2602
        %v2924 = vunpack.c.l.b16 %v2603
        %v2925 = vunpack.c.l.b16 %v2604
        %v2926 = vunpack.c.l.b16 %v2605
        %v2927 = vunpack.c.l.b16 %v2606
        %v2928 = vunpack.c.l.b16 %v2607
        %v2929 = vunpack.c.l.b16 %v2608
        %v2930 = vunpack.c.l.b16 %v2609
        %v2931 = vunpack.c.l.b16 %v2610
        %v2932 = vpack.c.b16 %v2901, %v2900
        %v2933 = vpack.c.b16 %v2903, %v2902
        %v2934 = vpack.c.b16 %v2905, %v2904
        %v2935 = vpack.c.b16 %v2907, %v2906
        %v2936 = vpack.c.b16 %v2909, %v2908
        %v2937 = vpack.c.b16 %v2911, %v2910
        %v2938 = vpack.c.b16 %v2913, %v2912
        %v2939 = vpack.c.b16 %v2915, %v2914
        %v2940 = vpack.c.b16 %v2917, %v2916
        %v2941 = vpack.c.b16 %v2919, %v2918
        %v2942 = vpack.c.b16 %v2921, %v2920
        %v2943 = vpack.c.b16 %v2923, %v2922
        %v2944 = vpack.c.b16 %v2925, %v2924
        %v2945 = vpack.c.b16 %v2927, %v2926
        %v2946 = vpack.c.b16 %v2929, %v2928
        %v2947 = vpack.c.b16 %v2931, %v2930
        %v2980 = vunpack.c.l.b16 %v2611
        %v2981 = vunpack.c.l.b16 %v2612
        %v2982 = vunpack.c.l.b16 %v2613
        %v2983 = vunpack.c.l.b16 %v2614
        %v2984 = vunpack.c.l.b16 %v2615
        %v2985 = vunpack.c.l.b16 %v2616
        %v2986 = vunpack.c.l.b16 %v2617
        %v2987 = vunpack.c.l.b16 %v2618
        %v2988 = vunpack.c.l.b16 %v2619
        %v2989 = vunpack.c.l.b16 %v2620
        %v2990 = vunpack.c.l.b16 %v2621
        %v2991 = vunpack.c.l.b16 %v2622
        %v2992 = vunpack.c.l.b16 %v2623
        %v2993 = vunpack.c.l.b16 %v2624
        %v2994 = vunpack.c.l.b16 %v2625
        %v2995 = vunpack.c.l.b16 %v2626
        %v2996 = vpack.c.b16 %v2981, %v2980
        %v2997 = vpack.c.b16 %v2983, %v2982
        %v2998 = vpack.c.b16 %v2985, %v2984
        %v2999 = vpack.c.b16 %v2987, %v2986
        %v3000 = vpack.c.b16 %v2989, %v2988
        %v3001 = vpack.c.b16 %v2991, %v2990
        %v3002 = vpack.c.b16 %v2993, %v2992
        %v3003 = vpack.c.b16 %v2995, %v2994
        %3012 = vmatprep.subr.bf16.mxu0 0
        %3013 = vmatpush1.bf16.msra.mxu0 %v2996
        %3014 = vmatprep.subr.bf16.mxu0 0
        %3015 = vmatpush1.bf16.msra.mxu0 %v2997
        %3016 = vmatprep.subr.bf16.mxu0 0
        %3017 = vmatpush1.bf16.msra.mxu0 %v2998
        %3018 = vmatprep.subr.bf16.mxu0 0
        %3019 = vmatpush1.bf16.msra.mxu0 %v2999
        %3020 = vmatprep.subr.bf16.mxu0 0
        %3021 = vmatpush1.bf16.msra.mxu0 %v3000
        %3022 = vmatprep.subr.bf16.mxu0 0
        %3023 = vmatpush1.bf16.msra.mxu0 %v3001
        %3024 = vmatprep.subr.bf16.mxu0 0
        %3025 = vmatpush1.bf16.msra.mxu0 %v3002
        %3026 = vmatprep.subr.bf16.mxu0 0
        %3027 = vmatpush1.bf16.msra.mxu0 %v3003
        %3028 = vmatprep.subr.bf16.mxu0 0
        %3029 = vmatpush1.bf16.msra.mxu0 0
        %3030 = vmatprep.subr.bf16.mxu0 0
        %3031 = vmatpush1.bf16.msra.mxu0 0
        %3032 = vmatprep.subr.bf16.mxu0 0
        %3033 = vmatpush1.bf16.msra.mxu0 0
        %3034 = vmatprep.subr.bf16.mxu0 0
        %3035 = vmatpush1.bf16.msra.mxu0 0
        %3036 = vmatprep.subr.bf16.mxu0 0
        %3037 = vmatpush1.bf16.msra.mxu0 0
        %3038 = vmatprep.subr.bf16.mxu0 0
        %3039 = vmatpush1.bf16.msra.mxu0 0
        %3040 = vmatprep.subr.bf16.mxu0 0
        %3041 = vmatpush1.bf16.msra.mxu0 0
        %3042 = vmatprep.subr.bf16.mxu0 0
        %3043 = vmatpush1.bf16.msra.mxu0 0
        %3044 = vmatprep.mubr.bf16.mxu0 0
        %3045 = vmatmul.mubr.bf16.gmra.mrb[0].mxu0 %v2932
        %v3046 = vpop.f32.mrb[0].mxu0
        %v3047 = vadd.f32 %v2742, %v3046
        %v3048 = vpop.f32.mrb[0].mxu0
        %v3049 = vpop.f32.mrb[0].mxu0
        %v3050 = vadd.f32 %v2745, %v3049
        %v3051 = vpop.f32.mrb[0].mxu0
        %3052 = vmatprep.mubr.bf16.mxu0 0
        %3053 = vmatmul.mubr.bf16.gmra.mrb[0].mxu0 %v2933
        %v3054 = vpop.f32.mrb[0].mxu0
        %v3055 = vadd.f32 %v2750, %v3054
        %v3056 = vpop.f32.mrb[0].mxu0
        %v3057 = vpop.f32.mrb[0].mxu0
        %v3058 = vadd.f32 %v2753, %v3057
        %v3059 = vpop.f32.mrb[0].mxu0
        %3060 = vmatprep.mubr.bf16.mxu0 0
        %3061 = vmatmul.mubr.bf16.gmra.mrb[0].mxu0 %v2934
        %v3062 = vpop.f32.mrb[0].mxu0
        %v3063 = vadd.f32 %v2758, %v3062
        %v3064 = vpop.f32.mrb[0].mxu0
        %v3065 = vpop.f32.mrb[0].mxu0
        %v3066 = vadd.f32 %v2761, %v3065
        %v3067 = vpop.f32.mrb[0].mxu0
        %3068 = vmatprep.mubr.bf16.mxu0 0
        %3069 = vmatmul.mubr.bf16.gmra.mrb[0].mxu0 %v2935
        %v3070 = vpop.f32.mrb[0].mxu0
        %v3071 = vadd.f32 %v2766, %v3070
        %v3072 = vpop.f32.mrb[0].mxu0
        %v3073 = vpop.f32.mrb[0].mxu0
        %v3074 = vadd.f32 %v2769, %v3073
        %v3075 = vpop.f32.mrb[0].mxu0
        %3076 = vmatprep.mubr.bf16.mxu0 0
        %3077 = vmatmul.mubr.bf16.gmra.mrb[0].mxu0 %v2936
        %v3078 = vpop.f32.mrb[0].mxu0
        %v3079 = vadd.f32 %v2774, %v3078
        %v3080 = vpop.f32.mrb[0].mxu0
        %v3081 = vpop.f32.mrb[0].mxu0
        %v3082 = vadd.f32 %v2777, %v3081
        %v3083 = vpop.f32.mrb[0].mxu0
        %3084 = vmatprep.mubr.bf16.mxu0 0
        %3085 = vmatmul.mubr.bf16.gmra.mrb[0].mxu0 %v2937
        %v3086 = vpop.f32.mrb[0].mxu0
        %v3087 = vadd.f32 %v2782, %v3086
        %v3088 = vpop.f32.mrb[0].mxu0
        %v3089 = vpop.f32.mrb[0].mxu0
        %v3090 = vadd.f32 %v2785, %v3089
        %v3091 = vpop.f32.mrb[0].mxu0
        %3092 = vmatprep.mubr.bf16.mxu0 0
        %3093 = vmatmul.mubr.bf16.gmra.mrb[0].mxu0 %v2938
        %v3094 = vpop.f32.mrb[0].mxu0
        %v3095 = vadd.f32 %v2790, %v3094
        %v3096 = vpop.f32.mrb[0].mxu0
        %v3097 = vpop.f32.mrb[0].mxu0
        %v3098 = vadd.f32 %v2793, %v3097
        %v3099 = vpop.f32.mrb[0].mxu0
        %3100 = vmatprep.mubr.bf16.mxu0 0
        %3101 = vmatmul.mubr.bf16.gmra.mrb[0].mxu0 %v2939
        %v3102 = vpop.f32.mrb[0].mxu0
        %v3103 = vadd.f32 %v2798, %v3102
        %v3104 = vpop.f32.mrb[0].mxu0
        %v3105 = vpop.f32.mrb[0].mxu0
        %v3106 = vadd.f32 %v2801, %v3105
        %v3107 = vpop.f32.mrb[0].mxu0
        %3108 = vmatprep.mubr.bf16.mxu0 0
        %3109 = vmatmul.mubr.bf16.gmra.mrb[0].mxu0 %v2940
        %v3110 = vpop.f32.mrb[0].mxu0
        %v3111 = vadd.f32 %v2806, %v3110
        %v3112 = vpop.f32.mrb[0].mxu0
        %v3113 = vpop.f32.mrb[0].mxu0
        %v3114 = vadd.f32 %v2809, %v3113
        %v3115 = vpop.f32.mrb[0].mxu0
        %3116 = vmatprep.mubr.bf16.mxu0 0
        %3117 = vmatmul.mubr.bf16.gmra.mrb[0].mxu0 %v2941
        %v3118 = vpop.f32.mrb[0].mxu0
        %v3119 = vadd.f32 %v2814, %v3118
        %v3120 = vpop.f32.mrb[0].mxu0
        %v3121 = vpop.f32.mrb[0].mxu0
        %v3122 = vadd.f32 %v2817, %v3121
        %v3123 = vpop.f32.mrb[0].mxu0
        %3124 = vmatprep.mubr.bf16.mxu0 0
        %3125 = vmatmul.mubr.bf16.gmra.mrb[0].mxu0 %v2942
        %v3126 = vpop.f32.mrb[0].mxu0
        %v3127 = vadd.f32 %v2822, %v3126
        %v3128 = vpop.f32.mrb[0].mxu0
        %v3129 = vpop.f32.mrb[0].mxu0
        %v3130 = vadd.f32 %v2825, %v3129
        %v3131 = vpop.f32.mrb[0].mxu0
        %3132 = vmatprep.mubr.bf16.mxu0 0
        %3133 = vmatmul.mubr.bf16.gmra.mrb[0].mxu0 %v2943
        %v3134 = vpop.f32.mrb[0].mxu0
        %v3135 = vadd.f32 %v2830, %v3134
        %v3136 = vpop.f32.mrb[0].mxu0
        %v3137 = vpop.f32.mrb[0].mxu0
        %v3138 = vadd.f32 %v2833, %v3137
        %v3139 = vpop.f32.mrb[0].mxu0
        %3140 = vmatprep.mubr.bf16.mxu0 0
        %3141 = vmatmul.mubr.bf16.gmra.mrb[0].mxu0 %v2944
        %v3142 = vpop.f32.mrb[0].mxu0
        %v3143 = vadd.f32 %v2838, %v3142
        %v3144 = vpop.f32.mrb[0].mxu0
        %v3145 = vpop.f32.mrb[0].mxu0
        %v3146 = vadd.f32 %v2841, %v3145
        %v3147 = vpop.f32.mrb[0].mxu0
        %3148 = vmatprep.mubr.bf16.mxu0 0
        %3149 = vmatmul.mubr.bf16.gmra.mrb[0].mxu0 %v2945
        %v3150 = vpop.f32.mrb[0].mxu0
        %v3151 = vadd.f32 %v2846, %v3150
        %v3152 = vpop.f32.mrb[0].mxu0
        %v3153 = vpop.f32.mrb[0].mxu0
        %v3154 = vadd.f32 %v2849, %v3153
        %v3155 = vpop.f32.mrb[0].mxu0
        %3156 = vmatprep.mubr.bf16.mxu0 0
        %3157 = vmatmul.mubr.bf16.gmra.mrb[0].mxu0 %v2946
        %v3158 = vpop.f32.mrb[0].mxu0
        %v3159 = vadd.f32 %v2854, %v3158
        %v3160 = vpop.f32.mrb[0].mxu0
        %v3161 = vpop.f32.mrb[0].mxu0
        %v3162 = vadd.f32 %v2857, %v3161
        %v3163 = vpop.f32.mrb[0].mxu0
        %3164 = vmatprep.mubr.bf16.mxu0 0
        %3165 = vmatmul.mubr.bf16.gmra.mrb[0].mxu0 %v2947
        %v3166 = vpop.f32.mrb[0].mxu0
        %v3167 = vadd.f32 %v2862, %v3166
        %v3168 = vpop.f32.mrb[0].mxu0
        %v3169 = vpop.f32.mrb[0].mxu0
        %v3170 = vadd.f32 %v2865, %v3169
        %v3171 = vpop.f32.mrb[0].mxu0
        %3172 = vdwg.mxu0
        %v3173 = vld [vmem:[%s5] sm:$0x1]
        %v3175 = vlaneseq
        %v3176 = vshrl.u32 %v3175, 7
        %v3177 = vsub.s32 0, %v3176
        %v3178 = vrot.slane %v3173, %v3177
        %v3180 = vadd.f32 %v3047, %v3178
        %v3181 = vadd.f32 %v3050, %v3178
        %v3182 = vadd.f32 %v3055, %v3178
        %v3183 = vadd.f32 %v3058, %v3178
        %v3184 = vadd.f32 %v3063, %v3178
        %v3185 = vadd.f32 %v3066, %v3178
        %v3186 = vadd.f32 %v3071, %v3178
        %v3187 = vadd.f32 %v3074, %v3178
        %v3188 = vadd.f32 %v3079, %v3178
        %v3189 = vadd.f32 %v3082, %v3178
        %v3190 = vadd.f32 %v3087, %v3178
        %v3191 = vadd.f32 %v3090, %v3178
        %v3192 = vadd.f32 %v3095, %v3178
        %v3193 = vadd.f32 %v3098, %v3178
        %v3194 = vadd.f32 %v3103, %v3178
        %v3195 = vadd.f32 %v3106, %v3178
        %v3196 = vadd.f32 %v3111, %v3178
        %v3197 = vadd.f32 %v3114, %v3178
        %v3198 = vadd.f32 %v3119, %v3178
        %v3199 = vadd.f32 %v3122, %v3178
        %v3200 = vadd.f32 %v3127, %v3178
        %v3201 = vadd.f32 %v3130, %v3178
        %v3202 = vadd.f32 %v3135, %v3178
        %v3203 = vadd.f32 %v3138, %v3178
        %v3204 = vadd.f32 %v3143, %v3178
        %v3205 = vadd.f32 %v3146, %v3178
        %v3206 = vadd.f32 %v3151, %v3178
        %v3207 = vadd.f32 %v3154, %v3178
        %v3208 = vadd.f32 %v3159, %v3178
        %v3209 = vadd.f32 %v3162, %v3178
        %v3210 = vadd.f32 %v3167, %v3178
        %v3211 = vadd.f32 %v3170, %v3178
        %v3212 = vxor.u32 %v3180, 2147483648
        %v3213 = vxor.u32 %v3181, 2147483648
        %v3214 = vxor.u32 %v3182, 2147483648
        %v3215 = vxor.u32 %v3183, 2147483648
        %v3216 = vxor.u32 %v3184, 2147483648
        %v3217 = vxor.u32 %v3185, 2147483648
        %v3218 = vxor.u32 %v3186, 2147483648
        %v3219 = vxor.u32 %v3187, 2147483648
        %v3220 = vxor.u32 %v3188, 2147483648
        %v3221 = vxor.u32 %v3189, 2147483648
        %v3222 = vxor.u32 %v3190, 2147483648
        %v3223 = vxor.u32 %v3191, 2147483648
        %v3224 = vxor.u32 %v3192, 2147483648
        %v3225 = vxor.u32 %v3193, 2147483648
        %v3226 = vxor.u32 %v3194, 2147483648
        %v3227 = vxor.u32 %v3195, 2147483648
        %v3228 = vxor.u32 %v3196, 2147483648
        %v3229 = vxor.u32 %v3197, 2147483648
        %v3230 = vxor.u32 %v3198, 2147483648
        %v3231 = vxor.u32 %v3199, 2147483648
        %v3232 = vxor.u32 %v3200, 2147483648
        %v3233 = vxor.u32 %v3201, 2147483648
        %v3234 = vxor.u32 %v3202, 2147483648
        %v3235 = vxor.u32 %v3203, 2147483648
        %v3236 = vxor.u32 %v3204, 2147483648
        %v3237 = vxor.u32 %v3205, 2147483648
        %v3238 = vxor.u32 %v3206, 2147483648
        %v3239 = vxor.u32 %v3207, 2147483648
        %v3240 = vxor.u32 %v3208, 2147483648
        %v3241 = vxor.u32 %v3209, 2147483648
        %v3242 = vxor.u32 %v3210, 2147483648
        %v3243 = vxor.u32 %v3211, 2147483648
        %v3244 = vmul.f32 %v3212, 1.442695
        %v3245 = vpow.pop %v3244
        %v3246 = vmul.f32 %v3213, 1.442695
        %v3247 = vpow.pop %v3246
        %v3248 = vmul.f32 %v3214, 1.442695
        %v3249 = vpow.pop %v3248
        %v3250 = vmul.f32 %v3215, 1.442695
        %v3251 = vpow.pop %v3250
        %v3252 = vmul.f32 %v3216, 1.442695
        %v3253 = vpow.pop %v3252
        %v3254 = vmul.f32 %v3217, 1.442695
        %v3255 = vpow.pop %v3254
        %v3256 = vmul.f32 %v3218, 1.442695
        %v3257 = vpow.pop %v3256
        %v3258 = vmul.f32 %v3219, 1.442695
        %v3259 = vpow.pop %v3258
        %v3260 = vmul.f32 %v3220, 1.442695
        %v3261 = vpow.pop %v3260
        %v3262 = vmul.f32 %v3221, 1.442695
        %v3263 = vpow.pop %v3262
        %v3264 = vmul.f32 %v3222, 1.442695
        %v3265 = vpow.pop %v3264
        %v3266 = vmul.f32 %v3223, 1.442695
        %v3267 = vpow.pop %v3266
        %v3268 = vmul.f32 %v3224, 1.442695
        %v3269 = vpow.pop %v3268
        %v3270 = vmul.f32 %v3225, 1.442695
        %v3271 = vpow.pop %v3270
        %v3272 = vmul.f32 %v3226, 1.442695
        %v3273 = vpow.pop %v3272
        %v3274 = vmul.f32 %v3227, 1.442695
        %v3275 = vpow.pop %v3274
        %v3276 = vmul.f32 %v3228, 1.442695
        %v3277 = vpow.pop %v3276
        %v3278 = vmul.f32 %v3229, 1.442695
        %v3279 = vpow.pop %v3278
        %v3280 = vmul.f32 %v3230, 1.442695
        %v3281 = vpow.pop %v3280
        %v3282 = vmul.f32 %v3231, 1.442695
        %v3283 = vpow.pop %v3282
        %v3284 = vmul.f32 %v3232, 1.442695
        %v3285 = vpow.pop %v3284
        %v3286 = vmul.f32 %v3233, 1.442695
        %v3287 = vpow.pop %v3286
        %v3288 = vmul.f32 %v3234, 1.442695
        %v3289 = vpow.pop %v3288
        %v3290 = vmul.f32 %v3235, 1.442695
        %v3291 = vpow.pop %v3290
        %v3292 = vmul.f32 %v3236, 1.442695
        %v3293 = vpow.pop %v3292
        %v3294 = vmul.f32 %v3237, 1.442695
        %v3295 = vpow.pop %v3294
        %v3296 = vmul.f32 %v3238, 1.442695
        %v3297 = vpow.pop %v3296
        %v3298 = vmul.f32 %v3239, 1.442695
        %v3299 = vpow.pop %v3298
        %v3300 = vmul.f32 %v3240, 1.442695
        %v3301 = vpow.pop %v3300
        %v3302 = vmul.f32 %v3241, 1.442695
        %v3303 = vpow.pop %v3302
        %v3304 = vmul.f32 %v3242, 1.442695
        %v3305 = vpow.pop %v3304
        %v3306 = vmul.f32 %v3243, 1.442695
        %v3307 = vpow.pop %v3306
        %v3308 = vadd.f32 %v3245, 1.0
        %v3309 = vadd.f32 %v3247, 1.0
        %v3310 = vadd.f32 %v3249, 1.0
        %v3311 = vadd.f32 %v3251, 1.0
        %v3312 = vadd.f32 %v3253, 1.0
        %v3313 = vadd.f32 %v3255, 1.0
        %v3314 = vadd.f32 %v3257, 1.0
        %v3315 = vadd.f32 %v3259, 1.0
        %v3316 = vadd.f32 %v3261, 1.0
        %v3317 = vadd.f32 %v3263, 1.0
        %v3318 = vadd.f32 %v3265, 1.0
        %v3319 = vadd.f32 %v3267, 1.0
        %v3320 = vadd.f32 %v3269, 1.0
        %v3321 = vadd.f32 %v3271, 1.0
        %v3322 = vadd.f32 %v3273, 1.0
        %v3323 = vadd.f32 %v3275, 1.0
        %v3324 = vadd.f32 %v3277, 1.0
        %v3325 = vadd.f32 %v3279, 1.0
        %v3326 = vadd.f32 %v3281, 1.0
        %v3327 = vadd.f32 %v3283, 1.0
        %v3328 = vadd.f32 %v3285, 1.0
        %v3329 = vadd.f32 %v3287, 1.0
        %v3330 = vadd.f32 %v3289, 1.0
        %v3331 = vadd.f32 %v3291, 1.0
        %v3332 = vadd.f32 %v3293, 1.0
        %v3333 = vadd.f32 %v3295, 1.0
        %v3334 = vadd.f32 %v3297, 1.0
        %v3335 = vadd.f32 %v3299, 1.0
        %v3336 = vadd.f32 %v3301, 1.0
        %v3337 = vadd.f32 %v3303, 1.0
        %v3338 = vadd.f32 %v3305, 1.0
        %v3339 = vadd.f32 %v3307, 1.0
        %v3340 = vrcp.pop %v3308
        %v3341 = vmul.f32 1.0, %v3340
        %v3342 = vrcp.pop %v3309
        %v3343 = vmul.f32 1.0, %v3342
        %v3344 = vrcp.pop %v3310
        %v3345 = vmul.f32 1.0, %v3344
        %v3346 = vrcp.pop %v3311
        %v3347 = vmul.f32 1.0, %v3346
        %v3348 = vrcp.pop %v3312
        %v3349 = vmul.f32 1.0, %v3348
        %v3350 = vrcp.pop %v3313
        %v3351 = vmul.f32 1.0, %v3350
        %v3352 = vrcp.pop %v3314
        %v3353 = vmul.f32 1.0, %v3352
        %v3354 = vrcp.pop %v3315
        %v3355 = vmul.f32 1.0, %v3354
        %v3356 = vrcp.pop %v3316
        %v3357 = vmul.f32 1.0, %v3356
        %v3358 = vrcp.pop %v3317
        %v3359 = vmul.f32 1.0, %v3358
        %v3360 = vrcp.pop %v3318
        %v3361 = vmul.f32 1.0, %v3360
        %v3362 = vrcp.pop %v3319
        %v3363 = vmul.f32 1.0, %v3362
        %v3364 = vrcp.pop %v3320
        %v3365 = vmul.f32 1.0, %v3364
        %v3366 = vrcp.pop %v3321
        %v3367 = vmul.f32 1.0, %v3366
        %v3368 = vrcp.pop %v3322
        %v3369 = vmul.f32 1.0, %v3368
        %v3370 = vrcp.pop %v3323
        %v3371 = vmul.f32 1.0, %v3370
        %v3372 = vrcp.pop %v3324
        %v3373 = vmul.f32 1.0, %v3372
        %v3374 = vrcp.pop %v3325
        %v3375 = vmul.f32 1.0, %v3374
        %v3376 = vrcp.pop %v3326
        %v3377 = vmul.f32 1.0, %v3376
        %v3378 = vrcp.pop %v3327
        %v3379 = vmul.f32 1.0, %v3378
        %v3380 = vrcp.pop %v3328
        %v3381 = vmul.f32 1.0, %v3380
        %v3382 = vrcp.pop %v3329
        %v3383 = vmul.f32 1.0, %v3382
        %v3384 = vrcp.pop %v3330
        %v3385 = vmul.f32 1.0, %v3384
        %v3386 = vrcp.pop %v3331
        %v3387 = vmul.f32 1.0, %v3386
        %v3388 = vrcp.pop %v3332
        %v3389 = vmul.f32 1.0, %v3388
        %v3390 = vrcp.pop %v3333
        %v3391 = vmul.f32 1.0, %v3390
        %v3392 = vrcp.pop %v3334
        %v3393 = vmul.f32 1.0, %v3392
        %v3394 = vrcp.pop %v3335
        %v3395 = vmul.f32 1.0, %v3394
        %v3396 = vrcp.pop %v3336
        %v3397 = vmul.f32 1.0, %v3396
        %v3398 = vrcp.pop %v3337
        %v3399 = vmul.f32 1.0, %v3398
        %v3400 = vrcp.pop %v3338
        %v3401 = vmul.f32 1.0, %v3400
        %v3402 = vrcp.pop %v3339
        %v3403 = vmul.f32 1.0, %v3402
        %v3404 = vmul.f32 %v3180, %v3341
        %v3405 = vmul.f32 %v3181, %v3343
        %v3406 = vmul.f32 %v3182, %v3345
        %v3407 = vmul.f32 %v3183, %v3347
        %v3408 = vmul.f32 %v3184, %v3349
        %v3409 = vmul.f32 %v3185, %v3351
        %v3410 = vmul.f32 %v3186, %v3353
        %v3411 = vmul.f32 %v3187, %v3355
        %v3412 = vmul.f32 %v3188, %v3357
        %v3413 = vmul.f32 %v3189, %v3359
        %v3414 = vmul.f32 %v3190, %v3361
        %v3415 = vmul.f32 %v3191, %v3363
        %v3416 = vmul.f32 %v3192, %v3365
        %v3417 = vmul.f32 %v3193, %v3367
        %v3418 = vmul.f32 %v3194, %v3369
        %v3419 = vmul.f32 %v3195, %v3371
        %v3420 = vmul.f32 %v3196, %v3373
        %v3421 = vmul.f32 %v3197, %v3375
        %v3422 = vmul.f32 %v3198, %v3377
        %v3423 = vmul.f32 %v3199, %v3379
        %v3424 = vmul.f32 %v3200, %v3381
        %v3425 = vmul.f32 %v3201, %v3383
        %v3426 = vmul.f32 %v3202, %v3385
        %v3427 = vmul.f32 %v3203, %v3387
        %v3428 = vmul.f32 %v3204, %v3389
        %v3429 = vmul.f32 %v3205, %v3391
        %v3430 = vmul.f32 %v3206, %v3393
        %v3431 = vmul.f32 %v3207, %v3395
        %v3432 = vmul.f32 %v3208, %v3397
        %v3433 = vmul.f32 %v3209, %v3399
        %v3434 = vmul.f32 %v3210, %v3401
        %v3435 = vmul.f32 %v3211, %v3403
        %v3436 = vpack.c.bf16 %v3405, %v3404
        %v3437 = vpack.c.bf16 %v3407, %v3406
        %v3438 = vpack.c.bf16 %v3409, %v3408
        %v3439 = vpack.c.bf16 %v3411, %v3410
        %v3440 = vpack.c.bf16 %v3413, %v3412
        %v3441 = vpack.c.bf16 %v3415, %v3414
        %v3442 = vpack.c.bf16 %v3417, %v3416
        %v3443 = vpack.c.bf16 %v3419, %v3418
        %v3444 = vpack.c.bf16 %v3421, %v3420
        %v3445 = vpack.c.bf16 %v3423, %v3422
        %v3446 = vpack.c.bf16 %v3425, %v3424
        %v3447 = vpack.c.bf16 %v3427, %v3426
        %v3448 = vpack.c.bf16 %v3429, %v3428
        %v3449 = vpack.c.bf16 %v3431, %v3430
        %v3450 = vpack.c.bf16 %v3433, %v3432
        %v3451 = vpack.c.bf16 %v3435, %v3434
        %v3452 = vld [vmem:[%s6] sm:$0xf]
        %v3453 = vld [vmem:[%s6 + $0x4] sm:$0xf]
        %v3454 = vld [vmem:[%s6 + $0x8] sm:$0xf]
        %v3455 = vld [vmem:[%s6 + $0xc] sm:$0xf]
        %v3456 = vld [vmem:[%s6 + $0x10] sm:$0xf]
        %v3457 = vld [vmem:[%s6 + $0x14] sm:$0xf]
        %v3458 = vld [vmem:[%s6 + $0x18] sm:$0xf]
        %v3459 = vld [vmem:[%s6 + $0x1c] sm:$0xf]
        %v3460 = vld [vmem:[%s6 + $0x20] sm:$0xf]
        %v3461 = vld [vmem:[%s6 + $0x24] sm:$0xf]
        %v3462 = vld [vmem:[%s6 + $0x28] sm:$0xf]
        %v3463 = vld [vmem:[%s6 + $0x2c] sm:$0xf]
        %v3464 = vld [vmem:[%s6 + $0x30] sm:$0xf]
        %v3465 = vld [vmem:[%s6 + $0x34] sm:$0xf]
        %v3466 = vld [vmem:[%s6 + $0x38] sm:$0xf]
        %v3467 = vld [vmem:[%s6 + $0x3c] sm:$0xf]
        %v3468 = vld [vmem:[%s9] sm:$0x1]
        %v3470 = vlaneseq
        %v3471 = vshrl.u32 %v3470, 7
        %v3472 = vsub.s32 0, %v3471
        %v3473 = vrot.slane %v3468, %v3472
        %v3491 = vunpack.c.l.b16 %v3452
        %v3492 = vunpack.c.l.b16 %v3453
        %v3493 = vunpack.c.l.b16 %v3454
        %v3494 = vunpack.c.l.b16 %v3455
        %v3495 = vunpack.c.l.b16 %v3456
        %v3496 = vunpack.c.l.b16 %v3457
        %v3497 = vunpack.c.l.b16 %v3458
        %v3498 = vunpack.c.l.b16 %v3459
        %v3499 = vunpack.c.l.b16 %v3460
        %v3500 = vunpack.c.l.b16 %v3461
        %v3501 = vunpack.c.l.b16 %v3462
        %v3502 = vunpack.c.l.b16 %v3463
        %v3503 = vunpack.c.l.b16 %v3464
        %v3504 = vunpack.c.l.b16 %v3465
        %v3505 = vunpack.c.l.b16 %v3466
        %v3506 = vunpack.c.l.b16 %v3467
        %v3507 = vpack.c.b16 %v3492, %v3491
        %v3508 = vpack.c.b16 %v3494, %v3493
        %v3509 = vpack.c.b16 %v3496, %v3495
        %v3510 = vpack.c.b16 %v3498, %v3497
        %v3511 = vpack.c.b16 %v3500, %v3499
        %v3512 = vpack.c.b16 %v3502, %v3501
        %v3513 = vpack.c.b16 %v3504, %v3503
        %v3514 = vpack.c.b16 %v3506, %v3505
        %3523 = vmatprep.subr.bf16.mxu0 0
        %3524 = vmatpush1.bf16.msra.mxu0 %v3507
        %3525 = vmatprep.subr.bf16.mxu0 0
        %3526 = vmatpush1.bf16.msra.mxu0 %v3508
        %3527 = vmatprep.subr.bf16.mxu0 0
        %3528 = vmatpush1.bf16.msra.mxu0 %v3509
        %3529 = vmatprep.subr.bf16.mxu0 0
        %3530 = vmatpush1.bf16.msra.mxu0 %v3510
        %3531 = vmatprep.subr.bf16.mxu0 0
        %3532 = vmatpush1.bf16.msra.mxu0 %v3511
        %3533 = vmatprep.subr.bf16.mxu0 0
        %3534 = vmatpush1.bf16.msra.mxu0 %v3512
        %3535 = vmatprep.subr.bf16.mxu0 0
        %3536 = vmatpush1.bf16.msra.mxu0 %v3513
        %3537 = vmatprep.subr.bf16.mxu0 0
        %3538 = vmatpush1.bf16.msra.mxu0 %v3514
        %3539 = vmatprep.subr.bf16.mxu0 0
        %3540 = vmatpush1.bf16.msra.mxu0 0
        %3541 = vmatprep.subr.bf16.mxu0 0
        %3542 = vmatpush1.bf16.msra.mxu0 0
        %3543 = vmatprep.subr.bf16.mxu0 0
        %3544 = vmatpush1.bf16.msra.mxu0 0
        %3545 = vmatprep.subr.bf16.mxu0 0
        %3546 = vmatpush1.bf16.msra.mxu0 0
        %3547 = vmatprep.subr.bf16.mxu0 0
        %3548 = vmatpush1.bf16.msra.mxu0 0
        %3549 = vmatprep.subr.bf16.mxu0 0
        %3550 = vmatpush1.bf16.msra.mxu0 0
        %3551 = vmatprep.subr.bf16.mxu0 0
        %3552 = vmatpush1.bf16.msra.mxu0 0
        %3553 = vmatprep.subr.bf16.mxu0 0
        %3554 = vmatpush1.bf16.msra.mxu0 0
        %3555 = vmatprep.mubr.bf16.mxu0 0
        %3556 = vmatmul.mubr.bf16.gmra.mrb[0].mxu0 %v3436
        %v3557 = vpop.f32.mrb[0].mxu0
        %v3558 = vadd.f32 %v3473, %v3557
        %v3559 = vpop.f32.mrb[0].mxu0
        %v3560 = vpop.f32.mrb[0].mxu0
        %v3561 = vadd.f32 %v3473, %v3560
        %v3562 = vpop.f32.mrb[0].mxu0
        %3563 = vmatprep.mubr.bf16.mxu0 0
        %3564 = vmatmul.mubr.bf16.gmra.mrb[0].mxu0 %v3437
        %v3565 = vpop.f32.mrb[0].mxu0
        %v3566 = vadd.f32 %v3473, %v3565
        %v3567 = vpop.f32.mrb[0].mxu0
        %v3568 = vpop.f32.mrb[0].mxu0
        %v3569 = vadd.f32 %v3473, %v3568
        %v3570 = vpop.f32.mrb[0].mxu0
        %3571 = vmatprep.mubr.bf16.mxu0 0
        %3572 = vmatmul.mubr.bf16.gmra.mrb[0].mxu0 %v3438
        %v3573 = vpop.f32.mrb[0].mxu0
        %v3574 = vadd.f32 %v3473, %v3573
        %v3575 = vpop.f32.mrb[0].mxu0
        %v3576 = vpop.f32.mrb[0].mxu0
        %v3577 = vadd.f32 %v3473, %v3576
        %v3578 = vpop.f32.mrb[0].mxu0
        %3579 = vmatprep.mubr.bf16.mxu0 0
        %3580 = vmatmul.mubr.bf16.gmra.mrb[0].mxu0 %v3439
        %v3581 = vpop.f32.mrb[0].mxu0
        %v3582 = vadd.f32 %v3473, %v3581
        %v3583 = vpop.f32.mrb[0].mxu0
        %v3584 = vpop.f32.mrb[0].mxu0
        %v3585 = vadd.f32 %v3473, %v3584
        %v3586 = vpop.f32.mrb[0].mxu0
        %3587 = vmatprep.mubr.bf16.mxu0 0
        %3588 = vmatmul.mubr.bf16.gmra.mrb[0].mxu0 %v3440
        %v3589 = vpop.f32.mrb[0].mxu0
        %v3590 = vadd.f32 %v3473, %v3589
        %v3591 = vpop.f32.mrb[0].mxu0
        %v3592 = vpop.f32.mrb[0].mxu0
        %v3593 = vadd.f32 %v3473, %v3592
        %v3594 = vpop.f32.mrb[0].mxu0
        %3595 = vmatprep.mubr.bf16.mxu0 0
        %3596 = vmatmul.mubr.bf16.gmra.mrb[0].mxu0 %v3441
        %v3597 = vpop.f32.mrb[0].mxu0
        %v3598 = vadd.f32 %v3473, %v3597
        %v3599 = vpop.f32.mrb[0].mxu0
        %v3600 = vpop.f32.mrb[0].mxu0
        %v3601 = vadd.f32 %v3473, %v3600
        %v3602 = vpop.f32.mrb[0].mxu0
        %3603 = vmatprep.mubr.bf16.mxu0 0
        %3604 = vmatmul.mubr.bf16.gmra.mrb[0].mxu0 %v3442
        %v3605 = vpop.f32.mrb[0].mxu0
        %v3606 = vadd.f32 %v3473, %v3605
        %v3607 = vpop.f32.mrb[0].mxu0
        %v3608 = vpop.f32.mrb[0].mxu0
        %v3609 = vadd.f32 %v3473, %v3608
        %v3610 = vpop.f32.mrb[0].mxu0
        %3611 = vmatprep.mubr.bf16.mxu0 0
        %3612 = vmatmul.mubr.bf16.gmra.mrb[0].mxu0 %v3443
        %v3613 = vpop.f32.mrb[0].mxu0
        %v3614 = vadd.f32 %v3473, %v3613
        %v3615 = vpop.f32.mrb[0].mxu0
        %v3616 = vpop.f32.mrb[0].mxu0
        %v3617 = vadd.f32 %v3473, %v3616
        %v3618 = vpop.f32.mrb[0].mxu0
        %3619 = vmatprep.mubr.bf16.mxu0 0
        %3620 = vmatmul.mubr.bf16.gmra.mrb[0].mxu0 %v3444
        %v3621 = vpop.f32.mrb[0].mxu0
        %v3622 = vadd.f32 %v3473, %v3621
        %v3623 = vpop.f32.mrb[0].mxu0
        %v3624 = vpop.f32.mrb[0].mxu0
        %v3625 = vadd.f32 %v3473, %v3624
        %v3626 = vpop.f32.mrb[0].mxu0
        %3627 = vmatprep.mubr.bf16.mxu0 0
        %3628 = vmatmul.mubr.bf16.gmra.mrb[0].mxu0 %v3445
        %v3629 = vpop.f32.mrb[0].mxu0
        %v3630 = vadd.f32 %v3473, %v3629
        %v3631 = vpop.f32.mrb[0].mxu0
        %v3632 = vpop.f32.mrb[0].mxu0
        %v3633 = vadd.f32 %v3473, %v3632
        %v3634 = vpop.f32.mrb[0].mxu0
        %3635 = vmatprep.mubr.bf16.mxu0 0
        %3636 = vmatmul.mubr.bf16.gmra.mrb[0].mxu0 %v3446
        %v3637 = vpop.f32.mrb[0].mxu0
        %v3638 = vadd.f32 %v3473, %v3637
        %v3639 = vpop.f32.mrb[0].mxu0
        %v3640 = vpop.f32.mrb[0].mxu0
        %v3641 = vadd.f32 %v3473, %v3640
        %v3642 = vpop.f32.mrb[0].mxu0
        %3643 = vmatprep.mubr.bf16.mxu0 0
        %3644 = vmatmul.mubr.bf16.gmra.mrb[0].mxu0 %v3447
        %v3645 = vpop.f32.mrb[0].mxu0
        %v3646 = vadd.f32 %v3473, %v3645
        %v3647 = vpop.f32.mrb[0].mxu0
        %v3648 = vpop.f32.mrb[0].mxu0
        %v3649 = vadd.f32 %v3473, %v3648
        %v3650 = vpop.f32.mrb[0].mxu0
        %3651 = vmatprep.mubr.bf16.mxu0 0
        %3652 = vmatmul.mubr.bf16.gmra.mrb[0].mxu0 %v3448
        %v3653 = vpop.f32.mrb[0].mxu0
        %v3654 = vadd.f32 %v3473, %v3653
        %v3655 = vpop.f32.mrb[0].mxu0
        %v3656 = vpop.f32.mrb[0].mxu0
        %v3657 = vadd.f32 %v3473, %v3656
        %v3658 = vpop.f32.mrb[0].mxu0
        %3659 = vmatprep.mubr.bf16.mxu0 0
        %3660 = vmatmul.mubr.bf16.gmra.mrb[0].mxu0 %v3449
        %v3661 = vpop.f32.mrb[0].mxu0
        %v3662 = vadd.f32 %v3473, %v3661
        %v3663 = vpop.f32.mrb[0].mxu0
        %v3664 = vpop.f32.mrb[0].mxu0
        %v3665 = vadd.f32 %v3473, %v3664
        %v3666 = vpop.f32.mrb[0].mxu0
        %3667 = vmatprep.mubr.bf16.mxu0 0
        %3668 = vmatmul.mubr.bf16.gmra.mrb[0].mxu0 %v3450
        %v3669 = vpop.f32.mrb[0].mxu0
        %v3670 = vadd.f32 %v3473, %v3669
        %v3671 = vpop.f32.mrb[0].mxu0
        %v3672 = vpop.f32.mrb[0].mxu0
        %v3673 = vadd.f32 %v3473, %v3672
        %v3674 = vpop.f32.mrb[0].mxu0
        %3675 = vmatprep.mubr.bf16.mxu0 0
        %3676 = vmatmul.mubr.bf16.gmra.mrb[0].mxu0 %v3451
        %v3677 = vpop.f32.mrb[0].mxu0
        %v3678 = vadd.f32 %v3473, %v3677
        %v3679 = vpop.f32.mrb[0].mxu0
        %v3680 = vpop.f32.mrb[0].mxu0
        %v3681 = vadd.f32 %v3473, %v3680
        %v3682 = vpop.f32.mrb[0].mxu0
        %3683 = vdwg.mxu0
        %v3684 = vld [vmem:[%s7] sm:$0xf]
        %v3685 = vld [vmem:[%s7 + $0x4] sm:$0xf]
        %v3686 = vld [vmem:[%s7 + $0x8] sm:$0xf]
        %v3687 = vld [vmem:[%s7 + $0xc] sm:$0xf]
        %v3688 = vld [vmem:[%s7 + $0x10] sm:$0xf]
        %v3689 = vld [vmem:[%s7 + $0x14] sm:$0xf]
        %v3690 = vld [vmem:[%s7 + $0x18] sm:$0xf]
        %v3691 = vld [vmem:[%s7 + $0x1c] sm:$0xf]
        %v3692 = vld [vmem:[%s7 + $0x20] sm:$0xf]
        %v3693 = vld [vmem:[%s7 + $0x24] sm:$0xf]
        %v3694 = vld [vmem:[%s7 + $0x28] sm:$0xf]
        %v3695 = vld [vmem:[%s7 + $0x2c] sm:$0xf]
        %v3696 = vld [vmem:[%s7 + $0x30] sm:$0xf]
        %v3697 = vld [vmem:[%s7 + $0x34] sm:$0xf]
        %v3698 = vld [vmem:[%s7 + $0x38] sm:$0xf]
        %v3699 = vld [vmem:[%s7 + $0x3c] sm:$0xf]
        %v3700 = vld [vmem:[%s10] sm:$0x1]
        %v3702 = vlaneseq
        %v3703 = vshrl.u32 %v3702, 7
        %v3704 = vsub.s32 0, %v3703
        %v3705 = vrot.slane %v3700, %v3704
        %v3723 = vunpack.c.l.b16 %v3684
        %v3724 = vunpack.c.l.b16 %v3685
        %v3725 = vunpack.c.l.b16 %v3686
        %v3726 = vunpack.c.l.b16 %v3687
        %v3727 = vunpack.c.l.b16 %v3688
        %v3728 = vunpack.c.l.b16 %v3689
        %v3729 = vunpack.c.l.b16 %v3690
        %v3730 = vunpack.c.l.b16 %v3691
        %v3731 = vunpack.c.l.b16 %v3692
        %v3732 = vunpack.c.l.b16 %v3693
        %v3733 = vunpack.c.l.b16 %v3694
        %v3734 = vunpack.c.l.b16 %v3695
        %v3735 = vunpack.c.l.b16 %v3696
        %v3736 = vunpack.c.l.b16 %v3697
        %v3737 = vunpack.c.l.b16 %v3698
        %v3738 = vunpack.c.l.b16 %v3699
        %v3739 = vpack.c.b16 %v3724, %v3723
        %v3740 = vpack.c.b16 %v3726, %v3725
        %v3741 = vpack.c.b16 %v3728, %v3727
        %v3742 = vpack.c.b16 %v3730, %v3729
        %v3743 = vpack.c.b16 %v3732, %v3731
        %v3744 = vpack.c.b16 %v3734, %v3733
        %v3745 = vpack.c.b16 %v3736, %v3735
        %v3746 = vpack.c.b16 %v3738, %v3737
        %3755 = vmatprep.subr.bf16.mxu0 0
        %3756 = vmatpush1.bf16.msra.mxu0 %v3739
        %3757 = vmatprep.subr.bf16.mxu0 0
        %3758 = vmatpush1.bf16.msra.mxu0 %v3740
        %3759 = vmatprep.subr.bf16.mxu0 0
        %3760 = vmatpush1.bf16.msra.mxu0 %v3741
        %3761 = vmatprep.subr.bf16.mxu0 0
        %3762 = vmatpush1.bf16.msra.mxu0 %v3742
        %3763 = vmatprep.subr.bf16.mxu0 0
        %3764 = vmatpush1.bf16.msra.mxu0 %v3743
        %3765 = vmatprep.subr.bf16.mxu0 0
        %3766 = vmatpush1.bf16.msra.mxu0 %v3744
        %3767 = vmatprep.subr.bf16.mxu0 0
        %3768 = vmatpush1.bf16.msra.mxu0 %v3745
        %3769 = vmatprep.subr.bf16.mxu0 0
        %3770 = vmatpush1.bf16.msra.mxu0 %v3746
        %3771 = vmatprep.subr.bf16.mxu0 0
        %3772 = vmatpush1.bf16.msra.mxu0 0
        %3773 = vmatprep.subr.bf16.mxu0 0
        %3774 = vmatpush1.bf16.msra.mxu0 0
        %3775 = vmatprep.subr.bf16.mxu0 0
        %3776 = vmatpush1.bf16.msra.mxu0 0
        %3777 = vmatprep.subr.bf16.mxu0 0
        %3778 = vmatpush1.bf16.msra.mxu0 0
        %3779 = vmatprep.subr.bf16.mxu0 0
        %3780 = vmatpush1.bf16.msra.mxu0 0
        %3781 = vmatprep.subr.bf16.mxu0 0
        %3782 = vmatpush1.bf16.msra.mxu0 0
        %3783 = vmatprep.subr.bf16.mxu0 0
        %3784 = vmatpush1.bf16.msra.mxu0 0
        %3785 = vmatprep.subr.bf16.mxu0 0
        %3786 = vmatpush1.bf16.msra.mxu0 0
        %3787 = vmatprep.mubr.bf16.mxu0 0
        %3788 = vmatmul.mubr.bf16.gmra.mrb[0].mxu0 %v3436
        %v3789 = vpop.f32.mrb[0].mxu0
        %v3790 = vadd.f32 %v3705, %v3789
        %v3791 = vpop.f32.mrb[0].mxu0
        %v3792 = vpop.f32.mrb[0].mxu0
        %v3793 = vadd.f32 %v3705, %v3792
        %v3794 = vpop.f32.mrb[0].mxu0
        %3795 = vmatprep.mubr.bf16.mxu0 0
        %3796 = vmatmul.mubr.bf16.gmra.mrb[0].mxu0 %v3437
        %v3797 = vpop.f32.mrb[0].mxu0
        %v3798 = vadd.f32 %v3705, %v3797
        %v3799 = vpop.f32.mrb[0].mxu0
        %v3800 = vpop.f32.mrb[0].mxu0
        %v3801 = vadd.f32 %v3705, %v3800
        %v3802 = vpop.f32.mrb[0].mxu0
        %3803 = vmatprep.mubr.bf16.mxu0 0
        %3804 = vmatmul.mubr.bf16.gmra.mrb[0].mxu0 %v3438
        %v3805 = vpop.f32.mrb[0].mxu0
        %v3806 = vadd.f32 %v3705, %v3805
        %v3807 = vpop.f32.mrb[0].mxu0
        %v3808 = vpop.f32.mrb[0].mxu0
        %v3809 = vadd.f32 %v3705, %v3808
        %v3810 = vpop.f32.mrb[0].mxu0
        %3811 = vmatprep.mubr.bf16.mxu0 0
        %3812 = vmatmul.mubr.bf16.gmra.mrb[0].mxu0 %v3439
        %v3813 = vpop.f32.mrb[0].mxu0
        %v3814 = vadd.f32 %v3705, %v3813
        %v3815 = vpop.f32.mrb[0].mxu0
        %v3816 = vpop.f32.mrb[0].mxu0
        %v3817 = vadd.f32 %v3705, %v3816
        %v3818 = vpop.f32.mrb[0].mxu0
        %3819 = vmatprep.mubr.bf16.mxu0 0
        %3820 = vmatmul.mubr.bf16.gmra.mrb[0].mxu0 %v3440
        %v3821 = vpop.f32.mrb[0].mxu0
        %v3822 = vadd.f32 %v3705, %v3821
        %v3823 = vpop.f32.mrb[0].mxu0
        %v3824 = vpop.f32.mrb[0].mxu0
        %v3825 = vadd.f32 %v3705, %v3824
        %v3826 = vpop.f32.mrb[0].mxu0
        %3827 = vmatprep.mubr.bf16.mxu0 0
        %3828 = vmatmul.mubr.bf16.gmra.mrb[0].mxu0 %v3441
        %v3829 = vpop.f32.mrb[0].mxu0
        %v3830 = vadd.f32 %v3705, %v3829
        %v3831 = vpop.f32.mrb[0].mxu0
        %v3832 = vpop.f32.mrb[0].mxu0
        %v3833 = vadd.f32 %v3705, %v3832
        %v3834 = vpop.f32.mrb[0].mxu0
        %3835 = vmatprep.mubr.bf16.mxu0 0
        %3836 = vmatmul.mubr.bf16.gmra.mrb[0].mxu0 %v3442
        %v3837 = vpop.f32.mrb[0].mxu0
        %v3838 = vadd.f32 %v3705, %v3837
        %v3839 = vpop.f32.mrb[0].mxu0
        %v3840 = vpop.f32.mrb[0].mxu0
        %v3841 = vadd.f32 %v3705, %v3840
        %v3842 = vpop.f32.mrb[0].mxu0
        %3843 = vmatprep.mubr.bf16.mxu0 0
        %3844 = vmatmul.mubr.bf16.gmra.mrb[0].mxu0 %v3443
        %v3845 = vpop.f32.mrb[0].mxu0
        %v3846 = vadd.f32 %v3705, %v3845
        %v3847 = vpop.f32.mrb[0].mxu0
        %v3848 = vpop.f32.mrb[0].mxu0
        %v3849 = vadd.f32 %v3705, %v3848
        %v3850 = vpop.f32.mrb[0].mxu0
        %3851 = vmatprep.mubr.bf16.mxu0 0
        %3852 = vmatmul.mubr.bf16.gmra.mrb[0].mxu0 %v3444
        %v3853 = vpop.f32.mrb[0].mxu0
        %v3854 = vadd.f32 %v3705, %v3853
        %v3855 = vpop.f32.mrb[0].mxu0
        %v3856 = vpop.f32.mrb[0].mxu0
        %v3857 = vadd.f32 %v3705, %v3856
        %v3858 = vpop.f32.mrb[0].mxu0
        %3859 = vmatprep.mubr.bf16.mxu0 0
        %3860 = vmatmul.mubr.bf16.gmra.mrb[0].mxu0 %v3445
        %v3861 = vpop.f32.mrb[0].mxu0
        %v3862 = vadd.f32 %v3705, %v3861
        %v3863 = vpop.f32.mrb[0].mxu0
        %v3864 = vpop.f32.mrb[0].mxu0
        %v3865 = vadd.f32 %v3705, %v3864
        %v3866 = vpop.f32.mrb[0].mxu0
        %3867 = vmatprep.mubr.bf16.mxu0 0
        %3868 = vmatmul.mubr.bf16.gmra.mrb[0].mxu0 %v3446
        %v3869 = vpop.f32.mrb[0].mxu0
        %v3870 = vadd.f32 %v3705, %v3869
        %v3871 = vpop.f32.mrb[0].mxu0
        %v3872 = vpop.f32.mrb[0].mxu0
        %v3873 = vadd.f32 %v3705, %v3872
        %v3874 = vpop.f32.mrb[0].mxu0
        %3875 = vmatprep.mubr.bf16.mxu0 0
        %3876 = vmatmul.mubr.bf16.gmra.mrb[0].mxu0 %v3447
        %v3877 = vpop.f32.mrb[0].mxu0
        %v3878 = vadd.f32 %v3705, %v3877
        %v3879 = vpop.f32.mrb[0].mxu0
        %v3880 = vpop.f32.mrb[0].mxu0
        %v3881 = vadd.f32 %v3705, %v3880
        %v3882 = vpop.f32.mrb[0].mxu0
        %3883 = vmatprep.mubr.bf16.mxu0 0
        %3884 = vmatmul.mubr.bf16.gmra.mrb[0].mxu0 %v3448
        %v3885 = vpop.f32.mrb[0].mxu0
        %v3886 = vadd.f32 %v3705, %v3885
        %v3887 = vpop.f32.mrb[0].mxu0
        %v3888 = vpop.f32.mrb[0].mxu0
        %v3889 = vadd.f32 %v3705, %v3888
        %v3890 = vpop.f32.mrb[0].mxu0
        %3891 = vmatprep.mubr.bf16.mxu0 0
        %3892 = vmatmul.mubr.bf16.gmra.mrb[0].mxu0 %v3449
        %v3893 = vpop.f32.mrb[0].mxu0
        %v3894 = vadd.f32 %v3705, %v3893
        %v3895 = vpop.f32.mrb[0].mxu0
        %v3896 = vpop.f32.mrb[0].mxu0
        %v3897 = vadd.f32 %v3705, %v3896
        %v3898 = vpop.f32.mrb[0].mxu0
        %3899 = vmatprep.mubr.bf16.mxu0 0
        %3900 = vmatmul.mubr.bf16.gmra.mrb[0].mxu0 %v3450
        %v3901 = vpop.f32.mrb[0].mxu0
        %v3902 = vadd.f32 %v3705, %v3901
        %v3903 = vpop.f32.mrb[0].mxu0
        %v3904 = vpop.f32.mrb[0].mxu0
        %v3905 = vadd.f32 %v3705, %v3904
        %v3906 = vpop.f32.mrb[0].mxu0
        %3907 = vmatprep.mubr.bf16.mxu0 0
        %3908 = vmatmul.mubr.bf16.gmra.mrb[0].mxu0 %v3451
        %v3909 = vpop.f32.mrb[0].mxu0
        %v3910 = vadd.f32 %v3705, %v3909
        %v3911 = vpop.f32.mrb[0].mxu0
        %v3912 = vpop.f32.mrb[0].mxu0
        %v3913 = vadd.f32 %v3705, %v3912
        %v3914 = vpop.f32.mrb[0].mxu0
        %3915 = vdwg.mxu0
        %v3916 = vld [vmem:[%s8] sm:$0xf]
        %v3917 = vld [vmem:[%s8 + $0x4] sm:$0xf]
        %v3918 = vld [vmem:[%s8 + $0x8] sm:$0xf]
        %v3919 = vld [vmem:[%s8 + $0xc] sm:$0xf]
        %v3920 = vld [vmem:[%s8 + $0x10] sm:$0xf]
        %v3921 = vld [vmem:[%s8 + $0x14] sm:$0xf]
        %v3922 = vld [vmem:[%s8 + $0x18] sm:$0xf]
        %v3923 = vld [vmem:[%s8 + $0x1c] sm:$0xf]
        %v3924 = vld [vmem:[%s8 + $0x20] sm:$0xf]
        %v3925 = vld [vmem:[%s8 + $0x24] sm:$0xf]
        %v3926 = vld [vmem:[%s8 + $0x28] sm:$0xf]
        %v3927 = vld [vmem:[%s8 + $0x2c] sm:$0xf]
        %v3928 = vld [vmem:[%s8 + $0x30] sm:$0xf]
        %v3929 = vld [vmem:[%s8 + $0x34] sm:$0xf]
        %v3930 = vld [vmem:[%s8 + $0x38] sm:$0xf]
        %v3931 = vld [vmem:[%s8 + $0x3c] sm:$0xf]
        %v3932 = vld [vmem:[%s11] sm:$0x1]
        %v3934 = vlaneseq
        %v3935 = vshrl.u32 %v3934, 7
        %v3936 = vsub.s32 0, %v3935
        %v3937 = vrot.slane %v3932, %v3936
        %v3955 = vunpack.c.l.b16 %v3916
        %v3956 = vunpack.c.l.b16 %v3917
        %v3957 = vunpack.c.l.b16 %v3918
        %v3958 = vunpack.c.l.b16 %v3919
        %v3959 = vunpack.c.l.b16 %v3920
        %v3960 = vunpack.c.l.b16 %v3921
        %v3961 = vunpack.c.l.b16 %v3922
        %v3962 = vunpack.c.l.b16 %v3923
        %v3963 = vunpack.c.l.b16 %v3924
        %v3964 = vunpack.c.l.b16 %v3925
        %v3965 = vunpack.c.l.b16 %v3926
        %v3966 = vunpack.c.l.b16 %v3927
        %v3967 = vunpack.c.l.b16 %v3928
        %v3968 = vunpack.c.l.b16 %v3929
        %v3969 = vunpack.c.l.b16 %v3930
        %v3970 = vunpack.c.l.b16 %v3931
        %v3971 = vpack.c.b16 %v3956, %v3955
        %v3972 = vpack.c.b16 %v3958, %v3957
        %v3973 = vpack.c.b16 %v3960, %v3959
        %v3974 = vpack.c.b16 %v3962, %v3961
        %v3975 = vpack.c.b16 %v3964, %v3963
        %v3976 = vpack.c.b16 %v3966, %v3965
        %v3977 = vpack.c.b16 %v3968, %v3967
        %v3978 = vpack.c.b16 %v3970, %v3969
        %3987 = vmatprep.subr.bf16.mxu0 0
        %3988 = vmatpush1.bf16.msra.mxu0 %v3971
        %3989 = vmatprep.subr.bf16.mxu0 0
        %3990 = vmatpush1.bf16.msra.mxu0 %v3972
        %3991 = vmatprep.subr.bf16.mxu0 0
        %3992 = vmatpush1.bf16.msra.mxu0 %v3973
        %3993 = vmatprep.subr.bf16.mxu0 0
        %3994 = vmatpush1.bf16.msra.mxu0 %v3974
        %3995 = vmatprep.subr.bf16.mxu0 0
        %3996 = vmatpush1.bf16.msra.mxu0 %v3975
        %3997 = vmatprep.subr.bf16.mxu0 0
        %3998 = vmatpush1.bf16.msra.mxu0 %v3976
        %3999 = vmatprep.subr.bf16.mxu0 0
        %4000 = vmatpush1.bf16.msra.mxu0 %v3977
        %4001 = vmatprep.subr.bf16.mxu0 0
        %4002 = vmatpush1.bf16.msra.mxu0 %v3978
        %4003 = vmatprep.subr.bf16.mxu0 0
        %4004 = vmatpush1.bf16.msra.mxu0 0
        %4005 = vmatprep.subr.bf16.mxu0 0
        %4006 = vmatpush1.bf16.msra.mxu0 0
        %4007 = vmatprep.subr.bf16.mxu0 0
        %4008 = vmatpush1.bf16.msra.mxu0 0
        %4009 = vmatprep.subr.bf16.mxu0 0
        %4010 = vmatpush1.bf16.msra.mxu0 0
        %4011 = vmatprep.subr.bf16.mxu0 0
        %4012 = vmatpush1.bf16.msra.mxu0 0
        %4013 = vmatprep.subr.bf16.mxu0 0
        %4014 = vmatpush1.bf16.msra.mxu0 0
        %4015 = vmatprep.subr.bf16.mxu0 0
        %4016 = vmatpush1.bf16.msra.mxu0 0
        %4017 = vmatprep.subr.bf16.mxu0 0
        %4018 = vmatpush1.bf16.msra.mxu0 0
        %4019 = vmatprep.mubr.bf16.mxu0 0
        %4020 = vmatmul.mubr.bf16.gmra.mrb[0].mxu0 %v3436
        %v4021 = vpop.f32.mrb[0].mxu0
        %v4022 = vadd.f32 %v3937, %v4021
        %v4023 = vpop.f32.mrb[0].mxu0
        %v4024 = vpop.f32.mrb[0].mxu0
        %v4025 = vadd.f32 %v3937, %v4024
        %v4026 = vpop.f32.mrb[0].mxu0
        %4027 = vmatprep.mubr.bf16.mxu0 0
        %4028 = vmatmul.mubr.bf16.gmra.mrb[0].mxu0 %v3437
        %v4029 = vpop.f32.mrb[0].mxu0
        %v4030 = vadd.f32 %v3937, %v4029
        %v4031 = vpop.f32.mrb[0].mxu0
        %v4032 = vpop.f32.mrb[0].mxu0
        %v4033 = vadd.f32 %v3937, %v4032
        %v4034 = vpop.f32.mrb[0].mxu0
        %4035 = vmatprep.mubr.bf16.mxu0 0
        %4036 = vmatmul.mubr.bf16.gmra.mrb[0].mxu0 %v3438
        %v4037 = vpop.f32.mrb[0].mxu0
        %v4038 = vadd.f32 %v3937, %v4037
        %v4039 = vpop.f32.mrb[0].mxu0
        %v4040 = vpop.f32.mrb[0].mxu0
        %v4041 = vadd.f32 %v3937, %v4040
        %v4042 = vpop.f32.mrb[0].mxu0
        %4043 = vmatprep.mubr.bf16.mxu0 0
        %4044 = vmatmul.mubr.bf16.gmra.mrb[0].mxu0 %v3439
        %v4045 = vpop.f32.mrb[0].mxu0
        %v4046 = vadd.f32 %v3937, %v4045
        %v4047 = vpop.f32.mrb[0].mxu0
        %v4048 = vpop.f32.mrb[0].mxu0
        %v4049 = vadd.f32 %v3937, %v4048
        %v4050 = vpop.f32.mrb[0].mxu0
        %4051 = vmatprep.mubr.bf16.mxu0 0
        %4052 = vmatmul.mubr.bf16.gmra.mrb[0].mxu0 %v3440
        %v4053 = vpop.f32.mrb[0].mxu0
        %v4054 = vadd.f32 %v3937, %v4053
        %v4055 = vpop.f32.mrb[0].mxu0
        %v4056 = vpop.f32.mrb[0].mxu0
        %v4057 = vadd.f32 %v3937, %v4056
        %v4058 = vpop.f32.mrb[0].mxu0
        %4059 = vmatprep.mubr.bf16.mxu0 0
        %4060 = vmatmul.mubr.bf16.gmra.mrb[0].mxu0 %v3441
        %v4061 = vpop.f32.mrb[0].mxu0
        %v4062 = vadd.f32 %v3937, %v4061
        %v4063 = vpop.f32.mrb[0].mxu0
        %v4064 = vpop.f32.mrb[0].mxu0
        %v4065 = vadd.f32 %v3937, %v4064
        %v4066 = vpop.f32.mrb[0].mxu0
        %4067 = vmatprep.mubr.bf16.mxu0 0
        %4068 = vmatmul.mubr.bf16.gmra.mrb[0].mxu0 %v3442
        %v4069 = vpop.f32.mrb[0].mxu0
        %v4070 = vadd.f32 %v3937, %v4069
        %v4071 = vpop.f32.mrb[0].mxu0
        %v4072 = vpop.f32.mrb[0].mxu0
        %v4073 = vadd.f32 %v3937, %v4072
        %v4074 = vpop.f32.mrb[0].mxu0
        %4075 = vmatprep.mubr.bf16.mxu0 0
        %4076 = vmatmul.mubr.bf16.gmra.mrb[0].mxu0 %v3443
        %v4077 = vpop.f32.mrb[0].mxu0
        %v4078 = vadd.f32 %v3937, %v4077
        %v4079 = vpop.f32.mrb[0].mxu0
        %v4080 = vpop.f32.mrb[0].mxu0
        %v4081 = vadd.f32 %v3937, %v4080
        %v4082 = vpop.f32.mrb[0].mxu0
        %4083 = vmatprep.mubr.bf16.mxu0 0
        %4084 = vmatmul.mubr.bf16.gmra.mrb[0].mxu0 %v3444
        %v4085 = vpop.f32.mrb[0].mxu0
        %v4086 = vadd.f32 %v3937, %v4085
        %v4087 = vpop.f32.mrb[0].mxu0
        %v4088 = vpop.f32.mrb[0].mxu0
        %v4089 = vadd.f32 %v3937, %v4088
        %v4090 = vpop.f32.mrb[0].mxu0
        %4091 = vmatprep.mubr.bf16.mxu0 0
        %4092 = vmatmul.mubr.bf16.gmra.mrb[0].mxu0 %v3445
        %v4093 = vpop.f32.mrb[0].mxu0
        %v4094 = vadd.f32 %v3937, %v4093
        %v4095 = vpop.f32.mrb[0].mxu0
        %v4096 = vpop.f32.mrb[0].mxu0
        %v4097 = vadd.f32 %v3937, %v4096
        %v4098 = vpop.f32.mrb[0].mxu0
        %4099 = vmatprep.mubr.bf16.mxu0 0
        %4100 = vmatmul.mubr.bf16.gmra.mrb[0].mxu0 %v3446
        %v4101 = vpop.f32.mrb[0].mxu0
        %v4102 = vadd.f32 %v3937, %v4101
        %v4103 = vpop.f32.mrb[0].mxu0
        %v4104 = vpop.f32.mrb[0].mxu0
        %v4105 = vadd.f32 %v3937, %v4104
        %v4106 = vpop.f32.mrb[0].mxu0
        %4107 = vmatprep.mubr.bf16.mxu0 0
        %4108 = vmatmul.mubr.bf16.gmra.mrb[0].mxu0 %v3447
        %v4109 = vpop.f32.mrb[0].mxu0
        %v4110 = vadd.f32 %v3937, %v4109
        %v4111 = vpop.f32.mrb[0].mxu0
        %v4112 = vpop.f32.mrb[0].mxu0
        %v4113 = vadd.f32 %v3937, %v4112
        %v4114 = vpop.f32.mrb[0].mxu0
        %4115 = vmatprep.mubr.bf16.mxu0 0
        %4116 = vmatmul.mubr.bf16.gmra.mrb[0].mxu0 %v3448
        %v4117 = vpop.f32.mrb[0].mxu0
        %v4118 = vadd.f32 %v3937, %v4117
        %v4119 = vpop.f32.mrb[0].mxu0
        %v4120 = vpop.f32.mrb[0].mxu0
        %v4121 = vadd.f32 %v3937, %v4120
        %v4122 = vpop.f32.mrb[0].mxu0
        %4123 = vmatprep.mubr.bf16.mxu0 0
        %4124 = vmatmul.mubr.bf16.gmra.mrb[0].mxu0 %v3449
        %v4125 = vpop.f32.mrb[0].mxu0
        %v4126 = vadd.f32 %v3937, %v4125
        %v4127 = vpop.f32.mrb[0].mxu0
        %v4128 = vpop.f32.mrb[0].mxu0
        %v4129 = vadd.f32 %v3937, %v4128
        %v4130 = vpop.f32.mrb[0].mxu0
        %4131 = vmatprep.mubr.bf16.mxu0 0
        %4132 = vmatmul.mubr.bf16.gmra.mrb[0].mxu0 %v3450
        %v4133 = vpop.f32.mrb[0].mxu0
        %v4134 = vadd.f32 %v3937, %v4133
        %v4135 = vpop.f32.mrb[0].mxu0
        %v4136 = vpop.f32.mrb[0].mxu0
        %v4137 = vadd.f32 %v3937, %v4136
        %v4138 = vpop.f32.mrb[0].mxu0
        %4139 = vmatprep.mubr.bf16.mxu0 0
        %4140 = vmatmul.mubr.bf16.gmra.mrb[0].mxu0 %v3451
        %v4141 = vpop.f32.mrb[0].mxu0
        %v4142 = vadd.f32 %v3937, %v4141
        %v4143 = vpop.f32.mrb[0].mxu0
        %v4144 = vpop.f32.mrb[0].mxu0
        %v4145 = vadd.f32 %v3937, %v4144
        %v4146 = vpop.f32.mrb[0].mxu0
        %4147 = vdwg.mxu0
        %v4148 = vmul.f32 %v2468, %v3790
        %v4149 = vmul.f32 %v2470, %v3793
        %v4150 = vmul.f32 %v2472, %v3798
        %v4151 = vmul.f32 %v2474, %v3801
        %v4152 = vmul.f32 %v2476, %v3806
        %v4153 = vmul.f32 %v2478, %v3809
        %v4154 = vmul.f32 %v2480, %v3814
        %v4155 = vmul.f32 %v2482, %v3817
        %v4156 = vmul.f32 %v2484, %v3822
        %v4157 = vmul.f32 %v2486, %v3825
        %v4158 = vmul.f32 %v2488, %v3830
        %v4159 = vmul.f32 %v2490, %v3833
        %v4160 = vmul.f32 %v2492, %v3838
        %v4161 = vmul.f32 %v2494, %v3841
        %v4162 = vmul.f32 %v2496, %v3846
        %v4163 = vmul.f32 %v2498, %v3849
        %v4164 = vmul.f32 %v2500, %v3854
        %v4165 = vmul.f32 %v2502, %v3857
        %v4166 = vmul.f32 %v2504, %v3862
        %v4167 = vmul.f32 %v2506, %v3865
        %v4168 = vmul.f32 %v2508, %v3870
        %v4169 = vmul.f32 %v2510, %v3873
        %v4170 = vmul.f32 %v2512, %v3878
        %v4171 = vmul.f32 %v2514, %v3881
        %v4172 = vmul.f32 %v2516, %v3886
        %v4173 = vmul.f32 %v2518, %v3889
        %v4174 = vmul.f32 %v2520, %v3894
        %v4175 = vmul.f32 %v2522, %v3897
        %v4176 = vmul.f32 %v2524, %v3902
        %v4177 = vmul.f32 %v2526, %v3905
        %v4178 = vmul.f32 %v2528, %v3910
        %v4179 = vmul.f32 %v2530, %v3913
        %v4180 = vadd.f32 %v4148, %v4022
        %v4181 = vadd.f32 %v4149, %v4025
        %v4182 = vadd.f32 %v4150, %v4030
        %v4183 = vadd.f32 %v4151, %v4033
        %v4184 = vadd.f32 %v4152, %v4038
        %v4185 = vadd.f32 %v4153, %v4041
        %v4186 = vadd.f32 %v4154, %v4046
        %v4187 = vadd.f32 %v4155, %v4049
        %v4188 = vadd.f32 %v4156, %v4054
        %v4189 = vadd.f32 %v4157, %v4057
        %v4190 = vadd.f32 %v4158, %v4062
        %v4191 = vadd.f32 %v4159, %v4065
        %v4192 = vadd.f32 %v4160, %v4070
        %v4193 = vadd.f32 %v4161, %v4073
        %v4194 = vadd.f32 %v4162, %v4078
        %v4195 = vadd.f32 %v4163, %v4081
        %v4196 = vadd.f32 %v4164, %v4086
        %v4197 = vadd.f32 %v4165, %v4089
        %v4198 = vadd.f32 %v4166, %v4094
        %v4199 = vadd.f32 %v4167, %v4097
        %v4200 = vadd.f32 %v4168, %v4102
        %v4201 = vadd.f32 %v4169, %v4105
        %v4202 = vadd.f32 %v4170, %v4110
        %v4203 = vadd.f32 %v4171, %v4113
        %v4204 = vadd.f32 %v4172, %v4118
        %v4205 = vadd.f32 %v4173, %v4121
        %v4206 = vadd.f32 %v4174, %v4126
        %v4207 = vadd.f32 %v4175, %v4129
        %v4208 = vadd.f32 %v4176, %v4134
        %v4209 = vadd.f32 %v4177, %v4137
        %v4210 = vadd.f32 %v4178, %v4142
        %v4211 = vadd.f32 %v4179, %v4145
        %v4212 = vpack.c.bf16 %v4181, %v4180
        %v4213 = vpack.c.bf16 %v4183, %v4182
        %v4214 = vpack.c.bf16 %v4185, %v4184
        %v4215 = vpack.c.bf16 %v4187, %v4186
        %v4216 = vpack.c.bf16 %v4189, %v4188
        %v4217 = vpack.c.bf16 %v4191, %v4190
        %v4218 = vpack.c.bf16 %v4193, %v4192
        %v4219 = vpack.c.bf16 %v4195, %v4194
        %v4220 = vpack.c.bf16 %v4197, %v4196
        %v4221 = vpack.c.bf16 %v4199, %v4198
        %v4222 = vpack.c.bf16 %v4201, %v4200
        %v4223 = vpack.c.bf16 %v4203, %v4202
        %v4224 = vpack.c.bf16 %v4205, %v4204
        %v4225 = vpack.c.bf16 %v4207, %v4206
        %v4226 = vpack.c.bf16 %v4209, %v4208
        %v4227 = vpack.c.bf16 %v4211, %v4210
        %v4244 = vunpack.c.l.b16 %v4212
        %v4245 = vunpack.c.h.b16 %v4212
        %v4246 = vunpack.c.l.b16 %v4213
        %v4247 = vunpack.c.h.b16 %v4213
        %v4248 = vunpack.c.l.b16 %v4214
        %v4249 = vunpack.c.h.b16 %v4214
        %v4250 = vunpack.c.l.b16 %v4215
        %v4251 = vunpack.c.h.b16 %v4215
        %v4252 = vunpack.c.l.b16 %v4216
        %v4253 = vunpack.c.h.b16 %v4216
        %v4254 = vunpack.c.l.b16 %v4217
        %v4255 = vunpack.c.h.b16 %v4217
        %v4256 = vunpack.c.l.b16 %v4218
        %v4257 = vunpack.c.h.b16 %v4218
        %v4258 = vunpack.c.l.b16 %v4219
        %v4259 = vunpack.c.h.b16 %v4219
        %v4260 = vunpack.c.l.b16 %v4220
        %v4261 = vunpack.c.h.b16 %v4220
        %v4262 = vunpack.c.l.b16 %v4221
        %v4263 = vunpack.c.h.b16 %v4221
        %v4264 = vunpack.c.l.b16 %v4222
        %v4265 = vunpack.c.h.b16 %v4222
        %v4266 = vunpack.c.l.b16 %v4223
        %v4267 = vunpack.c.h.b16 %v4223
        %v4268 = vunpack.c.l.b16 %v4224
        %v4269 = vunpack.c.h.b16 %v4224
        %v4270 = vunpack.c.l.b16 %v4225
        %v4271 = vunpack.c.h.b16 %v4225
        %v4272 = vunpack.c.l.b16 %v4226
        %v4273 = vunpack.c.h.b16 %v4226
        %v4274 = vunpack.c.l.b16 %v4227
        %v4275 = vunpack.c.h.b16 %v4227
        %v4276 = vpack.c.b16 %v4244, %v4244
        %v4277 = vpack.c.b16 %v4245, %v4245
        %v4278 = vpack.c.b16 %v4246, %v4246
        %v4279 = vpack.c.b16 %v4247, %v4247
        %v4280 = vpack.c.b16 %v4248, %v4248
        %v4281 = vpack.c.b16 %v4249, %v4249
        %v4282 = vpack.c.b16 %v4250, %v4250
        %v4283 = vpack.c.b16 %v4251, %v4251
        %v4284 = vpack.c.b16 %v4252, %v4252
        %v4285 = vpack.c.b16 %v4253, %v4253
        %v4286 = vpack.c.b16 %v4254, %v4254
        %v4287 = vpack.c.b16 %v4255, %v4255
        %v4288 = vpack.c.b16 %v4256, %v4256
        %v4289 = vpack.c.b16 %v4257, %v4257
        %v4290 = vpack.c.b16 %v4258, %v4258
        %v4291 = vpack.c.b16 %v4259, %v4259
        %v4292 = vpack.c.b16 %v4260, %v4260
        %v4293 = vpack.c.b16 %v4261, %v4261
        %v4294 = vpack.c.b16 %v4262, %v4262
        %v4295 = vpack.c.b16 %v4263, %v4263
        %v4296 = vpack.c.b16 %v4264, %v4264
        %v4297 = vpack.c.b16 %v4265, %v4265
        %v4298 = vpack.c.b16 %v4266, %v4266
        %v4299 = vpack.c.b16 %v4267, %v4267
        %v4300 = vpack.c.b16 %v4268, %v4268
        %v4301 = vpack.c.b16 %v4269, %v4269
        %v4302 = vpack.c.b16 %v4270, %v4270
        %v4303 = vpack.c.b16 %v4271, %v4271
        %v4304 = vpack.c.b16 %v4272, %v4272
        %v4305 = vpack.c.b16 %v4273, %v4273
        %v4306 = vpack.c.b16 %v4274, %v4274
        %v4307 = vpack.c.b16 %v4275, %v4275
        %4340 = vst [vmem:[%s880] sm:$0xf] %v4276
        %4341 = vst [vmem:[%s880 + $0x4] sm:$0xf] %v4277
        %4342 = vst [vmem:[%s880 + $0x8] sm:$0xf] %v4278
        %4343 = vst [vmem:[%s880 + $0xc] sm:$0xf] %v4279
        %4344 = vst [vmem:[%s880 + $0x10] sm:$0xf] %v4280
        %4345 = vst [vmem:[%s880 + $0x14] sm:$0xf] %v4281
        %4346 = vst [vmem:[%s880 + $0x18] sm:$0xf] %v4282
        %4347 = vst [vmem:[%s880 + $0x1c] sm:$0xf] %v4283
        %4348 = vst [vmem:[%s880 + $0x20] sm:$0xf] %v4284
        %4349 = vst [vmem:[%s880 + $0x24] sm:$0xf] %v4285
        %4350 = vst [vmem:[%s880 + $0x28] sm:$0xf] %v4286
        %4351 = vst [vmem:[%s880 + $0x2c] sm:$0xf] %v4287
        %4352 = vst [vmem:[%s880 + $0x30] sm:$0xf] %v4288
        %4353 = vst [vmem:[%s880 + $0x34] sm:$0xf] %v4289
        %4354 = vst [vmem:[%s880 + $0x38] sm:$0xf] %v4290
        %4355 = vst [vmem:[%s880 + $0x3c] sm:$0xf] %v4291
        %4356 = vst [vmem:[%s880 + $0x40] sm:$0xf] %v4292
        %4357 = vst [vmem:[%s880 + $0x44] sm:$0xf] %v4293
        %4358 = vst [vmem:[%s880 + $0x48] sm:$0xf] %v4294
        %4359 = vst [vmem:[%s880 + $0x4c] sm:$0xf] %v4295
        %4360 = vst [vmem:[%s880 + $0x50] sm:$0xf] %v4296
        %4361 = vst [vmem:[%s880 + $0x54] sm:$0xf] %v4297
        %4362 = vst [vmem:[%s880 + $0x58] sm:$0xf] %v4298
        %4363 = vst [vmem:[%s880 + $0x5c] sm:$0xf] %v4299
        %4364 = vst [vmem:[%s880 + $0x60] sm:$0xf] %v4300
        %4365 = vst [vmem:[%s880 + $0x64] sm:$0xf] %v4301
        %4366 = vst [vmem:[%s880 + $0x68] sm:$0xf] %v4302
        %4367 = vst [vmem:[%s880 + $0x6c] sm:$0xf] %v4303
        %4368 = vst [vmem:[%s880 + $0x70] sm:$0xf] %v4304
        %4369 = vst [vmem:[%s880 + $0x74] sm:$0xf] %v4305
        %4370 = vst [vmem:[%s880 + $0x78] sm:$0xf] %v4306
        %4371 = vst [vmem:[%s880 + $0x7c] sm:$0xf] %v4307
        %v4372 = vunpack.c.l.bf16 %v2531
        %v4373 = vunpack.c.h.bf16 %v2531
        %v4374 = vunpack.c.l.bf16 %v2532
        %v4375 = vunpack.c.h.bf16 %v2532
        %v4376 = vunpack.c.l.bf16 %v2533
        %v4377 = vunpack.c.h.bf16 %v2533
        %v4378 = vunpack.c.l.bf16 %v2534
        %v4379 = vunpack.c.h.bf16 %v2534
        %v4380 = vunpack.c.l.bf16 %v2535
        %v4381 = vunpack.c.h.bf16 %v2535
        %v4382 = vunpack.c.l.bf16 %v2536
        %v4383 = vunpack.c.h.bf16 %v2536
        %v4384 = vunpack.c.l.bf16 %v2537
        %v4385 = vunpack.c.h.bf16 %v2537
        %v4386 = vunpack.c.l.bf16 %v2538
        %v4387 = vunpack.c.h.bf16 %v2538
        %v4388 = vunpack.c.l.bf16 %v2539
        %v4389 = vunpack.c.h.bf16 %v2539
        %v4390 = vunpack.c.l.bf16 %v2540
        %v4391 = vunpack.c.h.bf16 %v2540
        %v4392 = vunpack.c.l.bf16 %v2541
        %v4393 = vunpack.c.h.bf16 %v2541
        %v4394 = vunpack.c.l.bf16 %v2542
        %v4395 = vunpack.c.h.bf16 %v2542
        %v4396 = vunpack.c.l.bf16 %v2543
        %v4397 = vunpack.c.h.bf16 %v2543
        %v4398 = vunpack.c.l.bf16 %v2544
        %v4399 = vunpack.c.h.bf16 %v2544
        %v4400 = vunpack.c.l.bf16 %v2545
        %v4401 = vunpack.c.h.bf16 %v2545
        %v4402 = vunpack.c.l.bf16 %v2546
        %v4403 = vunpack.c.h.bf16 %v2546
        %v4404 = vunpack.c.l.bf16 %v2547
        %v4405 = vunpack.c.h.bf16 %v2547
        %v4406 = vunpack.c.l.bf16 %v2548
        %v4407 = vunpack.c.h.bf16 %v2548
        %v4408 = vunpack.c.l.bf16 %v2549
        %v4409 = vunpack.c.h.bf16 %v2549
        %v4410 = vunpack.c.l.bf16 %v2550
        %v4411 = vunpack.c.h.bf16 %v2550
        %v4412 = vunpack.c.l.bf16 %v2551
        %v4413 = vunpack.c.h.bf16 %v2551
        %v4414 = vunpack.c.l.bf16 %v2552
        %v4415 = vunpack.c.h.bf16 %v2552
        %v4416 = vunpack.c.l.bf16 %v2553
        %v4417 = vunpack.c.h.bf16 %v2553
        %v4418 = vunpack.c.l.bf16 %v2554
        %v4419 = vunpack.c.h.bf16 %v2554
        %v4420 = vunpack.c.l.bf16 %v2555
        %v4421 = vunpack.c.h.bf16 %v2555
        %v4422 = vunpack.c.l.bf16 %v2556
        %v4423 = vunpack.c.h.bf16 %v2556
        %v4424 = vunpack.c.l.bf16 %v2557
        %v4425 = vunpack.c.h.bf16 %v2557
        %v4426 = vunpack.c.l.bf16 %v2558
        %v4427 = vunpack.c.h.bf16 %v2558
        %v4428 = vunpack.c.l.bf16 %v2559
        %v4429 = vunpack.c.h.bf16 %v2559
        %v4430 = vunpack.c.l.bf16 %v2560
        %v4431 = vunpack.c.h.bf16 %v2560
        %v4432 = vunpack.c.l.bf16 %v2561
        %v4433 = vunpack.c.h.bf16 %v2561
        %v4434 = vunpack.c.l.bf16 %v2562
        %v4435 = vunpack.c.h.bf16 %v2562
        %v4436 = vunpack.c.l.bf16 %v2563
        %v4437 = vunpack.c.h.bf16 %v2563
        %v4438 = vunpack.c.l.bf16 %v2564
        %v4439 = vunpack.c.h.bf16 %v2564
        %v4440 = vunpack.c.l.bf16 %v2565
        %v4441 = vunpack.c.h.bf16 %v2565
        %v4442 = vunpack.c.l.bf16 %v2566
        %v4443 = vunpack.c.h.bf16 %v2566
        %v4444 = vunpack.c.l.bf16 %v2567
        %v4445 = vunpack.c.h.bf16 %v2567
        %v4446 = vunpack.c.l.bf16 %v2568
        %v4447 = vunpack.c.h.bf16 %v2568
        %v4448 = vunpack.c.l.bf16 %v2569
        %v4449 = vunpack.c.h.bf16 %v2569
        %v4450 = vunpack.c.l.bf16 %v2570
        %v4451 = vunpack.c.h.bf16 %v2570
        %v4452 = vunpack.c.l.bf16 %v2571
        %v4453 = vunpack.c.h.bf16 %v2571
        %v4454 = vunpack.c.l.bf16 %v2572
        %v4455 = vunpack.c.h.bf16 %v2572
        %v4456 = vunpack.c.l.bf16 %v2573
        %v4457 = vunpack.c.h.bf16 %v2573
        %v4458 = vunpack.c.l.bf16 %v2574
        %v4459 = vunpack.c.h.bf16 %v2574
        %v4460 = vunpack.c.l.bf16 %v2575
        %v4461 = vunpack.c.h.bf16 %v2575
        %v4462 = vunpack.c.l.bf16 %v2576
        %v4463 = vunpack.c.h.bf16 %v2576
        %v4464 = vunpack.c.l.bf16 %v2577
        %v4465 = vunpack.c.h.bf16 %v2577
        %v4466 = vunpack.c.l.bf16 %v2578
        %v4467 = vunpack.c.h.bf16 %v2578
        %v4468 = vmul.f32 %v4372, %v3558
        %v4469 = vmul.f32 %v4373, %v3561
        %v4470 = vmul.f32 %v4374, %v3566
        %v4471 = vmul.f32 %v4375, %v3569
        %v4472 = vmul.f32 %v4376, %v3574
        %v4473 = vmul.f32 %v4377, %v3577
        %v4474 = vmul.f32 %v4378, %v3582
        %v4475 = vmul.f32 %v4379, %v3585
        %v4476 = vmul.f32 %v4380, %v3590
        %v4477 = vmul.f32 %v4381, %v3593
        %v4478 = vmul.f32 %v4382, %v3598
        %v4479 = vmul.f32 %v4383, %v3601
        %v4480 = vmul.f32 %v4384, %v3606
        %v4481 = vmul.f32 %v4385, %v3609
        %v4482 = vmul.f32 %v4386, %v3614
        %v4483 = vmul.f32 %v4387, %v3617
        %v4484 = vmul.f32 %v4388, %v3622
        %v4485 = vmul.f32 %v4389, %v3625
        %v4486 = vmul.f32 %v4390, %v3630
        %v4487 = vmul.f32 %v4391, %v3633
        %v4488 = vmul.f32 %v4392, %v3638
        %v4489 = vmul.f32 %v4393, %v3641
        %v4490 = vmul.f32 %v4394, %v3646
        %v4491 = vmul.f32 %v4395, %v3649
        %v4492 = vmul.f32 %v4396, %v3654
        %v4493 = vmul.f32 %v4397, %v3657
        %v4494 = vmul.f32 %v4398, %v3662
        %v4495 = vmul.f32 %v4399, %v3665
        %v4496 = vmul.f32 %v4400, %v3670
        %v4497 = vmul.f32 %v4401, %v3673
        %v4498 = vmul.f32 %v4402, %v3678
        %v4499 = vmul.f32 %v4403, %v3681
        %v4500 = vmul.f32 %v4404, %v3558
        %v4501 = vmul.f32 %v4405, %v3561
        %v4502 = vmul.f32 %v4406, %v3566
        %v4503 = vmul.f32 %v4407, %v3569
        %v4504 = vmul.f32 %v4408, %v3574
        %v4505 = vmul.f32 %v4409, %v3577
        %v4506 = vmul.f32 %v4410, %v3582
        %v4507 = vmul.f32 %v4411, %v3585
        %v4508 = vmul.f32 %v4412, %v3590
        %v4509 = vmul.f32 %v4413, %v3593
        %v4510 = vmul.f32 %v4414, %v3598
        %v4511 = vmul.f32 %v4415, %v3601
        %v4512 = vmul.f32 %v4416, %v3606
        %v4513 = vmul.f32 %v4417, %v3609
        %v4514 = vmul.f32 %v4418, %v3614
        %v4515 = vmul.f32 %v4419, %v3617
        %v4516 = vmul.f32 %v4420, %v3622
        %v4517 = vmul.f32 %v4421, %v3625
        %v4518 = vmul.f32 %v4422, %v3630
        %v4519 = vmul.f32 %v4423, %v3633
        %v4520 = vmul.f32 %v4424, %v3638
        %v4521 = vmul.f32 %v4425, %v3641
        %v4522 = vmul.f32 %v4426, %v3646
        %v4523 = vmul.f32 %v4427, %v3649
        %v4524 = vmul.f32 %v4428, %v3654
        %v4525 = vmul.f32 %v4429, %v3657
        %v4526 = vmul.f32 %v4430, %v3662
        %v4527 = vmul.f32 %v4431, %v3665
        %v4528 = vmul.f32 %v4432, %v3670
        %v4529 = vmul.f32 %v4433, %v3673
        %v4530 = vmul.f32 %v4434, %v3678
        %v4531 = vmul.f32 %v4435, %v3681
        %v4532 = vmul.f32 %v4436, %v3558
        %v4533 = vmul.f32 %v4437, %v3561
        %v4534 = vmul.f32 %v4438, %v3566
        %v4535 = vmul.f32 %v4439, %v3569
        %v4536 = vmul.f32 %v4440, %v3574
        %v4537 = vmul.f32 %v4441, %v3577
        %v4538 = vmul.f32 %v4442, %v3582
        %v4539 = vmul.f32 %v4443, %v3585
        %v4540 = vmul.f32 %v4444, %v3590
        %v4541 = vmul.f32 %v4445, %v3593
        %v4542 = vmul.f32 %v4446, %v3598
        %v4543 = vmul.f32 %v4447, %v3601
        %v4544 = vmul.f32 %v4448, %v3606
        %v4545 = vmul.f32 %v4449, %v3609
        %v4546 = vmul.f32 %v4450, %v3614
        %v4547 = vmul.f32 %v4451, %v3617
        %v4548 = vmul.f32 %v4452, %v3622
        %v4549 = vmul.f32 %v4453, %v3625
        %v4550 = vmul.f32 %v4454, %v3630
        %v4551 = vmul.f32 %v4455, %v3633
        %v4552 = vmul.f32 %v4456, %v3638
        %v4553 = vmul.f32 %v4457, %v3641
        %v4554 = vmul.f32 %v4458, %v3646
        %v4555 = vmul.f32 %v4459, %v3649
        %v4556 = vmul.f32 %v4460, %v3654
        %v4557 = vmul.f32 %v4461, %v3657
        %v4558 = vmul.f32 %v4462, %v3662
        %v4559 = vmul.f32 %v4463, %v3665
        %v4560 = vmul.f32 %v4464, %v3670
        %v4561 = vmul.f32 %v4465, %v3673
        %v4562 = vmul.f32 %v4466, %v3678
        %v4563 = vmul.f32 %v4467, %v3681
        %v4564 = vpack.c.bf16 %v4469, %v4468
        %v4565 = vpack.c.bf16 %v4471, %v4470
        %v4566 = vpack.c.bf16 %v4473, %v4472
        %v4567 = vpack.c.bf16 %v4475, %v4474
        %v4568 = vpack.c.bf16 %v4477, %v4476
        %v4569 = vpack.c.bf16 %v4479, %v4478
        %v4570 = vpack.c.bf16 %v4481, %v4480
        %v4571 = vpack.c.bf16 %v4483, %v4482
        %v4572 = vpack.c.bf16 %v4485, %v4484
        %v4573 = vpack.c.bf16 %v4487, %v4486
        %v4574 = vpack.c.bf16 %v4489, %v4488
        %v4575 = vpack.c.bf16 %v4491, %v4490
        %v4576 = vpack.c.bf16 %v4493, %v4492
        %v4577 = vpack.c.bf16 %v4495, %v4494
        %v4578 = vpack.c.bf16 %v4497, %v4496
        %v4579 = vpack.c.bf16 %v4499, %v4498
        %v4580 = vpack.c.bf16 %v4501, %v4500
        %v4581 = vpack.c.bf16 %v4503, %v4502
        %v4582 = vpack.c.bf16 %v4505, %v4504
        %v4583 = vpack.c.bf16 %v4507, %v4506
        %v4584 = vpack.c.bf16 %v4509, %v4508
        %v4585 = vpack.c.bf16 %v4511, %v4510
        %v4586 = vpack.c.bf16 %v4513, %v4512
        %v4587 = vpack.c.bf16 %v4515, %v4514
        %v4588 = vpack.c.bf16 %v4517, %v4516
        %v4589 = vpack.c.bf16 %v4519, %v4518
        %v4590 = vpack.c.bf16 %v4521, %v4520
        %v4591 = vpack.c.bf16 %v4523, %v4522
        %v4592 = vpack.c.bf16 %v4525, %v4524
        %v4593 = vpack.c.bf16 %v4527, %v4526
        %v4594 = vpack.c.bf16 %v4529, %v4528
        %v4595 = vpack.c.bf16 %v4531, %v4530
        %v4596 = vpack.c.bf16 %v4533, %v4532
        %v4597 = vpack.c.bf16 %v4535, %v4534
        %v4598 = vpack.c.bf16 %v4537, %v4536
        %v4599 = vpack.c.bf16 %v4539, %v4538
        %v4600 = vpack.c.bf16 %v4541, %v4540
        %v4601 = vpack.c.bf16 %v4543, %v4542
        %v4602 = vpack.c.bf16 %v4545, %v4544
        %v4603 = vpack.c.bf16 %v4547, %v4546
        %v4604 = vpack.c.bf16 %v4549, %v4548
        %v4605 = vpack.c.bf16 %v4551, %v4550
        %v4606 = vpack.c.bf16 %v4553, %v4552
        %v4607 = vpack.c.bf16 %v4555, %v4554
        %v4608 = vpack.c.bf16 %v4557, %v4556
        %v4609 = vpack.c.bf16 %v4559, %v4558
        %v4610 = vpack.c.bf16 %v4561, %v4560
        %v4611 = vpack.c.bf16 %v4563, %v4562
        %v4660 = vunpack.c.l.b16 %v4564
        %v4661 = vunpack.c.h.b16 %v4564
        %v4662 = vunpack.c.l.b16 %v4565
        %v4663 = vunpack.c.h.b16 %v4565
        %v4664 = vunpack.c.l.b16 %v4566
        %v4665 = vunpack.c.h.b16 %v4566
        %v4666 = vunpack.c.l.b16 %v4567
        %v4667 = vunpack.c.h.b16 %v4567
        %v4668 = vunpack.c.l.b16 %v4568
        %v4669 = vunpack.c.h.b16 %v4568
        %v4670 = vunpack.c.l.b16 %v4569
        %v4671 = vunpack.c.h.b16 %v4569
        %v4672 = vunpack.c.l.b16 %v4570
        %v4673 = vunpack.c.h.b16 %v4570
        %v4674 = vunpack.c.l.b16 %v4571
        %v4675 = vunpack.c.h.b16 %v4571
        %v4676 = vunpack.c.l.b16 %v4572
        %v4677 = vunpack.c.h.b16 %v4572
        %v4678 = vunpack.c.l.b16 %v4573
        %v4679 = vunpack.c.h.b16 %v4573
        %v4680 = vunpack.c.l.b16 %v4574
        %v4681 = vunpack.c.h.b16 %v4574
        %v4682 = vunpack.c.l.b16 %v4575
        %v4683 = vunpack.c.h.b16 %v4575
        %v4684 = vunpack.c.l.b16 %v4576
        %v4685 = vunpack.c.h.b16 %v4576
        %v4686 = vunpack.c.l.b16 %v4577
        %v4687 = vunpack.c.h.b16 %v4577
        %v4688 = vunpack.c.l.b16 %v4578
        %v4689 = vunpack.c.h.b16 %v4578
        %v4690 = vunpack.c.l.b16 %v4579
        %v4691 = vunpack.c.h.b16 %v4579
        %v4692 = vunpack.c.l.b16 %v4580
        %v4693 = vunpack.c.h.b16 %v4580
        %v4694 = vunpack.c.l.b16 %v4581
        %v4695 = vunpack.c.h.b16 %v4581
        %v4696 = vunpack.c.l.b16 %v4582
        %v4697 = vunpack.c.h.b16 %v4582
        %v4698 = vunpack.c.l.b16 %v4583
        %v4699 = vunpack.c.h.b16 %v4583
        %v4700 = vunpack.c.l.b16 %v4584
        %v4701 = vunpack.c.h.b16 %v4584
        %v4702 = vunpack.c.l.b16 %v4585
        %v4703 = vunpack.c.h.b16 %v4585
        %v4704 = vunpack.c.l.b16 %v4586
        %v4705 = vunpack.c.h.b16 %v4586
        %v4706 = vunpack.c.l.b16 %v4587
        %v4707 = vunpack.c.h.b16 %v4587
        %v4708 = vunpack.c.l.b16 %v4588
        %v4709 = vunpack.c.h.b16 %v4588
        %v4710 = vunpack.c.l.b16 %v4589
        %v4711 = vunpack.c.h.b16 %v4589
        %v4712 = vunpack.c.l.b16 %v4590
        %v4713 = vunpack.c.h.b16 %v4590
        %v4714 = vunpack.c.l.b16 %v4591
        %v4715 = vunpack.c.h.b16 %v4591
        %v4716 = vunpack.c.l.b16 %v4592
        %v4717 = vunpack.c.h.b16 %v4592
        %v4718 = vunpack.c.l.b16 %v4593
        %v4719 = vunpack.c.h.b16 %v4593
        %v4720 = vunpack.c.l.b16 %v4594
        %v4721 = vunpack.c.h.b16 %v4594
        %v4722 = vunpack.c.l.b16 %v4595
        %v4723 = vunpack.c.h.b16 %v4595
        %v4724 = vunpack.c.l.b16 %v4596
        %v4725 = vunpack.c.h.b16 %v4596
        %v4726 = vunpack.c.l.b16 %v4597
        %v4727 = vunpack.c.h.b16 %v4597
        %v4728 = vunpack.c.l.b16 %v4598
        %v4729 = vunpack.c.h.b16 %v4598
        %v4730 = vunpack.c.l.b16 %v4599
        %v4731 = vunpack.c.h.b16 %v4599
        %v4732 = vunpack.c.l.b16 %v4600
        %v4733 = vunpack.c.h.b16 %v4600
        %v4734 = vunpack.c.l.b16 %v4601
        %v4735 = vunpack.c.h.b16 %v4601
        %v4736 = vunpack.c.l.b16 %v4602
        %v4737 = vunpack.c.h.b16 %v4602
        %v4738 = vunpack.c.l.b16 %v4603
        %v4739 = vunpack.c.h.b16 %v4603
        %v4740 = vunpack.c.l.b16 %v4604
        %v4741 = vunpack.c.h.b16 %v4604
        %v4742 = vunpack.c.l.b16 %v4605
        %v4743 = vunpack.c.h.b16 %v4605
        %v4744 = vunpack.c.l.b16 %v4606
        %v4745 = vunpack.c.h.b16 %v4606
        %v4746 = vunpack.c.l.b16 %v4607
        %v4747 = vunpack.c.h.b16 %v4607
        %v4748 = vunpack.c.l.b16 %v4608
        %v4749 = vunpack.c.h.b16 %v4608
        %v4750 = vunpack.c.l.b16 %v4609
        %v4751 = vunpack.c.h.b16 %v4609
        %v4752 = vunpack.c.l.b16 %v4610
        %v4753 = vunpack.c.h.b16 %v4610
        %v4754 = vunpack.c.l.b16 %v4611
        %v4755 = vunpack.c.h.b16 %v4611
        %v4756 = vpack.c.b16 %v4660, %v4660
        %v4757 = vpack.c.b16 %v4661, %v4661
        %v4758 = vpack.c.b16 %v4662, %v4662
        %v4759 = vpack.c.b16 %v4663, %v4663
        %v4760 = vpack.c.b16 %v4664, %v4664
        %v4761 = vpack.c.b16 %v4665, %v4665
        %v4762 = vpack.c.b16 %v4666, %v4666
        %v4763 = vpack.c.b16 %v4667, %v4667
        %v4764 = vpack.c.b16 %v4668, %v4668
        %v4765 = vpack.c.b16 %v4669, %v4669
        %v4766 = vpack.c.b16 %v4670, %v4670
        %v4767 = vpack.c.b16 %v4671, %v4671
        %v4768 = vpack.c.b16 %v4672, %v4672
        %v4769 = vpack.c.b16 %v4673, %v4673
        %v4770 = vpack.c.b16 %v4674, %v4674
        %v4771 = vpack.c.b16 %v4675, %v4675
        %v4772 = vpack.c.b16 %v4676, %v4676
        %v4773 = vpack.c.b16 %v4677, %v4677
        %v4774 = vpack.c.b16 %v4678, %v4678
        %v4775 = vpack.c.b16 %v4679, %v4679
        %v4776 = vpack.c.b16 %v4680, %v4680
        %v4777 = vpack.c.b16 %v4681, %v4681
        %v4778 = vpack.c.b16 %v4682, %v4682
        %v4779 = vpack.c.b16 %v4683, %v4683
        %v4780 = vpack.c.b16 %v4684, %v4684
        %v4781 = vpack.c.b16 %v4685, %v4685
        %v4782 = vpack.c.b16 %v4686, %v4686
        %v4783 = vpack.c.b16 %v4687, %v4687
        %v4784 = vpack.c.b16 %v4688, %v4688
        %v4785 = vpack.c.b16 %v4689, %v4689
        %v4786 = vpack.c.b16 %v4690, %v4690
        %v4787 = vpack.c.b16 %v4691, %v4691
        %v4788 = vpack.c.b16 %v4692, %v4692
        %v4789 = vpack.c.b16 %v4693, %v4693
        %v4790 = vpack.c.b16 %v4694, %v4694
        %v4791 = vpack.c.b16 %v4695, %v4695
        %v4792 = vpack.c.b16 %v4696, %v4696
        %v4793 = vpack.c.b16 %v4697, %v4697
        %v4794 = vpack.c.b16 %v4698, %v4698
        %v4795 = vpack.c.b16 %v4699, %v4699
        %v4796 = vpack.c.b16 %v4700, %v4700
        %v4797 = vpack.c.b16 %v4701, %v4701
        %v4798 = vpack.c.b16 %v4702, %v4702
        %v4799 = vpack.c.b16 %v4703, %v4703
        %v4800 = vpack.c.b16 %v4704, %v4704
        %v4801 = vpack.c.b16 %v4705, %v4705
        %v4802 = vpack.c.b16 %v4706, %v4706
        %v4803 = vpack.c.b16 %v4707, %v4707
        %v4804 = vpack.c.b16 %v4708, %v4708
        %v4805 = vpack.c.b16 %v4709, %v4709
        %v4806 = vpack.c.b16 %v4710, %v4710
        %v4807 = vpack.c.b16 %v4711, %v4711
        %v4808 = vpack.c.b16 %v4712, %v4712
        %v4809 = vpack.c.b16 %v4713, %v4713
        %v4810 = vpack.c.b16 %v4714, %v4714
        %v4811 = vpack.c.b16 %v4715, %v4715
        %v4812 = vpack.c.b16 %v4716, %v4716
        %v4813 = vpack.c.b16 %v4717, %v4717
        %v4814 = vpack.c.b16 %v4718, %v4718
        %v4815 = vpack.c.b16 %v4719, %v4719
        %v4816 = vpack.c.b16 %v4720, %v4720
        %v4817 = vpack.c.b16 %v4721, %v4721
        %v4818 = vpack.c.b16 %v4722, %v4722
        %v4819 = vpack.c.b16 %v4723, %v4723
        %v4820 = vpack.c.b16 %v4724, %v4724
        %v4821 = vpack.c.b16 %v4725, %v4725
        %v4822 = vpack.c.b16 %v4726, %v4726
        %v4823 = vpack.c.b16 %v4727, %v4727
        %v4824 = vpack.c.b16 %v4728, %v4728
        %v4825 = vpack.c.b16 %v4729, %v4729
        %v4826 = vpack.c.b16 %v4730, %v4730
        %v4827 = vpack.c.b16 %v4731, %v4731
        %v4828 = vpack.c.b16 %v4732, %v4732
        %v4829 = vpack.c.b16 %v4733, %v4733
        %v4830 = vpack.c.b16 %v4734, %v4734
        %v4831 = vpack.c.b16 %v4735, %v4735
        %v4832 = vpack.c.b16 %v4736, %v4736
        %v4833 = vpack.c.b16 %v4737, %v4737
        %v4834 = vpack.c.b16 %v4738, %v4738
        %v4835 = vpack.c.b16 %v4739, %v4739
        %v4836 = vpack.c.b16 %v4740, %v4740
        %v4837 = vpack.c.b16 %v4741, %v4741
        %v4838 = vpack.c.b16 %v4742, %v4742
        %v4839 = vpack.c.b16 %v4743, %v4743
        %v4840 = vpack.c.b16 %v4744, %v4744
        %v4841 = vpack.c.b16 %v4745, %v4745
        %v4842 = vpack.c.b16 %v4746, %v4746
        %v4843 = vpack.c.b16 %v4747, %v4747
        %v4844 = vpack.c.b16 %v4748, %v4748
        %v4845 = vpack.c.b16 %v4749, %v4749
        %v4846 = vpack.c.b16 %v4750, %v4750
        %v4847 = vpack.c.b16 %v4751, %v4751
        %v4848 = vpack.c.b16 %v4752, %v4752
        %v4849 = vpack.c.b16 %v4753, %v4753
        %v4850 = vpack.c.b16 %v4754, %v4754
        %v4851 = vpack.c.b16 %v4755, %v4755
        %4948 = vst [vmem:[%s887] sm:$0xf] %v4756
        %4949 = vst [vmem:[%s887 + $0x4] sm:$0xf] %v4757
        %4950 = vst [vmem:[%s887 + $0x8] sm:$0xf] %v4758
        %4951 = vst [vmem:[%s887 + $0xc] sm:$0xf] %v4759
        %4952 = vst [vmem:[%s887 + $0x10] sm:$0xf] %v4760
        %4953 = vst [vmem:[%s887 + $0x14] sm:$0xf] %v4761
        %4954 = vst [vmem:[%s887 + $0x18] sm:$0xf] %v4762
        %4955 = vst [vmem:[%s887 + $0x1c] sm:$0xf] %v4763
        %4956 = vst [vmem:[%s887 + $0x20] sm:$0xf] %v4764
        %4957 = vst [vmem:[%s887 + $0x24] sm:$0xf] %v4765
        %4958 = vst [vmem:[%s887 + $0x28] sm:$0xf] %v4766
        %4959 = vst [vmem:[%s887 + $0x2c] sm:$0xf] %v4767
        %4960 = vst [vmem:[%s887 + $0x30] sm:$0xf] %v4768
        %4961 = vst [vmem:[%s887 + $0x34] sm:$0xf] %v4769
        %4962 = vst [vmem:[%s887 + $0x38] sm:$0xf] %v4770
        %4963 = vst [vmem:[%s887 + $0x3c] sm:$0xf] %v4771
        %4964 = vst [vmem:[%s887 + $0x40] sm:$0xf] %v4772
        %4965 = vst [vmem:[%s887 + $0x44] sm:$0xf] %v4773
        %4966 = vst [vmem:[%s887 + $0x48] sm:$0xf] %v4774
        %4967 = vst [vmem:[%s887 + $0x4c] sm:$0xf] %v4775
        %4968 = vst [vmem:[%s887 + $0x50] sm:$0xf] %v4776
        %4969 = vst [vmem:[%s887 + $0x54] sm:$0xf] %v4777
        %4970 = vst [vmem:[%s887 + $0x58] sm:$0xf] %v4778
        %4971 = vst [vmem:[%s887 + $0x5c] sm:$0xf] %v4779
        %4972 = vst [vmem:[%s887 + $0x60] sm:$0xf] %v4780
        %4973 = vst [vmem:[%s887 + $0x64] sm:$0xf] %v4781
        %4974 = vst [vmem:[%s887 + $0x68] sm:$0xf] %v4782
        %4975 = vst [vmem:[%s887 + $0x6c] sm:$0xf] %v4783
        %4976 = vst [vmem:[%s887 + $0x70] sm:$0xf] %v4784
        %4977 = vst [vmem:[%s887 + $0x74] sm:$0xf] %v4785
        %4978 = vst [vmem:[%s887 + $0x78] sm:$0xf] %v4786
        %4979 = vst [vmem:[%s887 + $0x7c] sm:$0xf] %v4787
        %4980 = vst [vmem:[%s887 + $0x80] sm:$0xf] %v4788
        %4981 = vst [vmem:[%s887 + $0x84] sm:$0xf] %v4789
        %4982 = vst [vmem:[%s887 + $0x88] sm:$0xf] %v4790
        %4983 = vst [vmem:[%s887 + $0x8c] sm:$0xf] %v4791
        %4984 = vst [vmem:[%s887 + $0x90] sm:$0xf] %v4792
        %4985 = vst [vmem:[%s887 + $0x94] sm:$0xf] %v4793
        %4986 = vst [vmem:[%s887 + $0x98] sm:$0xf] %v4794
        %4987 = vst [vmem:[%s887 + $0x9c] sm:$0xf] %v4795
        %4988 = vst [vmem:[%s887 + $0xa0] sm:$0xf] %v4796
        %4989 = vst [vmem:[%s887 + $0xa4] sm:$0xf] %v4797
        %4990 = vst [vmem:[%s887 + $0xa8] sm:$0xf] %v4798
        %4991 = vst [vmem:[%s887 + $0xac] sm:$0xf] %v4799
        %4992 = vst [vmem:[%s887 + $0xb0] sm:$0xf] %v4800
        %4993 = vst [vmem:[%s887 + $0xb4] sm:$0xf] %v4801
        %4994 = vst [vmem:[%s887 + $0xb8] sm:$0xf] %v4802
        %4995 = vst [vmem:[%s887 + $0xbc] sm:$0xf] %v4803
        %4996 = vst [vmem:[%s887 + $0xc0] sm:$0xf] %v4804
        %4997 = vst [vmem:[%s887 + $0xc4] sm:$0xf] %v4805
        %4998 = vst [vmem:[%s887 + $0xc8] sm:$0xf] %v4806
        %4999 = vst [vmem:[%s887 + $0xcc] sm:$0xf] %v4807
        %5000 = vst [vmem:[%s887 + $0xd0] sm:$0xf] %v4808
        %5001 = vst [vmem:[%s887 + $0xd4] sm:$0xf] %v4809
        %5002 = vst [vmem:[%s887 + $0xd8] sm:$0xf] %v4810
        %5003 = vst [vmem:[%s887 + $0xdc] sm:$0xf] %v4811
        %5004 = vst [vmem:[%s887 + $0xe0] sm:$0xf] %v4812
        %5005 = vst [vmem:[%s887 + $0xe4] sm:$0xf] %v4813
        %5006 = vst [vmem:[%s887 + $0xe8] sm:$0xf] %v4814
        %5007 = vst [vmem:[%s887 + $0xec] sm:$0xf] %v4815
        %5008 = vst [vmem:[%s887 + $0xf0] sm:$0xf] %v4816
        %5009 = vst [vmem:[%s887 + $0xf4] sm:$0xf] %v4817
        %5010 = vst [vmem:[%s887 + $0xf8] sm:$0xf] %v4818
        %5011 = vst [vmem:[%s887 + $0xfc] sm:$0xf] %v4819
        %5012 = vst [vmem:[%s887 + $0x100] sm:$0xf] %v4820
        %5013 = vst [vmem:[%s887 + $0x104] sm:$0xf] %v4821
        %5014 = vst [vmem:[%s887 + $0x108] sm:$0xf] %v4822
        %5015 = vst [vmem:[%s887 + $0x10c] sm:$0xf] %v4823
        %5016 = vst [vmem:[%s887 + $0x110] sm:$0xf] %v4824
        %5017 = vst [vmem:[%s887 + $0x114] sm:$0xf] %v4825
        %5018 = vst [vmem:[%s887 + $0x118] sm:$0xf] %v4826
        %5019 = vst [vmem:[%s887 + $0x11c] sm:$0xf] %v4827
        %5020 = vst [vmem:[%s887 + $0x120] sm:$0xf] %v4828
        %5021 = vst [vmem:[%s887 + $0x124] sm:$0xf] %v4829
        %5022 = vst [vmem:[%s887 + $0x128] sm:$0xf] %v4830
        %5023 = vst [vmem:[%s887 + $0x12c] sm:$0xf] %v4831
        %5024 = vst [vmem:[%s887 + $0x130] sm:$0xf] %v4832
        %5025 = vst [vmem:[%s887 + $0x134] sm:$0xf] %v4833
        %5026 = vst [vmem:[%s887 + $0x138] sm:$0xf] %v4834
        %5027 = vst [vmem:[%s887 + $0x13c] sm:$0xf] %v4835
        %5028 = vst [vmem:[%s887 + $0x140] sm:$0xf] %v4836
        %5029 = vst [vmem:[%s887 + $0x144] sm:$0xf] %v4837
        %5030 = vst [vmem:[%s887 + $0x148] sm:$0xf] %v4838
        %5031 = vst [vmem:[%s887 + $0x14c] sm:$0xf] %v4839
        %5032 = vst [vmem:[%s887 + $0x150] sm:$0xf] %v4840
        %5033 = vst [vmem:[%s887 + $0x154] sm:$0xf] %v4841
        %5034 = vst [vmem:[%s887 + $0x158] sm:$0xf] %v4842
        %5035 = vst [vmem:[%s887 + $0x15c] sm:$0xf] %v4843
        %5036 = vst [vmem:[%s887 + $0x160] sm:$0xf] %v4844
        %5037 = vst [vmem:[%s887 + $0x164] sm:$0xf] %v4845
        %5038 = vst [vmem:[%s887 + $0x168] sm:$0xf] %v4846
        %5039 = vst [vmem:[%s887 + $0x16c] sm:$0xf] %v4847
        %5040 = vst [vmem:[%s887 + $0x170] sm:$0xf] %v4848
        %5041 = vst [vmem:[%s887 + $0x174] sm:$0xf] %v4849
        %5042 = vst [vmem:[%s887 + $0x178] sm:$0xf] %v4850
        %5043 = vst [vmem:[%s887 + $0x17c] sm:$0xf] %v4851
        %s5044 = sand.u32 %s301, 1
        %s5045 = scalar_lea.sflag [#allocation4], %s5044
        %s5046 = sand.u32 %s301, 1
        %s5047 = smul.addr %s5046, 128
        %s5048 = scalar_lea.vmem [#allocation3], %s5047
        %s5049 = sand.u32 %s327, 1
        %s5050 = scalar_lea.sflag [#allocation6], %s5049
        %s5051 = sand.u32 %s327, 1
        %s5052 = smul.addr %s5051, 384
        %s5053 = scalar_lea.vmem [#allocation5], %s5052
        // Predicated region
        $region110: #{update_block.1} parent=104 // pred_check
          %p5054 = pneg %p311
        $region111: #{update_block.1} parent=104 // pred_check_branch
          %5056 = sbr.rel (%p5054) target = $region113
        $region112: #{update_block.1} parent=104 // pred_region
          %s5057 = smul.u32 32, %s31
          %s5059 = ssub.s32 2048, 2048
          %5060 = vsyncadd %s5045, %s5059
          %s5061 = smul.addr %s5057, 64
          %s5062 = scalar_lea.hbm %s12, %s5061
          %s5063 = sshll.u32 %s5048, 4
          %s5064 = int_to_ptr.vmem [resolvable:$true] %s5063
          %5069 = dma.vmem_to_hbm [thread:$0]  %s5064, 2048, %s5062, %s5045, 64, 64, 4
        $region113: #{update_block.1} parent=104 // pred_fallthru
          _
        // Predicated region
        $region114: #{update_block.1} parent=104 // pred_check
          %p5070 = pneg %p337
        $region115: #{update_block.1} parent=104 // pred_check_branch
          %5072 = sbr.rel (%p5070) target = $region117
        $region116: #{update_block.1} parent=104 // pred_region
          #allocation8 [shape = 'u32[6]{0}', space=smem, size = 0x18, scoped, tag = 'DMA stride descriptor']
          %s5073 = smul.u32 32, %s31
          %s5075 = ssub.s32 6144, 6144
          %5076 = vsyncadd %s5050, %s5075
          %s5077 = smul.addr %s5073, 64
          %s5078 = scalar_lea.hbm %s13, %s5077
          %s5080 = sshll.u32 1, 14
          %s5081 = sxor.u32 4294967295, %s5080
          %s5084 = sshll.u32 7, 18
          %s5085 = sxor.u32 4294967295, %s5084
          %s5086 = sand.u32 0, %s5085
          %s5088 = sor.u32 %s5086, 0
          %s5090 = sshll.u32 3, 24
          %s5091 = sxor.u32 4294967295, %s5090
          %s5092 = sand.u32 %s5088, %s5091
          %s5094 = sor.u32 %s5092, 0
          %s5095 = sshll.u32 %s5053, 4
          %s5096 = int_to_ptr.vmem [resolvable:$true] %s5095
          %5102 = sst [smem:[#allocation8]] 2048
          %s5103 = scalar_lea.smem [#allocation8], 1
          %5104 = sst [smem:[%s5103]] 4096
          %s5105 = scalar_lea.smem [#allocation8], 2
          %5106 = sst [smem:[%s5105]] 32
          %s5107 = scalar_lea.smem [#allocation8], 3
          %5108 = sst [smem:[%s5107]] 64
          %s5109 = scalar_lea.smem [#allocation8], 4
          %5110 = sst [smem:[%s5109]] 64
          %s5111 = scalar_lea.smem [#allocation8], 5
          %5112 = sst [smem:[%s5111]] 4
          %5114 = dma.general %s5096, 6144, %s5078, %s5050, [#allocation7], [#allocation8], %s5094, 0
        $region117: #{update_block.1} parent=104 // pred_fallthru
          _
      $region105: #{update_block.1} parent=5 // pred_fallthru
        _
      %p5115 = scmp.le.s32.totalorder 2, %s26
      // Predicated region
      $region118: #{update_block.1} parent=5 // pred_check
        %p5116 = pneg %p5115
      $region119: #{update_block.1} parent=5 // pred_check_branch
        %5118 = sbr.rel (%p5116) target = $region121
      $region120: #{update_block.1} parent=5 // pred_region
        %s5119 = ssub.s32 %s26, 2
        // Predicated region
        $region122: #{update_block.1} parent=120 // pred_check
          %p5120 = pneg %p317
        $region123: #{update_block.1} parent=120 // pred_check_branch
          %5122 = sbr.rel (%p5120) target = $region125
        $region124: #{update_block.1} parent=120 // pred_region
          %s5123 = sand.u32 %s302, 1
          %s5124 = scalar_lea.sflag [#allocation4], %s5123
          %s5125 = sand.u32 %s302, 1
          %s5126 = smul.addr %s5125, 128
          %s5127 = scalar_lea.vmem [#allocation3], %s5126
          %5128 = dma.done %s5124, 2048
        $region125: #{update_block.1} parent=120 // pred_fallthru
          _
        // Predicated region
        $region126: #{update_block.1} parent=120 // pred_check
          %p5129 = pneg %p343
        $region127: #{update_block.1} parent=120 // pred_check_branch
          %5131 = sbr.rel (%p5129) target = $region129
        $region128: #{update_block.1} parent=120 // pred_region
          %s5132 = sand.u32 %s328, 1
          %s5133 = scalar_lea.sflag [#allocation6], %s5132
          %s5134 = sand.u32 %s328, 1
          %s5135 = smul.addr %s5134, 384
          %s5136 = scalar_lea.vmem [#allocation5], %s5135
          %5137 = dma.done %s5133, 6144
        $region129: #{update_block.1} parent=120 // pred_fallthru
          _
      $region121: #{update_block.1} parent=5 // pred_fallthru
        _
    $region6: #{update_block.1} parent=1 // loop_footer
      %s30 = sadd.s32 1, %s26
    $region7: #{update_block.1} parent=1 // loop_footer_branch
      %25 = sbr.rel target = $region3
    $region8: #{update_block.1} parent=1 // loop_exit
      _
    %5138 = vsyncpa [#allocation4], 1
    %s5139 = scalar_lea.sflag [#allocation4], 1
    %5140 = vsyncpa %s5139, 1
    %5141 = vsyncpa [#allocation6], 1
    %s5142 = scalar_lea.sflag [#allocation6], 1
    %5143 = vsyncpa %s5142, 1

</llo_original>
